<compile_context>
chip_gen: v7x
topology: tpu7x:2x2x1
jax: 0.10.0
libtpu: 0.0.40
codegen_flags: <defaults>
</compile_context>

<pallas_src>
import functools

import jax
import jax.numpy as jnp
from jax import lax
from jax.experimental import pallas as pl
from jax.experimental.pallas import tpu as pltpu


def _choose_tb(n, max_tb):
    """Largest batch-block size <= max_tb dividing n that leaves >= 2 grid steps."""
    for tb in range(min(max_tb, n), 0, -1):
        if n % tb == 0 and n // tb >= 2:
            return tb
    return 1


# ----------------------------------------------------------------------------
# Kernel 1: conv1 (5x5 valid, host-side im2col) as one (TB*576,25)@(25,16)
# matmul + bias + fused MaxPool2d(2) + ReLU, batch-blocked.
# Matmul row index = n*576 + oh*24 + ow (n local to the block), lanes = out ch.
# ----------------------------------------------------------------------------
def _conv1_pool_kernel(p1_ref, w1_ref, b1_ref, out_ref, y_scr, h_scr, *, tb):
    # bf16 x bf16 -> f32 accumulate on the MXU.
    y = jnp.dot(p1_ref[...], w1_ref[...], preferred_element_type=jnp.float32)
    y_scr[...] = y + b1_ref[...]
    # Pool stage 1 (ow decimation): two whole-block stride-2 loads + one store.
    half = tb * 288
    ev = y_scr[pl.ds(0, half, stride=2), :]
    od = y_scr[pl.ds(1, half, stride=2), :]
    h_scr[...] = jnp.maximum(ev, od)              # rows = n*288 + oh*12 + pw
    # Pool stage 2 (oh decimation) + ReLU: for each pw the even/odd-oh rows of
    # the WHOLE block are single stride-24 loads; 12 whole-block slab stores.
    rows = tb * 12
    for pw in range(12):
        e = h_scr[pl.ds(pw, rows, stride=24), :]          # oh even, all (n, ph)
        o = h_scr[pl.ds(pw + 12, rows, stride=24), :]     # oh odd,  all (n, ph)
        out_ref[0, pw, :, :] = jnp.maximum(jnp.maximum(e, o), 0.0)


def conv1_pool_pallas(p1, w1p, b1p, tb):
    nblk = p1.shape[0] // (tb * 576)
    kernel = functools.partial(_conv1_pool_kernel, tb=tb)
    return pl.pallas_call(
        kernel,
        out_shape=jax.ShapeDtypeStruct((nblk, 12, tb * 12, 16), jnp.float32),
        grid=(nblk,),
        in_specs=[
            pl.BlockSpec((tb * 576, 25), lambda i: (i, 0)),
            pl.BlockSpec((25, 16), lambda i: (0, 0)),
            pl.BlockSpec((1, 16), lambda i: (0, 0)),
        ],
        out_specs=pl.BlockSpec((1, 12, tb * 12, 16), lambda i: (i, 0, 0, 0)),
        scratch_shapes=[pltpu.VMEM((tb * 576, 16), jnp.float32),
                        pltpu.VMEM((tb * 288, 16), jnp.float32)],
        compiler_params=pltpu.CompilerParams(dimension_semantics=("parallel",)),
    )(p1, w1p, b1p)


# ----------------------------------------------------------------------------
# Kernel 2: conv2 matmul + bias + MaxPool2d(2) + ReLU + fc1 + ReLU + fc2 +
# softmax, gridded over batch blocks of TB samples ("parallel").
# ----------------------------------------------------------------------------
def _conv2_fc_kernel(p2_ref, w2_ref, b2_ref, wf1_ref, bf1_ref, wf2_ref, bf2_ref,
                     probs_ref, feat_ref, y_scr, m_scr, *, tb):
    # TODO(synk): nn.Dropout2d / nn.Dropout are identity (eval mode); training-mode
    # dropout is not implemented.
    # conv2 as one matmul: (tb*64, 250) bf16 @ (250, 32) bf16 -> f32.
    # Row index = n*64 + oh*8 + ow (n local to the block), lanes = out channels.
    y = jnp.dot(p2_ref[...], w2_ref[...], preferred_element_type=jnp.float32)
    y_scr[...] = y + b2_ref[...]
    # Pool stage 1 (ow decimation) over the whole block.
    half = tb * 32
    ev = y_scr[pl.ds(0, half, stride=2), :]
    od = y_scr[pl.ds(1, half, stride=2), :]
    m_scr[...] = jnp.maximum(ev, od)              # rows = n*32 + oh*4 + pw
    # Pool stage 2 (oh) + ReLU, fused with the fc1 contraction: for each of the
    # 16 pooled spatial positions s=(ph,pw), one stride-32 load per oh parity
    # gathers the (tb, 32) channel slab for all samples, then an accumulated
    # MXU dot against the prepacked (32, 64) fc1 slice replaces the old
    # per-sample lane-concatenation flatten.
    acc = jnp.zeros((tb, 64), jnp.float32) + bf1_ref[...]
    for ph in range(4):
        for pw in range(4):
            s = ph * 4 + pw
            e = m_scr[pl.ds(8 * ph + pw, tb, stride=32), :]
            o = m_scr[pl.ds(8 * ph + pw + 4, tb, stride=32), :]
            x_s = jnp.maximum(jnp.maximum(e, o), 0.0)          # (tb, 32)
            feat_ref[0, s, :, :] = x_s                         # feature output
            acc = acc + jnp.dot(x_s, wf1_ref[s],
                                preferred_element_type=jnp.float32)
    h = jnp.maximum(acc, 0.0)                                  # (tb, 64); cols >= 50 are 0
    logits = jnp.dot(h, wf2_ref[...], preferred_element_type=jnp.float32)
    logits = logits + bf2_ref[...]                             # (tb, 10)
    m = jnp.max(logits, axis=1, keepdims=True)
    ex = jnp.exp(logits - m)
    ssum = jnp.sum(ex, axis=1, keepdims=True)
    # approx reciprocal runs on the EUP; rows sum to 1 to ~1e-3 relative.
    probs_ref[0] = ex * pl.reciprocal(ssum, approx=True)


def conv2_fc_pallas(p2, w2p, b2p, wf1p, bf1p, wf2p, bf2p, tb):
    nblk = p2.shape[0] // (tb * 64)
    kernel = functools.partial(_conv2_fc_kernel, tb=tb)
    return pl.pallas_call(
        kernel,
        out_shape=(jax.ShapeDtypeStruct((nblk, tb, 10), jnp.float32),
                   jax.ShapeDtypeStruct((nblk, 16, tb, 32), jnp.float32)),
        grid=(nblk,),
        in_specs=[
            pl.BlockSpec((tb * 64, 250), lambda i: (i, 0)),
            pl.BlockSpec((250, 32), lambda i: (0, 0)),
            pl.BlockSpec((1, 32), lambda i: (0, 0)),
            pl.BlockSpec((16, 32, 64), lambda i: (0, 0, 0)),
            pl.BlockSpec((1, 64), lambda i: (0, 0)),
            pl.BlockSpec((64, 10), lambda i: (0, 0)),
            pl.BlockSpec((1, 10), lambda i: (0, 0)),
        ],
        out_specs=(pl.BlockSpec((1, tb, 10), lambda i: (i, 0, 0)),
                   pl.BlockSpec((1, 16, tb, 32), lambda i: (i, 0, 0, 0))),
        scratch_shapes=[pltpu.VMEM((tb * 64, 32), jnp.float32),
                        pltpu.VMEM((tb * 32, 32), jnp.float32)],
        compiler_params=pltpu.CompilerParams(dimension_semantics=("parallel",)),
    )(p2, w2p, b2p, wf1p, bf1p, wf2p, bf2p)


# ----------------------------------------------------------------------------
# Parameters (PyTorch layouts) and one-time repack to kernel layouts.
# ----------------------------------------------------------------------------
def init_params(key):
    def uni(k, shape, fan_in):
        b = 1.0 / jnp.sqrt(jnp.float32(fan_in))
        return jax.random.uniform(k, shape, jnp.float32, -b, b)

    ks = jax.random.split(key, 8)
    return {
        "conv1_w": uni(ks[0], (10, 1, 5, 5), 25),
        "conv1_b": uni(ks[1], (10,), 25),
        "conv2_w": uni(ks[2], (20, 10, 5, 5), 250),
        "conv2_b": uni(ks[3], (20,), 250),
        "fc1_w": uni(ks[4], (50, 320), 320),   # PyTorch Linear: (out, in)
        "fc1_b": uni(ks[5], (50,), 320),
        "fc2_w": uni(ks[6], (10, 50), 50),
        "fc2_b": uni(ks[7], (10,), 50),
    }


def prepare_params(p):
    """One-time repack of PyTorch-layout params into padded kernel layouts."""
    # conv weights as (K, C_out_pad) matmul operands, bf16 (f32 accumulation).
    w1p = jnp.zeros((25, 16), jnp.float32).at[:, :10].set(
        p["conv1_w"].reshape(10, 25).T).astype(jnp.bfloat16)
    b1p = jnp.zeros((1, 16), jnp.float32).at[0, :10].set(p["conv1_b"])
    w2p = jnp.zeros((250, 32), jnp.float32).at[:, :20].set(
        p["conv2_w"].reshape(20, 250).T).astype(jnp.bfloat16)
    b2p = jnp.zeros((1, 32), jnp.float32).at[0, :20].set(p["conv2_b"])
    # fc1 as 16 per-spatial-position (32, 64) slices: h[n,j] = sum_{s,c} x[n,s,c]*W[s,c,j].
    # PyTorch flatten order is f = c*16 + (ph*4+pw).
    t = p["fc1_w"].reshape(50, 20, 16).transpose(2, 1, 0)        # (s, c, j)
    wf1p = jnp.zeros((16, 32, 64), jnp.float32).at[:, :20, :50].set(t)
    bf1p = jnp.zeros((1, 64), jnp.float32).at[0, :50].set(p["fc1_b"])
    wf2p = jnp.zeros((64, 10), jnp.float32).at[:50, :].set(p["fc2_w"].T)
    bf2p = p["fc2_b"].reshape(1, 10)
    return dict(w1p=w1p, b1p=b1p, w2p=w2p, b2p=b2p,
                wf1p=wf1p, bf1p=bf1p, wf2p=wf2p, bf2p=bf2p)


# ----------------------------------------------------------------------------
# Wrapper: im2col / layout plumbing in XLA (free-ish small fusions) + kernels.
# ----------------------------------------------------------------------------
def _im2col_conv1(x):
    # (n,1,28,28) -> (n*576, 25) bf16; row = n*576 + oh*24 + ow, col = ki*5+kj.
    n = x.shape[0]
    cols = [x[:, 0, i:i + 24, j:j + 24] for i in range(5) for j in range(5)]
    return jnp.stack(cols, axis=-1).reshape(n * 576, 25).astype(jnp.bfloat16)


def _unpack_pooled1(pooled, n, tb):
    # (nblk, 12[pw], tb*12[nl*12+ph], 16) -> (n, 12[h], 12[w], 16) channels-last.
    nblk = n // tb
    a1 = pooled.reshape(nblk, 12, tb, 12, 16).transpose(0, 2, 3, 1, 4)
    return a1.reshape(n, 12, 12, 16)


def _im2col_conv2(a1):
    # (n,12,12,16) -> (n*64, 250) bf16; row = n*64 + oh*8 + ow, col = c*25 + ki*5+kj.
    n = a1.shape[0]
    a1 = a1[..., :10]                               # drop channel padding
    cols = [a1[:, i:i + 8, j:j + 8, :] for i in range(5) for j in range(5)]
    p = jnp.stack(cols, axis=-1)                    # (n, 8, 8, 10, 25)
    return p.reshape(n * 64, 250).astype(jnp.bfloat16)


def cnn_mnist_forward(x, kp):
    n = x.shape[0]
    tb1 = _choose_tb(n, 32)    # cap keeps v5e's 16 MiB scoped-VMEM default safe
    tb2 = _choose_tb(n, 16)
    p1 = _im2col_conv1(x)
    pooled1 = conv1_pool_pallas(p1, kp["w1p"], kp["b1p"], tb1)
    a1 = _unpack_pooled1(pooled1, n, tb1)
    p2 = _im2col_conv2(a1)
    probs, feat = conv2_fc_pallas(p2, kp["w2p"], kp["b2p"], kp["wf1p"],
                                  kp["bf1p"], kp["wf2p"], kp["bf2p"], tb2)
    probs = probs.reshape(n, 10)
    # feat: (nblk2, 16[s=ph*4+pw], tb2, 32) -> (n, 20, 4, 4) == self.feature.
    nblk2 = n // tb2
    feature = feat.reshape(nblk2, 4, 4, tb2, 32).transpose(0, 3, 4, 1, 2)
    feature = feature.reshape(n, 32, 4, 4)[:, :20]
    return probs, feature


# ----------------------------------------------------------------------------
# Pure-JAX reference (correctness sanity check).
# ----------------------------------------------------------------------------
def _ref_forward(x, p):
    hi = lax.Precision.HIGHEST

    def conv(x, w, b):
        n, c, h, wd = x.shape
        oc = w.shape[0]
        oh, ow = h - 4, wd - 4
        pats = jnp.stack([x[:, :, i:i + oh, j:j + ow]
                          for i in range(5) for j in range(5)], axis=2)
        pats = pats.reshape(n, c * 25, oh, ow)
        y = jnp.einsum("nkhw,ok->nohw", pats, w.reshape(oc, c * 25), precision=hi)
        return y + b[None, :, None, None]

    def pool_relu(z):
        n, c, h, wd = z.shape
        z = z.reshape(n, c, h // 2, 2, wd // 2, 2).max(axis=(3, 5))
        return jnp.maximum(z, 0.0)

    h1 = pool_relu(conv(x, p["conv1_w"], p["conv1_b"]))
    feat = pool_relu(conv(h1, p["conv2_w"], p["conv2_b"]))
    z = feat.reshape(x.shape[0], 320)
    z = jnp.maximum(jnp.dot(z, p["fc1_w"].T, precision=hi) + p["fc1_b"], 0.0)
    z = jnp.dot(z, p["fc2_w"].T, precision=hi) + p["fc2_b"]
    return jax.nn.softmax(z, axis=1), feat


if __name__ == "__main__":
    key = jax.random.PRNGKey(0)
    k_x, k_p = jax.random.split(key)
    # MNIST geometry is required by the 20*4*4 = 320 flatten: input must be 1x28x28.
    x = jax.random.normal(k_x, (2, 1, 28, 28), dtype=jnp.float32)
    params = init_params(k_p)
    kparams = prepare_params(params)          # one-time repack, outside the forward

    fwd = jax.jit(cnn_mnist_forward)
    probs, feature = jax.block_until_ready(fwd(x, kparams))

    assert probs.shape == (2, 10), probs.shape
    assert feature.shape == (2, 20, 4, 4), feature.shape
    row_sums = jnp.sum(probs, axis=1)
    assert bool(jnp.all(jnp.abs(row_sums - 1.0) < 1e-2)), row_sums

    ref_probs, ref_feat = _ref_forward(x, params)
    assert bool(jnp.allclose(probs, ref_probs, atol=5e-2, rtol=5e-2)), (
        float(jnp.max(jnp.abs(probs - ref_probs))))
    assert bool(jnp.allclose(feature, ref_feat, atol=5e-2, rtol=5e-2)), (
        float(jnp.max(jnp.abs(feature - ref_feat))))
    print("KERNEL_OK")
</pallas_src>

<mosaic_0001>
module attributes {stable_mosaic.version = 11 : i64} {
  func.func @_conv1_pool_kernel(%arg0: i32, %arg1: memref<576x25xbf16, #tpu.memory_space<vmem>>, %arg2: memref<25x16xbf16, #tpu.memory_space<vmem>>, %arg3: memref<1x16xf32, #tpu.memory_space<vmem>>, %arg4: memref<1x12x12x16xf32, #tpu.memory_space<vmem>>, %arg5: memref<576x16xf32, #tpu.memory_space<vmem>>, %arg6: memref<288x16xf32, #tpu.memory_space<vmem>>) attributes {dimension_semantics = [#tpu.dimension_semantics<parallel>], iteration_bounds = array<i64: 2>, scalar_prefetch = 0 : i64, scratch_operands = 2 : i64, tpu.core_type = #tpu.core_type<tc>, window_params = [{transform_indices = @transform_0, window_bounds = array<i64: 576, 25>}, {pipeline_mode = #tpu.pipeline_mode<synchronous>, transform_indices = @transform_1, window_bounds = array<i64: 25, 16>}, {pipeline_mode = #tpu.pipeline_mode<synchronous>, transform_indices = @transform_2, window_bounds = array<i64: 1, 16>}, {transform_indices = @transform_3, window_bounds = array<i64: 1, 12, 12, 16>}]} {
    %c0 = arith.constant 0 : index
    %c0_0 = arith.constant 0 : index
    %0 = vector.load %arg1[%c0, %c0_0] : memref<576x25xbf16, #tpu.memory_space<vmem>>, vector<576x25xbf16>
    %c0_1 = arith.constant 0 : index
    %c0_2 = arith.constant 0 : index
    %1 = vector.load %arg2[%c0_1, %c0_2] : memref<25x16xbf16, #tpu.memory_space<vmem>>, vector<25x16xbf16>
    %cst = arith.constant dense<0.000000e+00> : vector<576x16xf32>
    %2 = tpu.matmul %0, %1, %cst {dimension_numbers = #tpu.dot_dimension_numbers<[1], [0], [0], [1], [0, 0, 1, 1], [], []>} : vector<576x25xbf16>, vector<25x16xbf16>, vector<576x16xf32> -> vector<576x16xf32>
    %c0_3 = arith.constant 0 : index
    %c0_4 = arith.constant 0 : index
    %3 = vector.load %arg3[%c0_3, %c0_4] : memref<1x16xf32, #tpu.memory_space<vmem>>, vector<1x16xf32>
    %4 = vector.broadcast %3 : vector<1x16xf32> to vector<576x16xf32>
    %5 = arith.addf %2, %4 : vector<576x16xf32>
    %c0_5 = arith.constant 0 : index
    %c0_6 = arith.constant 0 : index
    %6 = vector.load %arg5[%c0_5, %c0_6] : memref<576x16xf32, #tpu.memory_space<vmem>>, vector<576x16xf32>
    tpu.vector_store %arg5[%c0_5, %c0_6], %5 {strides = array<i32>} : memref<576x16xf32, #tpu.memory_space<vmem>>, vector<576x16xf32>,
    %c0_7 = arith.constant 0 : index
    %c0_8 = arith.constant 0 : index
    %7 = tpu.strided_load %arg5[%c0_7, %c0_8] {strides = array<i32: 2, 1>} : memref<576x16xf32, #tpu.memory_space<vmem>>, vector<288x16xf32>
    %c1 = arith.constant 1 : index
    %c0_9 = arith.constant 0 : index
    %8 = tpu.strided_load %arg5[%c1, %c0_9] {strides = array<i32: 2, 1>} : memref<576x16xf32, #tpu.memory_space<vmem>>, vector<288x16xf32>
    %9 = arith.maximumf %7, %8 : vector<288x16xf32>
    %c0_10 = arith.constant 0 : index
    %c0_11 = arith.constant 0 : index
    %10 = vector.load %arg6[%c0_10, %c0_11] : memref<288x16xf32, #tpu.memory_space<vmem>>, vector<288x16xf32>
    tpu.vector_store %arg6[%c0_10, %c0_11], %9 {strides = array<i32>} : memref<288x16xf32, #tpu.memory_space<vmem>>, vector<288x16xf32>,
    %c0_12 = arith.constant 0 : index
    %c0_13 = arith.constant 0 : index
    %11 = tpu.strided_load %arg6[%c0_12, %c0_13] {strides = array<i32: 24, 1>} : memref<288x16xf32, #tpu.memory_space<vmem>>, vector<12x16xf32>
    %c12 = arith.constant 12 : index
    %c0_14 = arith.constant 0 : index
    %12 = tpu.strided_load %arg6[%c12, %c0_14] {strides = array<i32: 24, 1>} : memref<288x16xf32, #tpu.memory_space<vmem>>, vector<12x16xf32>
    %13 = arith.maximumf %11, %12 : vector<12x16xf32>
    %cst_15 = arith.constant 0.000000e+00 : f32
    %14 = vector.broadcast %cst_15 : f32 to vector<12x16xf32>
    %15 = arith.maximumf %13, %14 : vector<12x16xf32>
    %c0_16 = arith.constant 0 : index
    %c0_17 = arith.constant 0 : index
    %c0_18 = arith.constant 0 : index
    %c0_19 = arith.constant 0 : index
    %16 = vector.load %arg4[%c0_16, %c0_17, %c0_18, %c0_19] : memref<1x12x12x16xf32, #tpu.memory_space<vmem>>, vector<1x1x12x16xf32>
    %17 = vector.shape_cast %16 : vector<1x1x12x16xf32> to vector<12x16xf32>
    %18 = vector.shape_cast %15 : vector<12x16xf32> to vector<1x1x12x16xf32>
    tpu.vector_store %arg4[%c0_16, %c0_17, %c0_18, %c0_19], %18 {strides = array<i32>} : memref<1x12x12x16xf32, #tpu.memory_space<vmem>>, vector<1x1x12x16xf32>,
    %c1_20 = arith.constant 1 : index
    %c0_21 = arith.constant 0 : index
    %19 = tpu.strided_load %arg6[%c1_20, %c0_21] {strides = array<i32: 24, 1>} : memref<288x16xf32, #tpu.memory_space<vmem>>, vector<12x16xf32>
    %c13 = arith.constant 13 : index
    %c0_22 = arith.constant 0 : index
    %20 = tpu.strided_load %arg6[%c13, %c0_22] {strides = array<i32: 24, 1>} : memref<288x16xf32, #tpu.memory_space<vmem>>, vector<12x16xf32>
    %21 = arith.maximumf %19, %20 : vector<12x16xf32>
    %cst_23 = arith.constant 0.000000e+00 : f32
    %22 = vector.broadcast %cst_23 : f32 to vector<12x16xf32>
    %23 = arith.maximumf %21, %22 : vector<12x16xf32>
    %c0_24 = arith.constant 0 : index
    %c1_25 = arith.constant 1 : index
    %c0_26 = arith.constant 0 : index
    %c0_27 = arith.constant 0 : index
    %24 = vector.load %arg4[%c0_24, %c1_25, %c0_26, %c0_27] : memref<1x12x12x16xf32, #tpu.memory_space<vmem>>, vector<1x1x12x16xf32>
    %25 = vector.shape_cast %24 : vector<1x1x12x16xf32> to vector<12x16xf32>
    %26 = vector.shape_cast %23 : vector<12x16xf32> to vector<1x1x12x16xf32>
    tpu.vector_store %arg4[%c0_24, %c1_25, %c0_26, %c0_27], %26 {strides = array<i32>} : memref<1x12x12x16xf32, #tpu.memory_space<vmem>>, vector<1x1x12x16xf32>,
    %c2 = arith.constant 2 : index
    %c0_28 = arith.constant 0 : index
    %27 = tpu.strided_load %arg6[%c2, %c0_28] {strides = array<i32: 24, 1>} : memref<288x16xf32, #tpu.memory_space<vmem>>, vector<12x16xf32>
    %c14 = arith.constant 14 : index
    %c0_29 = arith.constant 0 : index
    %28 = tpu.strided_load %arg6[%c14, %c0_29] {strides = array<i32: 24, 1>} : memref<288x16xf32, #tpu.memory_space<vmem>>, vector<12x16xf32>
    %29 = arith.maximumf %27, %28 : vector<12x16xf32>
    %cst_30 = arith.constant 0.000000e+00 : f32
    %30 = vector.broadcast %cst_30 : f32 to vector<12x16xf32>
    %31 = arith.maximumf %29, %30 : vector<12x16xf32>
    %c0_31 = arith.constant 0 : index
    %c2_32 = arith.constant 2 : index
    %c0_33 = arith.constant 0 : index
    %c0_34 = arith.constant 0 : index
    %32 = vector.load %arg4[%c0_31, %c2_32, %c0_33, %c0_34] : memref<1x12x12x16xf32, #tpu.memory_space<vmem>>, vector<1x1x12x16xf32>
    %33 = vector.shape_cast %32 : vector<1x1x12x16xf32> to vector<12x16xf32>
    %34 = vector.shape_cast %31 : vector<12x16xf32> to vector<1x1x12x16xf32>
    tpu.vector_store %arg4[%c0_31, %c2_32, %c0_33, %c0_34], %34 {strides = array<i32>} : memref<1x12x12x16xf32, #tpu.memory_space<vmem>>, vector<1x1x12x16xf32>,
    %c3 = arith.constant 3 : index
    %c0_35 = arith.constant 0 : index
    %35 = tpu.strided_load %arg6[%c3, %c0_35] {strides = array<i32: 24, 1>} : memref<288x16xf32, #tpu.memory_space<vmem>>, vector<12x16xf32>
    %c15 = arith.constant 15 : index
    %c0_36 = arith.constant 0 : index
    %36 = tpu.strided_load %arg6[%c15, %c0_36] {strides = array<i32: 24, 1>} : memref<288x16xf32, #tpu.memory_space<vmem>>, vector<12x16xf32>
    %37 = arith.maximumf %35, %36 : vector<12x16xf32>
    %cst_37 = arith.constant 0.000000e+00 : f32
    %38 = vector.broadcast %cst_37 : f32 to vector<12x16xf32>
    %39 = arith.maximumf %37, %38 : vector<12x16xf32>
    %c0_38 = arith.constant 0 : index
    %c3_39 = arith.constant 3 : index
    %c0_40 = arith.constant 0 : index
    %c0_41 = arith.constant 0 : index
    %40 = vector.load %arg4[%c0_38, %c3_39, %c0_40, %c0_41] : memref<1x12x12x16xf32, #tpu.memory_space<vmem>>, vector<1x1x12x16xf32>
    %41 = vector.shape_cast %40 : vector<1x1x12x16xf32> to vector<12x16xf32>
    %42 = vector.shape_cast %39 : vector<12x16xf32> to vector<1x1x12x16xf32>
    tpu.vector_store %arg4[%c0_38, %c3_39, %c0_40, %c0_41], %42 {strides = array<i32>} : memref<1x12x12x16xf32, #tpu.memory_space<vmem>>, vector<1x1x12x16xf32>,
    %c4 = arith.constant 4 : index
    %c0_42 = arith.constant 0 : index
    %43 = tpu.strided_load %arg6[%c4, %c0_42] {strides = array<i32: 24, 1>} : memref<288x16xf32, #tpu.memory_space<vmem>>, vector<12x16xf32>
    %c16 = arith.constant 16 : index
    %c0_43 = arith.constant 0 : index
    %44 = tpu.strided_load %arg6[%c16, %c0_43] {strides = array<i32: 24, 1>} : memref<288x16xf32, #tpu.memory_space<vmem>>, vector<12x16xf32>
    %45 = arith.maximumf %43, %44 : vector<12x16xf32>
    %cst_44 = arith.constant 0.000000e+00 : f32
    %46 = vector.broadcast %cst_44 : f32 to vector<12x16xf32>
    %47 = arith.maximumf %45, %46 : vector<12x16xf32>
    %c0_45 = arith.constant 0 : index
    %c4_46 = arith.constant 4 : index
    %c0_47 = arith.constant 0 : index
    %c0_48 = arith.constant 0 : index
    %48 = vector.load %arg4[%c0_45, %c4_46, %c0_47, %c0_48] : memref<1x12x12x16xf32, #tpu.memory_space<vmem>>, vector<1x1x12x16xf32>
    %49 = vector.shape_cast %48 : vector<1x1x12x16xf32> to vector<12x16xf32>
    %50 = vector.shape_cast %47 : vector<12x16xf32> to vector<1x1x12x16xf32>
    tpu.vector_store %arg4[%c0_45, %c4_46, %c0_47, %c0_48], %50 {strides = array<i32>} : memref<1x12x12x16xf32, #tpu.memory_space<vmem>>, vector<1x1x12x16xf32>,
    %c5 = arith.constant 5 : index
    %c0_49 = arith.constant 0 : index
    %51 = tpu.strided_load %arg6[%c5, %c0_49] {strides = array<i32: 24, 1>} : memref<288x16xf32, #tpu.memory_space<vmem>>, vector<12x16xf32>
    %c17 = arith.constant 17 : index
    %c0_50 = arith.constant 0 : index
    %52 = tpu.strided_load %arg6[%c17, %c0_50] {strides = array<i32: 24, 1>} : memref<288x16xf32, #tpu.memory_space<vmem>>, vector<12x16xf32>
    %53 = arith.maximumf %51, %52 : vector<12x16xf32>
    %cst_51 = arith.constant 0.000000e+00 : f32
    %54 = vector.broadcast %cst_51 : f32 to vector<12x16xf32>
    %55 = arith.maximumf %53, %54 : vector<12x16xf32>
    %c0_52 = arith.constant 0 : index
    %c5_53 = arith.constant 5 : index
    %c0_54 = arith.constant 0 : index
    %c0_55 = arith.constant 0 : index
    %56 = vector.load %arg4[%c0_52, %c5_53, %c0_54, %c0_55] : memref<1x12x12x16xf32, #tpu.memory_space<vmem>>, vector<1x1x12x16xf32>
    %57 = vector.shape_cast %56 : vector<1x1x12x16xf32> to vector<12x16xf32>
    %58 = vector.shape_cast %55 : vector<12x16xf32> to vector<1x1x12x16xf32>
    tpu.vector_store %arg4[%c0_52, %c5_53, %c0_54, %c0_55], %58 {strides = array<i32>} : memref<1x12x12x16xf32, #tpu.memory_space<vmem>>, vector<1x1x12x16xf32>,
    %c6 = arith.constant 6 : index
    %c0_56 = arith.constant 0 : index
    %59 = tpu.strided_load %arg6[%c6, %c0_56] {strides = array<i32: 24, 1>} : memref<288x16xf32, #tpu.memory_space<vmem>>, vector<12x16xf32>
    %c18 = arith.constant 18 : index
    %c0_57 = arith.constant 0 : index
    %60 = tpu.strided_load %arg6[%c18, %c0_57] {strides = array<i32: 24, 1>} : memref<288x16xf32, #tpu.memory_space<vmem>>, vector<12x16xf32>
    %61 = arith.maximumf %59, %60 : vector<12x16xf32>
    %cst_58 = arith.constant 0.000000e+00 : f32
    %62 = vector.broadcast %cst_58 : f32 to vector<12x16xf32>
    %63 = arith.maximumf %61, %62 : vector<12x16xf32>
    %c0_59 = arith.constant 0 : index
    %c6_60 = arith.constant 6 : index
    %c0_61 = arith.constant 0 : index
    %c0_62 = arith.constant 0 : index
    %64 = vector.load %arg4[%c0_59, %c6_60, %c0_61, %c0_62] : memref<1x12x12x16xf32, #tpu.memory_space<vmem>>, vector<1x1x12x16xf32>
    %65 = vector.shape_cast %64 : vector<1x1x12x16xf32> to vector<12x16xf32>
    %66 = vector.shape_cast %63 : vector<12x16xf32> to vector<1x1x12x16xf32>
    tpu.vector_store %arg4[%c0_59, %c6_60, %c0_61, %c0_62], %66 {strides = array<i32>} : memref<1x12x12x16xf32, #tpu.memory_space<vmem>>, vector<1x1x12x16xf32>,
    %c7 = arith.constant 7 : index
    %c0_63 = arith.constant 0 : index
    %67 = tpu.strided_load %arg6[%c7, %c0_63] {strides = array<i32: 24, 1>} : memref<288x16xf32, #tpu.memory_space<vmem>>, vector<12x16xf32>
    %c19 = arith.constant 19 : index
    %c0_64 = arith.constant 0 : index
    %68 = tpu.strided_load %arg6[%c19, %c0_64] {strides = array<i32: 24, 1>} : memref<288x16xf32, #tpu.memory_space<vmem>>, vector<12x16xf32>
    %69 = arith.maximumf %67, %68 : vector<12x16xf32>
    %cst_65 = arith.constant 0.000000e+00 : f32
    %70 = vector.broadcast %cst_65 : f32 to vector<12x16xf32>
    %71 = arith.maximumf %69, %70 : vector<12x16xf32>
    %c0_66 = arith.constant 0 : index
    %c7_67 = arith.constant 7 : index
    %c0_68 = arith.constant 0 : index
    %c0_69 = arith.constant 0 : index
    %72 = vector.load %arg4[%c0_66, %c7_67, %c0_68, %c0_69] : memref<1x12x12x16xf32, #tpu.memory_space<vmem>>, vector<1x1x12x16xf32>
    %73 = vector.shape_cast %72 : vector<1x1x12x16xf32> to vector<12x16xf32>
    %74 = vector.shape_cast %71 : vector<12x16xf32> to vector<1x1x12x16xf32>
    tpu.vector_store %arg4[%c0_66, %c7_67, %c0_68, %c0_69], %74 {strides = array<i32>} : memref<1x12x12x16xf32, #tpu.memory_space<vmem>>, vector<1x1x12x16xf32>,
    %c8 = arith.constant 8 : index
    %c0_70 = arith.constant 0 : index
    %75 = tpu.strided_load %arg6[%c8, %c0_70] {strides = array<i32: 24, 1>} : memref<288x16xf32, #tpu.memory_space<vmem>>, vector<12x16xf32>
    %c20 = arith.constant 20 : index
    %c0_71 = arith.constant 0 : index
    %76 = tpu.strided_load %arg6[%c20, %c0_71] {strides = array<i32: 24, 1>} : memref<288x16xf32, #tpu.memory_space<vmem>>, vector<12x16xf32>
    %77 = arith.maximumf %75, %76 : vector<12x16xf32>
    %cst_72 = arith.constant 0.000000e+00 : f32
    %78 = vector.broadcast %cst_72 : f32 to vector<12x16xf32>
    %79 = arith.maximumf %77, %78 : vector<12x16xf32>
    %c0_73 = arith.constant 0 : index
    %c8_74 = arith.constant 8 : index
    %c0_75 = arith.constant 0 : index
    %c0_76 = arith.constant 0 : index
    %80 = vector.load %arg4[%c0_73, %c8_74, %c0_75, %c0_76] : memref<1x12x12x16xf32, #tpu.memory_space<vmem>>, vector<1x1x12x16xf32>
    %81 = vector.shape_cast %80 : vector<1x1x12x16xf32> to vector<12x16xf32>
    %82 = vector.shape_cast %79 : vector<12x16xf32> to vector<1x1x12x16xf32>
    tpu.vector_store %arg4[%c0_73, %c8_74, %c0_75, %c0_76], %82 {strides = array<i32>} : memref<1x12x12x16xf32, #tpu.memory_space<vmem>>, vector<1x1x12x16xf32>,
    %c9 = arith.constant 9 : index
    %c0_77 = arith.constant 0 : index
    %83 = tpu.strided_load %arg6[%c9, %c0_77] {strides = array<i32: 24, 1>} : memref<288x16xf32, #tpu.memory_space<vmem>>, vector<12x16xf32>
    %c21 = arith.constant 21 : index
    %c0_78 = arith.constant 0 : index
    %84 = tpu.strided_load %arg6[%c21, %c0_78] {strides = array<i32: 24, 1>} : memref<288x16xf32, #tpu.memory_space<vmem>>, vector<12x16xf32>
    %85 = arith.maximumf %83, %84 : vector<12x16xf32>
    %cst_79 = arith.constant 0.000000e+00 : f32
    %86 = vector.broadcast %cst_79 : f32 to vector<12x16xf32>
    %87 = arith.maximumf %85, %86 : vector<12x16xf32>
    %c0_80 = arith.constant 0 : index
    %c9_81 = arith.constant 9 : index
    %c0_82 = arith.constant 0 : index
    %c0_83 = arith.constant 0 : index
    %88 = vector.load %arg4[%c0_80, %c9_81, %c0_82, %c0_83] : memref<1x12x12x16xf32, #tpu.memory_space<vmem>>, vector<1x1x12x16xf32>
    %89 = vector.shape_cast %88 : vector<1x1x12x16xf32> to vector<12x16xf32>
    %90 = vector.shape_cast %87 : vector<12x16xf32> to vector<1x1x12x16xf32>
    tpu.vector_store %arg4[%c0_80, %c9_81, %c0_82, %c0_83], %90 {strides = array<i32>} : memref<1x12x12x16xf32, #tpu.memory_space<vmem>>, vector<1x1x12x16xf32>,
    %c10 = arith.constant 10 : index
    %c0_84 = arith.constant 0 : index
    %91 = tpu.strided_load %arg6[%c10, %c0_84] {strides = array<i32: 24, 1>} : memref<288x16xf32, #tpu.memory_space<vmem>>, vector<12x16xf32>
    %c22 = arith.constant 22 : index
    %c0_85 = arith.constant 0 : index
    %92 = tpu.strided_load %arg6[%c22, %c0_85] {strides = array<i32: 24, 1>} : memref<288x16xf32, #tpu.memory_space<vmem>>, vector<12x16xf32>
    %93 = arith.maximumf %91, %92 : vector<12x16xf32>
    %cst_86 = arith.constant 0.000000e+00 : f32
    %94 = vector.broadcast %cst_86 : f32 to vector<12x16xf32>
    %95 = arith.maximumf %93, %94 : vector<12x16xf32>
    %c0_87 = arith.constant 0 : index
    %c10_88 = arith.constant 10 : index
    %c0_89 = arith.constant 0 : index
    %c0_90 = arith.constant 0 : index
    %96 = vector.load %arg4[%c0_87, %c10_88, %c0_89, %c0_90] : memref<1x12x12x16xf32, #tpu.memory_space<vmem>>, vector<1x1x12x16xf32>
    %97 = vector.shape_cast %96 : vector<1x1x12x16xf32> to vector<12x16xf32>
    %98 = vector.shape_cast %95 : vector<12x16xf32> to vector<1x1x12x16xf32>
    tpu.vector_store %arg4[%c0_87, %c10_88, %c0_89, %c0_90], %98 {strides = array<i32>} : memref<1x12x12x16xf32, #tpu.memory_space<vmem>>, vector<1x1x12x16xf32>,
    %c11 = arith.constant 11 : index
    %c0_91 = arith.constant 0 : index
    %99 = tpu.strided_load %arg6[%c11, %c0_91] {strides = array<i32: 24, 1>} : memref<288x16xf32, #tpu.memory_space<vmem>>, vector<12x16xf32>
    %c23 = arith.constant 23 : index
    %c0_92 = arith.constant 0 : index
    %100 = tpu.strided_load %arg6[%c23, %c0_92] {strides = array<i32: 24, 1>} : memref<288x16xf32, #tpu.memory_space<vmem>>, vector<12x16xf32>
    %101 = arith.maximumf %99, %100 : vector<12x16xf32>
    %cst_93 = arith.constant 0.000000e+00 : f32
    %102 = vector.broadcast %cst_93 : f32 to vector<12x16xf32>
    %103 = arith.maximumf %101, %102 : vector<12x16xf32>
    %c0_94 = arith.constant 0 : index
    %c11_95 = arith.constant 11 : index
    %c0_96 = arith.constant 0 : index
    %c0_97 = arith.constant 0 : index
    %104 = vector.load %arg4[%c0_94, %c11_95, %c0_96, %c0_97] : memref<1x12x12x16xf32, #tpu.memory_space<vmem>>, vector<1x1x12x16xf32>
    %105 = vector.shape_cast %104 : vector<1x1x12x16xf32> to vector<12x16xf32>
    %106 = vector.shape_cast %103 : vector<12x16xf32> to vector<1x1x12x16xf32>
    tpu.vector_store %arg4[%c0_94, %c11_95, %c0_96, %c0_97], %106 {strides = array<i32>} : memref<1x12x12x16xf32, #tpu.memory_space<vmem>>, vector<1x1x12x16xf32>,
    return
  }
  func.func @transform_0(%arg0: i32) -> (i32, i32) {
    %c0_i32 = arith.constant 0 : i32
    %c0_i32_0 = arith.constant 0 : i32
    return %arg0, %c0_i32 : i32, i32
  }
  func.func @transform_1(%arg0: i32) -> (i32, i32) {
    %c0_i32 = arith.constant 0 : i32
    %c0_i32_0 = arith.constant 0 : i32
    %c0_i32_1 = arith.constant 0 : i32
    return %c0_i32, %c0_i32_0 : i32, i32
  }
  func.func @transform_2(%arg0: i32) -> (i32, i32) {
    %c0_i32 = arith.constant 0 : i32
    %c0_i32_0 = arith.constant 0 : i32
    %c0_i32_1 = arith.constant 0 : i32
    return %c0_i32, %c0_i32_0 : i32, i32
  }
  func.func @transform_3(%arg0: i32) -> (i32, i32, i32, i32) {
    %c0_i32 = arith.constant 0 : i32
    %c0_i32_0 = arith.constant 0 : i32
    %c0_i32_1 = arith.constant 0 : i32
    %c0_i32_2 = arith.constant 0 : i32
    return %arg0, %c0_i32, %c0_i32_0, %c0_i32_1 : i32, i32, i32, i32
  }
}

module attributes {stable_mosaic.version = 11 : i64} {
  func.func @_conv2_fc_kernel(%arg0: i32, %arg1: memref<64x250xbf16, #tpu.memory_space<vmem>>, %arg2: memref<250x32xbf16, #tpu.memory_space<vmem>>, %arg3: memref<1x32xf32, #tpu.memory_space<vmem>>, %arg4: memref<16x32x64xf32, #tpu.memory_space<vmem>>, %arg5: memref<1x64xf32, #tpu.memory_space<vmem>>, %arg6: memref<64x10xf32, #tpu.memory_space<vmem>>, %arg7: memref<1x10xf32, #tpu.memory_space<vmem>>, %arg8: memref<1x1x10xf32, #tpu.memory_space<vmem>>, %arg9: memref<1x16x1x32xf32, #tpu.memory_space<vmem>>, %arg10: memref<64x32xf32, #tpu.memory_space<vmem>>, %arg11: memref<32x32xf32, #tpu.memory_space<vmem>>) attributes {dimension_semantics = [#tpu.dimension_semantics<parallel>], iteration_bounds = array<i64: 2>, scalar_prefetch = 0 : i64, scratch_operands = 2 : i64, tpu.core_type = #tpu.core_type<tc>, window_params = [{transform_indices = @transform_0, window_bounds = array<i64: 64, 250>}, {pipeline_mode = #tpu.pipeline_mode<synchronous>, transform_indices = @transform_1, window_bounds = array<i64: 250, 32>}, {pipeline_mode = #tpu.pipeline_mode<synchronous>, transform_indices = @transform_2, window_bounds = array<i64: 1, 32>}, {pipeline_mode = #tpu.pipeline_mode<synchronous>, transform_indices = @transform_3, window_bounds = array<i64: 16, 32, 64>}, {pipeline_mode = #tpu.pipeline_mode<synchronous>, transform_indices = @transform_4, window_bounds = array<i64: 1, 64>}, {pipeline_mode = #tpu.pipeline_mode<synchronous>, transform_indices = @transform_5, window_bounds = array<i64: 64, 10>}, {pipeline_mode = #tpu.pipeline_mode<synchronous>, transform_indices = @transform_6, window_bounds = array<i64: 1, 10>}, {transform_indices = @transform_7, window_bounds = array<i64: 1, 1, 10>}, {transform_indices = @transform_8, window_bounds = array<i64: 1, 16, 1, 32>}]} {
    %c0 = arith.constant 0 : index
    %c0_0 = arith.constant 0 : index
    %0 = vector.load %arg1[%c0, %c0_0] : memref<64x250xbf16, #tpu.memory_space<vmem>>, vector<64x250xbf16>
    %c0_1 = arith.constant 0 : index
    %c0_2 = arith.constant 0 : index
    %1 = vector.load %arg2[%c0_1, %c0_2] : memref<250x32xbf16, #tpu.memory_space<vmem>>, vector<250x32xbf16>
    %cst = arith.constant dense<0.000000e+00> : vector<64x32xf32>
    %2 = tpu.matmul %0, %1, %cst {dimension_numbers = #tpu.dot_dimension_numbers<[1], [0], [0], [1], [0, 0, 1, 1], [], []>} : vector<64x250xbf16>, vector<250x32xbf16>, vector<64x32xf32> -> vector<64x32xf32>
    %c0_3 = arith.constant 0 : index
    %c0_4 = arith.constant 0 : index
    %3 = vector.load %arg3[%c0_3, %c0_4] : memref<1x32xf32, #tpu.memory_space<vmem>>, vector<1x32xf32>
    %4 = vector.broadcast %3 : vector<1x32xf32> to vector<64x32xf32>
    %5 = arith.addf %2, %4 : vector<64x32xf32>
    %c0_5 = arith.constant 0 : index
    %c0_6 = arith.constant 0 : index
    %6 = vector.load %arg10[%c0_5, %c0_6] : memref<64x32xf32, #tpu.memory_space<vmem>>, vector<64x32xf32>
    tpu.vector_store %arg10[%c0_5, %c0_6], %5 {strides = array<i32>} : memref<64x32xf32, #tpu.memory_space<vmem>>, vector<64x32xf32>,
    %c0_7 = arith.constant 0 : index
    %c0_8 = arith.constant 0 : index
    %7 = tpu.strided_load %arg10[%c0_7, %c0_8] {strides = array<i32: 2, 1>} : memref<64x32xf32, #tpu.memory_space<vmem>>, vector<32x32xf32>
    %c1 = arith.constant 1 : index
    %c0_9 = arith.constant 0 : index
    %8 = tpu.strided_load %arg10[%c1, %c0_9] {strides = array<i32: 2, 1>} : memref<64x32xf32, #tpu.memory_space<vmem>>, vector<32x32xf32>
    %9 = arith.maximumf %7, %8 : vector<32x32xf32>
    %c0_10 = arith.constant 0 : index
    %c0_11 = arith.constant 0 : index
    %10 = vector.load %arg11[%c0_10, %c0_11] : memref<32x32xf32, #tpu.memory_space<vmem>>, vector<32x32xf32>
    tpu.vector_store %arg11[%c0_10, %c0_11], %9 {strides = array<i32>} : memref<32x32xf32, #tpu.memory_space<vmem>>, vector<32x32xf32>,
    %cst_12 = arith.constant 0.000000e+00 : f32
    %11 = vector.broadcast %cst_12 : f32 to vector<1x64xf32>
    %c0_13 = arith.constant 0 : index
    %c0_14 = arith.constant 0 : index
    %12 = vector.load %arg5[%c0_13, %c0_14] : memref<1x64xf32, #tpu.memory_space<vmem>>, vector<1x64xf32>
    %13 = arith.addf %11, %12 : vector<1x64xf32>
    %c0_15 = arith.constant 0 : index
    %c0_16 = arith.constant 0 : index
    %14 = tpu.strided_load %arg11[%c0_15, %c0_16] {strides = array<i32: 32, 1>} : memref<32x32xf32, #tpu.memory_space<vmem>>, vector<1x32xf32>
    %c4 = arith.constant 4 : index
    %c0_17 = arith.constant 0 : index
    %15 = tpu.strided_load %arg11[%c4, %c0_17] {strides = array<i32: 32, 1>} : memref<32x32xf32, #tpu.memory_space<vmem>>, vector<1x32xf32>
    %16 = arith.maximumf %14, %15 : vector<1x32xf32>
    %cst_18 = arith.constant 0.000000e+00 : f32
    %17 = vector.broadcast %cst_18 : f32 to vector<1x32xf32>
    %18 = arith.maximumf %16, %17 : vector<1x32xf32>
    %c0_19 = arith.constant 0 : index
    %c0_20 = arith.constant 0 : index
    %c0_21 = arith.constant 0 : index
    %c0_22 = arith.constant 0 : index
    %19 = vector.load %arg9[%c0_19, %c0_20, %c0_21, %c0_22] : memref<1x16x1x32xf32, #tpu.memory_space<vmem>>, vector<1x1x1x32xf32>
    %20 = vector.shape_cast %19 : vector<1x1x1x32xf32> to vector<1x32xf32>
    %21 = vector.shape_cast %18 : vector<1x32xf32> to vector<1x1x1x32xf32>
    tpu.vector_store %arg9[%c0_19, %c0_20, %c0_21, %c0_22], %21 {strides = array<i32>} : memref<1x16x1x32xf32, #tpu.memory_space<vmem>>, vector<1x1x1x32xf32>,
    %c0_23 = arith.constant 0 : index
    %c0_24 = arith.constant 0 : index
    %c0_25 = arith.constant 0 : index
    %22 = vector.load %arg4[%c0_23, %c0_24, %c0_25] : memref<16x32x64xf32, #tpu.memory_space<vmem>>, vector<1x32x64xf32>
    %23 = vector.shape_cast %22 : vector<1x32x64xf32> to vector<32x64xf32>
    %cst_26 = arith.constant dense<0.000000e+00> : vector<1x64xf32>
    %24 = tpu.matmul %18, %23, %cst_26 {dimension_numbers = #tpu.dot_dimension_numbers<[1], [0], [0], [1], [0, 0, 1, 1], [], []>} : vector<1x32xf32>, vector<32x64xf32>, vector<1x64xf32> -> vector<1x64xf32>
    %25 = arith.addf %13, %24 : vector<1x64xf32>
    %c1_27 = arith.constant 1 : index
    %c0_28 = arith.constant 0 : index
    %26 = tpu.strided_load %arg11[%c1_27, %c0_28] {strides = array<i32: 32, 1>} : memref<32x32xf32, #tpu.memory_space<vmem>>, vector<1x32xf32>
    %c5 = arith.constant 5 : index
    %c0_29 = arith.constant 0 : index
    %27 = tpu.strided_load %arg11[%c5, %c0_29] {strides = array<i32: 32, 1>} : memref<32x32xf32, #tpu.memory_space<vmem>>, vector<1x32xf32>
    %28 = arith.maximumf %26, %27 : vector<1x32xf32>
    %cst_30 = arith.constant 0.000000e+00 : f32
    %29 = vector.broadcast %cst_30 : f32 to vector<1x32xf32>
    %30 = arith.maximumf %28, %29 : vector<1x32xf32>
    %c0_31 = arith.constant 0 : index
    %c1_32 = arith.constant 1 : index
    %c0_33 = arith.constant 0 : index
    %c0_34 = arith.constant 0 : index
    %31 = vector.load %arg9[%c0_31, %c1_32, %c0_33, %c0_34] : memref<1x16x1x32xf32, #tpu.memory_space<vmem>>, vector<1x1x1x32xf32>
    %32 = vector.shape_cast %31 : vector<1x1x1x32xf32> to vector<1x32xf32>
    %33 = vector.shape_cast %30 : vector<1x32xf32> to vector<1x1x1x32xf32>
    tpu.vector_store %arg9[%c0_31, %c1_32, %c0_33, %c0_34], %33 {strides = array<i32>} : memref<1x16x1x32xf32, #tpu.memory_space<vmem>>, vector<1x1x1x32xf32>,
    %c1_35 = arith.constant 1 : index
    %c0_36 = arith.constant 0 : index
    %c0_37 = arith.constant 0 : index
    %34 = vector.load %arg4[%c1_35, %c0_36, %c0_37] : memref<16x32x64xf32, #tpu.memory_space<vmem>>, vector<1x32x64xf32>
    %35 = vector.shape_cast %34 : vector<1x32x64xf32> to vector<32x64xf32>
    %cst_38 = arith.constant dense<0.000000e+00> : vector<1x64xf32>
    %36 = tpu.matmul %30, %35, %cst_38 {dimension_numbers = #tpu.dot_dimension_numbers<[1], [0], [0], [1], [0, 0, 1, 1], [], []>} : vector<1x32xf32>, vector<32x64xf32>, vector<1x64xf32> -> vector<1x64xf32>
    %37 = arith.addf %25, %36 : vector<1x64xf32>
    %c2 = arith.constant 2 : index
    %c0_39 = arith.constant 0 : index
    %38 = tpu.strided_load %arg11[%c2, %c0_39] {strides = array<i32: 32, 1>} : memref<32x32xf32, #tpu.memory_space<vmem>>, vector<1x32xf32>
    %c6 = arith.constant 6 : index
    %c0_40 = arith.constant 0 : index
    %39 = tpu.strided_load %arg11[%c6, %c0_40] {strides = array<i32: 32, 1>} : memref<32x32xf32, #tpu.memory_space<vmem>>, vector<1x32xf32>
    %40 = arith.maximumf %38, %39 : vector<1x32xf32>
    %cst_41 = arith.constant 0.000000e+00 : f32
    %41 = vector.broadcast %cst_41 : f32 to vector<1x32xf32>
    %42 = arith.maximumf %40, %41 : vector<1x32xf32>
    %c0_42 = arith.constant 0 : index
    %c2_43 = arith.constant 2 : index
    %c0_44 = arith.constant 0 : index
    %c0_45 = arith.constant 0 : index
    %43 = vector.load %arg9[%c0_42, %c2_43, %c0_44, %c0_45] : memref<1x16x1x32xf32, #tpu.memory_space<vmem>>, vector<1x1x1x32xf32>
    %44 = vector.shape_cast %43 : vector<1x1x1x32xf32> to vector<1x32xf32>
    %45 = vector.shape_cast %42 : vector<1x32xf32> to vector<1x1x1x32xf32>
    tpu.vector_store %arg9[%c0_42, %c2_43, %c0_44, %c0_45], %45 {strides = array<i32>} : memref<1x16x1x32xf32, #tpu.memory_space<vmem>>, vector<1x1x1x32xf32>,
    %c2_46 = arith.constant 2 : index
    %c0_47 = arith.constant 0 : index
    %c0_48 = arith.constant 0 : index
    %46 = vector.load %arg4[%c2_46, %c0_47, %c0_48] : memref<16x32x64xf32, #tpu.memory_space<vmem>>, vector<1x32x64xf32>
    %47 = vector.shape_cast %46 : vector<1x32x64xf32> to vector<32x64xf32>
    %cst_49 = arith.constant dense<0.000000e+00> : vector<1x64xf32>
    %48 = tpu.matmul %42, %47, %cst_49 {dimension_numbers = #tpu.dot_dimension_numbers<[1], [0], [0], [1], [0, 0, 1, 1], [], []>} : vector<1x32xf32>, vector<32x64xf32>, vector<1x64xf32> -> vector<1x64xf32>
    %49 = arith.addf %37, %48 : vector<1x64xf32>
    %c3 = arith.constant 3 : index
    %c0_50 = arith.constant 0 : index
    %50 = tpu.strided_load %arg11[%c3, %c0_50] {strides = array<i32: 32, 1>} : memref<32x32xf32, #tpu.memory_space<vmem>>, vector<1x32xf32>
    %c7 = arith.constant 7 : index
    %c0_51 = arith.constant 0 : index
    %51 = tpu.strided_load %arg11[%c7, %c0_51] {strides = array<i32: 32, 1>} : memref<32x32xf32, #tpu.memory_space<vmem>>, vector<1x32xf32>
    %52 = arith.maximumf %50, %51 : vector<1x32xf32>
    %cst_52 = arith.constant 0.000000e+00 : f32
    %53 = vector.broadcast %cst_52 : f32 to vector<1x32xf32>
    %54 = arith.maximumf %52, %53 : vector<1x32xf32>
    %c0_53 = arith.constant 0 : index
    %c3_54 = arith.constant 3 : index
    %c0_55 = arith.constant 0 : index
    %c0_56 = arith.constant 0 : index
    %55 = vector.load %arg9[%c0_53, %c3_54, %c0_55, %c0_56] : memref<1x16x1x32xf32, #tpu.memory_space<vmem>>, vector<1x1x1x32xf32>
    %56 = vector.shape_cast %55 : vector<1x1x1x32xf32> to vector<1x32xf32>
    %57 = vector.shape_cast %54 : vector<1x32xf32> to vector<1x1x1x32xf32>
    tpu.vector_store %arg9[%c0_53, %c3_54, %c0_55, %c0_56], %57 {strides = array<i32>} : memref<1x16x1x32xf32, #tpu.memory_space<vmem>>, vector<1x1x1x32xf32>,
    %c3_57 = arith.constant 3 : index
    %c0_58 = arith.constant 0 : index
    %c0_59 = arith.constant 0 : index
    %58 = vector.load %arg4[%c3_57, %c0_58, %c0_59] : memref<16x32x64xf32, #tpu.memory_space<vmem>>, vector<1x32x64xf32>
    %59 = vector.shape_cast %58 : vector<1x32x64xf32> to vector<32x64xf32>
    %cst_60 = arith.constant dense<0.000000e+00> : vector<1x64xf32>
    %60 = tpu.matmul %54, %59, %cst_60 {dimension_numbers = #tpu.dot_dimension_numbers<[1], [0], [0], [1], [0, 0, 1, 1], [], []>} : vector<1x32xf32>, vector<32x64xf32>, vector<1x64xf32> -> vector<1x64xf32>
    %61 = arith.addf %49, %60 : vector<1x64xf32>
    %c8 = arith.constant 8 : index
    %c0_61 = arith.constant 0 : index
    %62 = tpu.strided_load %arg11[%c8, %c0_61] {strides = array<i32: 32, 1>} : memref<32x32xf32, #tpu.memory_space<vmem>>, vector<1x32xf32>
    %c12 = arith.constant 12 : index
    %c0_62 = arith.constant 0 : index
    %63 = tpu.strided_load %arg11[%c12, %c0_62] {strides = array<i32: 32, 1>} : memref<32x32xf32, #tpu.memory_space<vmem>>, vector<1x32xf32>
    %64 = arith.maximumf %62, %63 : vector<1x32xf32>
    %cst_63 = arith.constant 0.000000e+00 : f32
    %65 = vector.broadcast %cst_63 : f32 to vector<1x32xf32>
    %66 = arith.maximumf %64, %65 : vector<1x32xf32>
    %c0_64 = arith.constant 0 : index
    %c4_65 = arith.constant 4 : index
    %c0_66 = arith.constant 0 : index
    %c0_67 = arith.constant 0 : index
    %67 = vector.load %arg9[%c0_64, %c4_65, %c0_66, %c0_67] : memref<1x16x1x32xf32, #tpu.memory_space<vmem>>, vector<1x1x1x32xf32>
    %68 = vector.shape_cast %67 : vector<1x1x1x32xf32> to vector<1x32xf32>
    %69 = vector.shape_cast %66 : vector<1x32xf32> to vector<1x1x1x32xf32>
    tpu.vector_store %arg9[%c0_64, %c4_65, %c0_66, %c0_67], %69 {strides = array<i32>} : memref<1x16x1x32xf32, #tpu.memory_space<vmem>>, vector<1x1x1x32xf32>,
    %c4_68 = arith.constant 4 : index
    %c0_69 = arith.constant 0 : index
    %c0_70 = arith.constant 0 : index
    %70 = vector.load %arg4[%c4_68, %c0_69, %c0_70] : memref<16x32x64xf32, #tpu.memory_space<vmem>>, vector<1x32x64xf32>
    %71 = vector.shape_cast %70 : vector<1x32x64xf32> to vector<32x64xf32>
    %cst_71 = arith.constant dense<0.000000e+00> : vector<1x64xf32>
    %72 = tpu.matmul %66, %71, %cst_71 {dimension_numbers = #tpu.dot_dimension_numbers<[1], [0], [0], [1], [0, 0, 1, 1], [], []>} : vector<1x32xf32>, vector<32x64xf32>, vector<1x64xf32> -> vector<1x64xf32>
    %73 = arith.addf %61, %72 : vector<1x64xf32>
    %c9 = arith.constant 9 : index
    %c0_72 = arith.constant 0 : index
    %74 = tpu.strided_load %arg11[%c9, %c0_72] {strides = array<i32: 32, 1>} : memref<32x32xf32, #tpu.memory_space<vmem>>, vector<1x32xf32>
    %c13 = arith.constant 13 : index
    %c0_73 = arith.constant 0 : index
    %75 = tpu.strided_load %arg11[%c13, %c0_73] {strides = array<i32: 32, 1>} : memref<32x32xf32, #tpu.memory_space<vmem>>, vector<1x32xf32>
    %76 = arith.maximumf %74, %75 : vector<1x32xf32>
    %cst_74 = arith.constant 0.000000e+00 : f32
    %77 = vector.broadcast %cst_74 : f32 to vector<1x32xf32>
    %78 = arith.maximumf %76, %77 : vector<1x32xf32>
    %c0_75 = arith.constant 0 : index
    %c5_76 = arith.constant 5 : index
    %c0_77 = arith.constant 0 : index
    %c0_78 = arith.constant 0 : index
    %79 = vector.load %arg9[%c0_75, %c5_76, %c0_77, %c0_78] : memref<1x16x1x32xf32, #tpu.memory_space<vmem>>, vector<1x1x1x32xf32>
    %80 = vector.shape_cast %79 : vector<1x1x1x32xf32> to vector<1x32xf32>
    %81 = vector.shape_cast %78 : vector<1x32xf32> to vector<1x1x1x32xf32>
    tpu.vector_store %arg9[%c0_75, %c5_76, %c0_77, %c0_78], %81 {strides = array<i32>} : memref<1x16x1x32xf32, #tpu.memory_space<vmem>>, vector<1x1x1x32xf32>,
    %c5_79 = arith.constant 5 : index
    %c0_80 = arith.constant 0 : index
    %c0_81 = arith.constant 0 : index
    %82 = vector.load %arg4[%c5_79, %c0_80, %c0_81] : memref<16x32x64xf32, #tpu.memory_space<vmem>>, vector<1x32x64xf32>
    %83 = vector.shape_cast %82 : vector<1x32x64xf32> to vector<32x64xf32>
    %cst_82 = arith.constant dense<0.000000e+00> : vector<1x64xf32>
    %84 = tpu.matmul %78, %83, %cst_82 {dimension_numbers = #tpu.dot_dimension_numbers<[1], [0], [0], [1], [0, 0, 1, 1], [], []>} : vector<1x32xf32>, vector<32x64xf32>, vector<1x64xf32> -> vector<1x64xf32>
    %85 = arith.addf %73, %84 : vector<1x64xf32>
    %c10 = arith.constant 10 : index
    %c0_83 = arith.constant 0 : index
    %86 = tpu.strided_load %arg11[%c10, %c0_83] {strides = array<i32: 32, 1>} : memref<32x32xf32, #tpu.memory_space<vmem>>, vector<1x32xf32>
    %c14 = arith.constant 14 : index
    %c0_84 = arith.constant 0 : index
    %87 = tpu.strided_load %arg11[%c14, %c0_84] {strides = array<i32: 32, 1>} : memref<32x32xf32, #tpu.memory_space<vmem>>, vector<1x32xf32>
    %88 = arith.maximumf %86, %87 : vector<1x32xf32>
    %cst_85 = arith.constant 0.000000e+00 : f32
    %89 = vector.broadcast %cst_85 : f32 to vector<1x32xf32>
    %90 = arith.maximumf %88, %89 : vector<1x32xf32>
    %c0_86 = arith.constant 0 : index
    %c6_87 = arith.constant 6 : index
    %c0_88 = arith.constant 0 : index
    %c0_89 = arith.constant 0 : index
    %91 = vector.load %arg9[%c0_86, %c6_87, %c0_88, %c0_89] : memref<1x16x1x32xf32, #tpu.memory_space<vmem>>, vector<1x1x1x32xf32>
    %92 = vector.shape_cast %91 : vector<1x1x1x32xf32> to vector<1x32xf32>
    %93 = vector.shape_cast %90 : vector<1x32xf32> to vector<1x1x1x32xf32>
    tpu.vector_store %arg9[%c0_86, %c6_87, %c0_88, %c0_89], %93 {strides = array<i32>} : memref<1x16x1x32xf32, #tpu.memory_space<vmem>>, vector<1x1x1x32xf32>,
    %c6_90 = arith.constant 6 : index
    %c0_91 = arith.constant 0 : index
    %c0_92 = arith.constant 0 : index
    %94 = vector.load %arg4[%c6_90, %c0_91, %c0_92] : memref<16x32x64xf32, #tpu.memory_space<vmem>>, vector<1x32x64xf32>
    %95 = vector.shape_cast %94 : vector<1x32x64xf32> to vector<32x64xf32>
    %cst_93 = arith.constant dense<0.000000e+00> : vector<1x64xf32>
    %96 = tpu.matmul %90, %95, %cst_93 {dimension_numbers = #tpu.dot_dimension_numbers<[1], [0], [0], [1], [0, 0, 1, 1], [], []>} : vector<1x32xf32>, vector<32x64xf32>, vector<1x64xf32> -> vector<1x64xf32>
    %97 = arith.addf %85, %96 : vector<1x64xf32>
    %c11 = arith.constant 11 : index
    %c0_94 = arith.constant 0 : index
    %98 = tpu.strided_load %arg11[%c11, %c0_94] {strides = array<i32: 32, 1>} : memref<32x32xf32, #tpu.memory_space<vmem>>, vector<1x32xf32>
    %c15 = arith.constant 15 : index
    %c0_95 = arith.constant 0 : index
    %99 = tpu.strided_load %arg11[%c15, %c0_95] {strides = array<i32: 32, 1>} : memref<32x32xf32, #tpu.memory_space<vmem>>, vector<1x32xf32>
    %100 = arith.maximumf %98, %99 : vector<1x32xf32>
    %cst_96 = arith.constant 0.000000e+00 : f32
    %101 = vector.broadcast %cst_96 : f32 to vector<1x32xf32>
    %102 = arith.maximumf %100, %101 : vector<1x32xf32>
    %c0_97 = arith.constant 0 : index
    %c7_98 = arith.constant 7 : index
    %c0_99 = arith.constant 0 : index
    %c0_100 = arith.constant 0 : index
    %103 = vector.load %arg9[%c0_97, %c7_98, %c0_99, %c0_100] : memref<1x16x1x32xf32, #tpu.memory_space<vmem>>, vector<1x1x1x32xf32>
    %104 = vector.shape_cast %103 : vector<1x1x1x32xf32> to vector<1x32xf32>
    %105 = vector.shape_cast %102 : vector<1x32xf32> to vector<1x1x1x32xf32>
    tpu.vector_store %arg9[%c0_97, %c7_98, %c0_99, %c0_100], %105 {strides = array<i32>} : memref<1x16x1x32xf32, #tpu.memory_space<vmem>>, vector<1x1x1x32xf32>,
    %c7_101 = arith.constant 7 : index
    %c0_102 = arith.constant 0 : index
    %c0_103 = arith.constant 0 : index
    %106 = vector.load %arg4[%c7_101, %c0_102, %c0_103] : memref<16x32x64xf32, #tpu.memory_space<vmem>>, vector<1x32x64xf32>
    %107 = vector.shape_cast %106 : vector<1x32x64xf32> to vector<32x64xf32>
    %cst_104 = arith.constant dense<0.000000e+00> : vector<1x64xf32>
    %108 = tpu.matmul %102, %107, %cst_104 {dimension_numbers = #tpu.dot_dimension_numbers<[1], [0], [0], [1], [0, 0, 1, 1], [], []>} : vector<1x32xf32>, vector<32x64xf32>, vector<1x64xf32> -> vector<1x64xf32>
    %109 = arith.addf %97, %108 : vector<1x64xf32>
    %c16 = arith.constant 16 : index
    %c0_105 = arith.constant 0 : index
    %110 = tpu.strided_load %arg11[%c16, %c0_105] {strides = array<i32: 32, 1>} : memref<32x32xf32, #tpu.memory_space<vmem>>, vector<1x32xf32>
    %c20 = arith.constant 20 : index
    %c0_106 = arith.constant 0 : index
    %111 = tpu.strided_load %arg11[%c20, %c0_106] {strides = array<i32: 32, 1>} : memref<32x32xf32, #tpu.memory_space<vmem>>, vector<1x32xf32>
    %112 = arith.maximumf %110, %111 : vector<1x32xf32>
    %cst_107 = arith.constant 0.000000e+00 : f32
    %113 = vector.broadcast %cst_107 : f32 to vector<1x32xf32>
    %114 = arith.maximumf %112, %113 : vector<1x32xf32>
    %c0_108 = arith.constant 0 : index
    %c8_109 = arith.constant 8 : index
    %c0_110 = arith.constant 0 : index
    %c0_111 = arith.constant 0 : index
    %115 = vector.load %arg9[%c0_108, %c8_109, %c0_110, %c0_111] : memref<1x16x1x32xf32, #tpu.memory_space<vmem>>, vector<1x1x1x32xf32>
    %116 = vector.shape_cast %115 : vector<1x1x1x32xf32> to vector<1x32xf32>
    %117 = vector.shape_cast %114 : vector<1x32xf32> to vector<1x1x1x32xf32>
    tpu.vector_store %arg9[%c0_108, %c8_109, %c0_110, %c0_111], %117 {strides = array<i32>} : memref<1x16x1x32xf32, #tpu.memory_space<vmem>>, vector<1x1x1x32xf32>,
    %c8_112 = arith.constant 8 : index
    %c0_113 = arith.constant 0 : index
    %c0_114 = arith.constant 0 : index
    %118 = vector.load %arg4[%c8_112, %c0_113, %c0_114] : memref<16x32x64xf32, #tpu.memory_space<vmem>>, vector<1x32x64xf32>
    %119 = vector.shape_cast %118 : vector<1x32x64xf32> to vector<32x64xf32>
    %cst_115 = arith.constant dense<0.000000e+00> : vector<1x64xf32>
    %120 = tpu.matmul %114, %119, %cst_115 {dimension_numbers = #tpu.dot_dimension_numbers<[1], [0], [0], [1], [0, 0, 1, 1], [], []>} : vector<1x32xf32>, vector<32x64xf32>, vector<1x64xf32> -> vector<1x64xf32>
    %121 = arith.addf %109, %120 : vector<1x64xf32>
    %c17 = arith.constant 17 : index
    %c0_116 = arith.constant 0 : index
    %122 = tpu.strided_load %arg11[%c17, %c0_116] {strides = array<i32: 32, 1>} : memref<32x32xf32, #tpu.memory_space<vmem>>, vector<1x32xf32>
    %c21 = arith.constant 21 : index
    %c0_117 = arith.constant 0 : index
    %123 = tpu.strided_load %arg11[%c21, %c0_117] {strides = array<i32: 32, 1>} : memref<32x32xf32, #tpu.memory_space<vmem>>, vector<1x32xf32>
    %124 = arith.maximumf %122, %123 : vector<1x32xf32>
    %cst_118 = arith.constant 0.000000e+00 : f32
    %125 = vector.broadcast %cst_118 : f32 to vector<1x32xf32>
    %126 = arith.maximumf %124, %125 : vector<1x32xf32>
    %c0_119 = arith.constant 0 : index
    %c9_120 = arith.constant 9 : index
    %c0_121 = arith.constant 0 : index
    %c0_122 = arith.constant 0 : index
    %127 = vector.load %arg9[%c0_119, %c9_120, %c0_121, %c0_122] : memref<1x16x1x32xf32, #tpu.memory_space<vmem>>, vector<1x1x1x32xf32>
    %128 = vector.shape_cast %127 : vector<1x1x1x32xf32> to vector<1x32xf32>
    %129 = vector.shape_cast %126 : vector<1x32xf32> to vector<1x1x1x32xf32>
    tpu.vector_store %arg9[%c0_119, %c9_120, %c0_121, %c0_122], %129 {strides = array<i32>} : memref<1x16x1x32xf32, #tpu.memory_space<vmem>>, vector<1x1x1x32xf32>,
    %c9_123 = arith.constant 9 : index
    %c0_124 = arith.constant 0 : index
    %c0_125 = arith.constant 0 : index
    %130 = vector.load %arg4[%c9_123, %c0_124, %c0_125] : memref<16x32x64xf32, #tpu.memory_space<vmem>>, vector<1x32x64xf32>
    %131 = vector.shape_cast %130 : vector<1x32x64xf32> to vector<32x64xf32>
    %cst_126 = arith.constant dense<0.000000e+00> : vector<1x64xf32>
    %132 = tpu.matmul %126, %131, %cst_126 {dimension_numbers = #tpu.dot_dimension_numbers<[1], [0], [0], [1], [0, 0, 1, 1], [], []>} : vector<1x32xf32>, vector<32x64xf32>, vector<1x64xf32> -> vector<1x64xf32>
    %133 = arith.addf %121, %132 : vector<1x64xf32>
    %c18 = arith.constant 18 : index
    %c0_127 = arith.constant 0 : index
    %134 = tpu.strided_load %arg11[%c18, %c0_127] {strides = array<i32: 32, 1>} : memref<32x32xf32, #tpu.memory_space<vmem>>, vector<1x32xf32>
    %c22 = arith.constant 22 : index
    %c0_128 = arith.constant 0 : index
    %135 = tpu.strided_load %arg11[%c22, %c0_128] {strides = array<i32: 32, 1>} : memref<32x32xf32, #tpu.memory_space<vmem>>, vector<1x32xf32>
    %136 = arith.maximumf %134, %135 : vector<1x32xf32>
    %cst_129 = arith.constant 0.000000e+00 : f32
    %137 = vector.broadcast %cst_129 : f32 to vector<1x32xf32>
    %138 = arith.maximumf %136, %137 : vector<1x32xf32>
    %c0_130 = arith.constant 0 : index
    %c10_131 = arith.constant 10 : index
    %c0_132 = arith.constant 0 : index
    %c0_133 = arith.constant 0 : index
    %139 = vector.load %arg9[%c0_130, %c10_131, %c0_132, %c0_133] : memref<1x16x1x32xf32, #tpu.memory_space<vmem>>, vector<1x1x1x32xf32>
    %140 = vector.shape_cast %139 : vector<1x1x1x32xf32> to vector<1x32xf32>
    %141 = vector.shape_cast %138 : vector<1x32xf32> to vector<1x1x1x32xf32>
    tpu.vector_store %arg9[%c0_130, %c10_131, %c0_132, %c0_133], %141 {strides = array<i32>} : memref<1x16x1x32xf32, #tpu.memory_space<vmem>>, vector<1x1x1x32xf32>,
    %c10_134 = arith.constant 10 : index
    %c0_135 = arith.constant 0 : index
    %c0_136 = arith.constant 0 : index
    %142 = vector.load %arg4[%c10_134, %c0_135, %c0_136] : memref<16x32x64xf32, #tpu.memory_space<vmem>>, vector<1x32x64xf32>
    %143 = vector.shape_cast %142 : vector<1x32x64xf32> to vector<32x64xf32>
    %cst_137 = arith.constant dense<0.000000e+00> : vector<1x64xf32>
    %144 = tpu.matmul %138, %143, %cst_137 {dimension_numbers = #tpu.dot_dimension_numbers<[1], [0], [0], [1], [0, 0, 1, 1], [], []>} : vector<1x32xf32>, vector<32x64xf32>, vector<1x64xf32> -> vector<1x64xf32>
    %145 = arith.addf %133, %144 : vector<1x64xf32>
    %c19 = arith.constant 19 : index
    %c0_138 = arith.constant 0 : index
    %146 = tpu.strided_load %arg11[%c19, %c0_138] {strides = array<i32: 32, 1>} : memref<32x32xf32, #tpu.memory_space<vmem>>, vector<1x32xf32>
    %c23 = arith.constant 23 : index
    %c0_139 = arith.constant 0 : index
    %147 = tpu.strided_load %arg11[%c23, %c0_139] {strides = array<i32: 32, 1>} : memref<32x32xf32, #tpu.memory_space<vmem>>, vector<1x32xf32>
    %148 = arith.maximumf %146, %147 : vector<1x32xf32>
    %cst_140 = arith.constant 0.000000e+00 : f32
    %149 = vector.broadcast %cst_140 : f32 to vector<1x32xf32>
    %150 = arith.maximumf %148, %149 : vector<1x32xf32>
    %c0_141 = arith.constant 0 : index
    %c11_142 = arith.constant 11 : index
    %c0_143 = arith.constant 0 : index
    %c0_144 = arith.constant 0 : index
    %151 = vector.load %arg9[%c0_141, %c11_142, %c0_143, %c0_144] : memref<1x16x1x32xf32, #tpu.memory_space<vmem>>, vector<1x1x1x32xf32>
    %152 = vector.shape_cast %151 : vector<1x1x1x32xf32> to vector<1x32xf32>
    %153 = vector.shape_cast %150 : vector<1x32xf32> to vector<1x1x1x32xf32>
    tpu.vector_store %arg9[%c0_141, %c11_142, %c0_143, %c0_144], %153 {strides = array<i32>} : memref<1x16x1x32xf32, #tpu.memory_space<vmem>>, vector<1x1x1x32xf32>,
    %c11_145 = arith.constant 11 : index
    %c0_146 = arith.constant 0 : index
    %c0_147 = arith.constant 0 : index
    %154 = vector.load %arg4[%c11_145, %c0_146, %c0_147] : memref<16x32x64xf32, #tpu.memory_space<vmem>>, vector<1x32x64xf32>
    %155 = vector.shape_cast %154 : vector<1x32x64xf32> to vector<32x64xf32>
    %cst_148 = arith.constant dense<0.000000e+00> : vector<1x64xf32>
    %156 = tpu.matmul %150, %155, %cst_148 {dimension_numbers = #tpu.dot_dimension_numbers<[1], [0], [0], [1], [0, 0, 1, 1], [], []>} : vector<1x32xf32>, vector<32x64xf32>, vector<1x64xf32> -> vector<1x64xf32>
    %157 = arith.addf %145, %156 : vector<1x64xf32>
    %c24 = arith.constant 24 : index
    %c0_149 = arith.constant 0 : index
    %158 = tpu.strided_load %arg11[%c24, %c0_149] {strides = array<i32: 32, 1>} : memref<32x32xf32, #tpu.memory_space<vmem>>, vector<1x32xf32>
    %c28 = arith.constant 28 : index
    %c0_150 = arith.constant 0 : index
    %159 = tpu.strided_load %arg11[%c28, %c0_150] {strides = array<i32: 32, 1>} : memref<32x32xf32, #tpu.memory_space<vmem>>, vector<1x32xf32>
    %160 = arith.maximumf %158, %159 : vector<1x32xf32>
    %cst_151 = arith.constant 0.000000e+00 : f32
    %161 = vector.broadcast %cst_151 : f32 to vector<1x32xf32>
    %162 = arith.maximumf %160, %161 : vector<1x32xf32>
    %c0_152 = arith.constant 0 : index
    %c12_153 = arith.constant 12 : index
    %c0_154 = arith.constant 0 : index
    %c0_155 = arith.constant 0 : index
    %163 = vector.load %arg9[%c0_152, %c12_153, %c0_154, %c0_155] : memref<1x16x1x32xf32, #tpu.memory_space<vmem>>, vector<1x1x1x32xf32>
    %164 = vector.shape_cast %163 : vector<1x1x1x32xf32> to vector<1x32xf32>
    %165 = vector.shape_cast %162 : vector<1x32xf32> to vector<1x1x1x32xf32>
    tpu.vector_store %arg9[%c0_152, %c12_153, %c0_154, %c0_155], %165 {strides = array<i32>} : memref<1x16x1x32xf32, #tpu.memory_space<vmem>>, vector<1x1x1x32xf32>,
    %c12_156 = arith.constant 12 : index
    %c0_157 = arith.constant 0 : index
    %c0_158 = arith.constant 0 : index
    %166 = vector.load %arg4[%c12_156, %c0_157, %c0_158] : memref<16x32x64xf32, #tpu.memory_space<vmem>>, vector<1x32x64xf32>
    %167 = vector.shape_cast %166 : vector<1x32x64xf32> to vector<32x64xf32>
    %cst_159 = arith.constant dense<0.000000e+00> : vector<1x64xf32>
    %168 = tpu.matmul %162, %167, %cst_159 {dimension_numbers = #tpu.dot_dimension_numbers<[1], [0], [0], [1], [0, 0, 1, 1], [], []>} : vector<1x32xf32>, vector<32x64xf32>, vector<1x64xf32> -> vector<1x64xf32>
    %169 = arith.addf %157, %168 : vector<1x64xf32>
    %c25 = arith.constant 25 : index
    %c0_160 = arith.constant 0 : index
    %170 = tpu.strided_load %arg11[%c25, %c0_160] {strides = array<i32: 32, 1>} : memref<32x32xf32, #tpu.memory_space<vmem>>, vector<1x32xf32>
    %c29 = arith.constant 29 : index
    %c0_161 = arith.constant 0 : index
    %171 = tpu.strided_load %arg11[%c29, %c0_161] {strides = array<i32: 32, 1>} : memref<32x32xf32, #tpu.memory_space<vmem>>, vector<1x32xf32>
    %172 = arith.maximumf %170, %171 : vector<1x32xf32>
    %cst_162 = arith.constant 0.000000e+00 : f32
    %173 = vector.broadcast %cst_162 : f32 to vector<1x32xf32>
    %174 = arith.maximumf %172, %173 : vector<1x32xf32>
    %c0_163 = arith.constant 0 : index
    %c13_164 = arith.constant 13 : index
    %c0_165 = arith.constant 0 : index
    %c0_166 = arith.constant 0 : index
    %175 = vector.load %arg9[%c0_163, %c13_164, %c0_165, %c0_166] : memref<1x16x1x32xf32, #tpu.memory_space<vmem>>, vector<1x1x1x32xf32>
    %176 = vector.shape_cast %175 : vector<1x1x1x32xf32> to vector<1x32xf32>
    %177 = vector.shape_cast %174 : vector<1x32xf32> to vector<1x1x1x32xf32>
    tpu.vector_store %arg9[%c0_163, %c13_164, %c0_165, %c0_166], %177 {strides = array<i32>} : memref<1x16x1x32xf32, #tpu.memory_space<vmem>>, vector<1x1x1x32xf32>,
    %c13_167 = arith.constant 13 : index
    %c0_168 = arith.constant 0 : index
    %c0_169 = arith.constant 0 : index
    %178 = vector.load %arg4[%c13_167, %c0_168, %c0_169] : memref<16x32x64xf32, #tpu.memory_space<vmem>>, vector<1x32x64xf32>
    %179 = vector.shape_cast %178 : vector<1x32x64xf32> to vector<32x64xf32>
    %cst_170 = arith.constant dense<0.000000e+00> : vector<1x64xf32>
    %180 = tpu.matmul %174, %179, %cst_170 {dimension_numbers = #tpu.dot_dimension_numbers<[1], [0], [0], [1], [0, 0, 1, 1], [], []>} : vector<1x32xf32>, vector<32x64xf32>, vector<1x64xf32> -> vector<1x64xf32>
    %181 = arith.addf %169, %180 : vector<1x64xf32>
    %c26 = arith.constant 26 : index
    %c0_171 = arith.constant 0 : index
    %182 = tpu.strided_load %arg11[%c26, %c0_171] {strides = array<i32: 32, 1>} : memref<32x32xf32, #tpu.memory_space<vmem>>, vector<1x32xf32>
    %c30 = arith.constant 30 : index
    %c0_172 = arith.constant 0 : index
    %183 = tpu.strided_load %arg11[%c30, %c0_172] {strides = array<i32: 32, 1>} : memref<32x32xf32, #tpu.memory_space<vmem>>, vector<1x32xf32>
    %184 = arith.maximumf %182, %183 : vector<1x32xf32>
    %cst_173 = arith.constant 0.000000e+00 : f32
    %185 = vector.broadcast %cst_173 : f32 to vector<1x32xf32>
    %186 = arith.maximumf %184, %185 : vector<1x32xf32>
    %c0_174 = arith.constant 0 : index
    %c14_175 = arith.constant 14 : index
    %c0_176 = arith.constant 0 : index
    %c0_177 = arith.constant 0 : index
    %187 = vector.load %arg9[%c0_174, %c14_175, %c0_176, %c0_177] : memref<1x16x1x32xf32, #tpu.memory_space<vmem>>, vector<1x1x1x32xf32>
    %188 = vector.shape_cast %187 : vector<1x1x1x32xf32> to vector<1x32xf32>
    %189 = vector.shape_cast %186 : vector<1x32xf32> to vector<1x1x1x32xf32>
    tpu.vector_store %arg9[%c0_174, %c14_175, %c0_176, %c0_177], %189 {strides = array<i32>} : memref<1x16x1x32xf32, #tpu.memory_space<vmem>>, vector<1x1x1x32xf32>,
    %c14_178 = arith.constant 14 : index
    %c0_179 = arith.constant 0 : index
    %c0_180 = arith.constant 0 : index
    %190 = vector.load %arg4[%c14_178, %c0_179, %c0_180] : memref<16x32x64xf32, #tpu.memory_space<vmem>>, vector<1x32x64xf32>
    %191 = vector.shape_cast %190 : vector<1x32x64xf32> to vector<32x64xf32>
    %cst_181 = arith.constant dense<0.000000e+00> : vector<1x64xf32>
    %192 = tpu.matmul %186, %191, %cst_181 {dimension_numbers = #tpu.dot_dimension_numbers<[1], [0], [0], [1], [0, 0, 1, 1], [], []>} : vector<1x32xf32>, vector<32x64xf32>, vector<1x64xf32> -> vector<1x64xf32>
    %193 = arith.addf %181, %192 : vector<1x64xf32>
    %c27 = arith.constant 27 : index
    %c0_182 = arith.constant 0 : index
    %194 = tpu.strided_load %arg11[%c27, %c0_182] {strides = array<i32: 32, 1>} : memref<32x32xf32, #tpu.memory_space<vmem>>, vector<1x32xf32>
    %c31 = arith.constant 31 : index
    %c0_183 = arith.constant 0 : index
    %195 = tpu.strided_load %arg11[%c31, %c0_183] {strides = array<i32: 32, 1>} : memref<32x32xf32, #tpu.memory_space<vmem>>, vector<1x32xf32>
    %196 = arith.maximumf %194, %195 : vector<1x32xf32>
    %cst_184 = arith.constant 0.000000e+00 : f32
    %197 = vector.broadcast %cst_184 : f32 to vector<1x32xf32>
    %198 = arith.maximumf %196, %197 : vector<1x32xf32>
    %c0_185 = arith.constant 0 : index
    %c15_186 = arith.constant 15 : index
    %c0_187 = arith.constant 0 : index
    %c0_188 = arith.constant 0 : index
    %199 = vector.load %arg9[%c0_185, %c15_186, %c0_187, %c0_188] : memref<1x16x1x32xf32, #tpu.memory_space<vmem>>, vector<1x1x1x32xf32>
    %200 = vector.shape_cast %199 : vector<1x1x1x32xf32> to vector<1x32xf32>
    %201 = vector.shape_cast %198 : vector<1x32xf32> to vector<1x1x1x32xf32>
    tpu.vector_store %arg9[%c0_185, %c15_186, %c0_187, %c0_188], %201 {strides = array<i32>} : memref<1x16x1x32xf32, #tpu.memory_space<vmem>>, vector<1x1x1x32xf32>,
    %c15_189 = arith.constant 15 : index
    %c0_190 = arith.constant 0 : index
    %c0_191 = arith.constant 0 : index
    %202 = vector.load %arg4[%c15_189, %c0_190, %c0_191] : memref<16x32x64xf32, #tpu.memory_space<vmem>>, vector<1x32x64xf32>
    %203 = vector.shape_cast %202 : vector<1x32x64xf32> to vector<32x64xf32>
    %cst_192 = arith.constant dense<0.000000e+00> : vector<1x64xf32>
    %204 = tpu.matmul %198, %203, %cst_192 {dimension_numbers = #tpu.dot_dimension_numbers<[1], [0], [0], [1], [0, 0, 1, 1], [], []>} : vector<1x32xf32>, vector<32x64xf32>, vector<1x64xf32> -> vector<1x64xf32>
    %205 = arith.addf %193, %204 : vector<1x64xf32>
    %cst_193 = arith.constant 0.000000e+00 : f32
    %206 = vector.broadcast %cst_193 : f32 to vector<1x64xf32>
    %207 = arith.maximumf %205, %206 : vector<1x64xf32>
    %c0_194 = arith.constant 0 : index
    %c0_195 = arith.constant 0 : index
    %208 = vector.load %arg6[%c0_194, %c0_195] : memref<64x10xf32, #tpu.memory_space<vmem>>, vector<64x10xf32>
    %cst_196 = arith.constant dense<0.000000e+00> : vector<1x10xf32>
    %209 = tpu.matmul %207, %208, %cst_196 {dimension_numbers = #tpu.dot_dimension_numbers<[1], [0], [0], [1], [0, 0, 1, 1], [], []>} : vector<1x64xf32>, vector<64x10xf32>, vector<1x10xf32> -> vector<1x10xf32>
    %c0_197 = arith.constant 0 : index
    %c0_198 = arith.constant 0 : index
    %210 = vector.load %arg7[%c0_197, %c0_198] : memref<1x10xf32, #tpu.memory_space<vmem>>, vector<1x10xf32>
    %211 = arith.addf %209, %210 : vector<1x10xf32>
    %cst_199 = arith.constant dense<0xFF800000> : vector<1xf32>
    %212 = vector.multi_reduction <maximumf>, %211, %cst_199 [1] : vector<1x10xf32> to vector<1xf32>
    %213 = vector.shape_cast %212 : vector<1xf32> to vector<1x1xf32>
    %214 = vector.broadcast %213 : vector<1x1xf32> to vector<1x10xf32>
    %215 = arith.subf %211, %214 : vector<1x10xf32>
    %216 = math.exp %215 : vector<1x10xf32>
    %cst_200 = arith.constant dense<0.000000e+00> : vector<1xf32>
    %217 = vector.multi_reduction <add>, %216, %cst_200 [1] : vector<1x10xf32> to vector<1xf32>
    %218 = vector.shape_cast %217 : vector<1xf32> to vector<1x1xf32>
    %219 = tpu.reciprocal %218 {approx = true} : vector<1x1xf32> -> vector<1x1xf32>
    %220 = vector.broadcast %219 : vector<1x1xf32> to vector<1x10xf32>
    %221 = arith.mulf %216, %220 : vector<1x10xf32>
    %c0_201 = arith.constant 0 : index
    %c0_202 = arith.constant 0 : index
    %c0_203 = arith.constant 0 : index
    %222 = vector.load %arg8[%c0_201, %c0_202, %c0_203] : memref<1x1x10xf32, #tpu.memory_space<vmem>>, vector<1x1x10xf32>
    %223 = vector.shape_cast %222 : vector<1x1x10xf32> to vector<1x10xf32>
    %224 = vector.shape_cast %221 : vector<1x10xf32> to vector<1x1x10xf32>
    tpu.vector_store %arg8[%c0_201, %c0_202, %c0_203], %224 {strides = array<i32>} : memref<1x1x10xf32, #tpu.memory_space<vmem>>, vector<1x1x10xf32>,
    return
  }
  func.func @transform_0(%arg0: i32) -> (i32, i32) {
    %c0_i32 = arith.constant 0 : i32
    %c0_i32_0 = arith.constant 0 : i32
    return %arg0, %c0_i32 : i32, i32
  }
  func.func @transform_1(%arg0: i32) -> (i32, i32) {
    %c0_i32 = arith.constant 0 : i32
    %c0_i32_0 = arith.constant 0 : i32
    %c0_i32_1 = arith.constant 0 : i32
    return %c0_i32, %c0_i32_0 : i32, i32
  }
  func.func @transform_2(%arg0: i32) -> (i32, i32) {
    %c0_i32 = arith.constant 0 : i32
    %c0_i32_0 = arith.constant 0 : i32
    %c0_i32_1 = arith.constant 0 : i32
    return %c0_i32, %c0_i32_0 : i32, i32
  }
  func.func @transform_3(%arg0: i32) -> (i32, i32, i32) {
    %c0_i32 = arith.constant 0 : i32
    %c0_i32_0 = arith.constant 0 : i32
    %c0_i32_1 = arith.constant 0 : i32
    %c0_i32_2 = arith.constant 0 : i32
    return %c0_i32, %c0_i32_0, %c0_i32_1 : i32, i32, i32
  }
  func.func @transform_4(%arg0: i32) -> (i32, i32) {
    %c0_i32 = arith.constant 0 : i32
    %c0_i32_0 = arith.constant 0 : i32
    %c0_i32_1 = arith.constant 0 : i32
    return %c0_i32, %c0_i32_0 : i32, i32
  }
  func.func @transform_5(%arg0: i32) -> (i32, i32) {
    %c0_i32 = arith.constant 0 : i32
    %c0_i32_0 = arith.constant 0 : i32
    %c0_i32_1 = arith.constant 0 : i32
    return %c0_i32, %c0_i32_0 : i32, i32
  }
  func.func @transform_6(%arg0: i32) -> (i32, i32) {
    %c0_i32 = arith.constant 0 : i32
    %c0_i32_0 = arith.constant 0 : i32
    %c0_i32_1 = arith.constant 0 : i32
    return %c0_i32, %c0_i32_0 : i32, i32
  }
  func.func @transform_7(%arg0: i32) -> (i32, i32, i32) {
    %c0_i32 = arith.constant 0 : i32
    %c0_i32_0 = arith.constant 0 : i32
    %c0_i32_1 = arith.constant 0 : i32
    return %arg0, %c0_i32, %c0_i32_0 : i32, i32, i32
  }
  func.func @transform_8(%arg0: i32) -> (i32, i32, i32, i32) {
    %c0_i32 = arith.constant 0 : i32
    %c0_i32_0 = arith.constant 0 : i32
    %c0_i32_1 = arith.constant 0 : i32
    %c0_i32_2 = arith.constant 0 : i32
    return %arg0, %c0_i32, %c0_i32_0, %c0_i32_1 : i32, i32, i32, i32
  }
}

</mosaic_0001>

<llo_original>
// kernel: cnn_mnist_forward.2
$region0: #{cnn_mnist_forward.2}
  #allocation0 [shape = 'u32[]', space=smem, size = 0x4, offset = 0x4, fixed_abs, tag = 'smem constant byte address 0x4 - core index']
  #allocation1 [shape = 'u32[144,128]{1,0:T(1,128)}', space=vmem, size = 0x12000, scoped, tag = 'internal scratch']
  #allocation2 [shape = 'f32[576,16]{1,0:T(8,128)}', space=vmem, size = 0x48000, scoped, tag = 'scratch operand']
  #allocation3 [shape = 'f32[288,16]{1,0:T(8,128)}', space=vmem, size = 0x24000, scoped, tag = 'scratch operand']
  %s0 = inlined_call_operand.vmem [shape: bf16[1152,25], index: 0, kind: input, shape index: {}]
  %s1 = inlined_call_operand.vmem [shape: bf16[25,16], index: 1, kind: input, shape index: {}]
  %s2 = inlined_call_operand.vmem [shape: f32[1,16], index: 2, kind: input, shape index: {}]
  %s3 = inlined_call_operand.vmem [shape: f32[2,12,12,16], index: 3, kind: output, shape index: {}]
  %s4 = sld [smem:[#allocation0]]
  $region45: #{cnn_mnist_forward.2} parent=0
    _
  %s6 = ssub.s32 1, %s4
  %s7 = scalar_select 0, %s6, %s4
  loop: start=0, step=1, limit=4
  $region2: #{cnn_mnist_forward.2} parent=0 // loop_pre_header
    _
  $region3: #{cnn_mnist_forward.2} parent=0 // loop_header
    %s9 = sphi 0, %s13
    %p10 = scmp.ge.s32.totalorder %s9, 4
    %s19 = sphi 0, %s21
    %s22 = sphi 0, %s19
    %s23 = sphi 0, %s22
    %s39 = sphi 0, %s23
    %s43 = sphi 0, %s43
    %s45 = sphi 0, %s43
    %s46 = sphi 0, %s45
    %s60 = sphi 0, %s46
    %s64 = sphi 0, %s64
    %s66 = sphi 0, %s64
    %s67 = sphi 0, %s66
    %s81 = sphi 0, %s67
    %s87 = sphi 0, %s89
    %s90 = sphi 0, %s87
    %s91 = sphi 0, %s90
    %s107 = sphi 0, %s91
  $region4: #{cnn_mnist_forward.2} parent=0 // loop_header_branch
    %12 = sbr.rel (%p10) target = $region8
  $region5: #{cnn_mnist_forward.2} parent=0 // loop_body
    %s14 = ssub.s32 %s9, 1
    %s15 = ssub.s32 %s9, 2
    %s16 = sadd.s32 %s9, 1
    %s17 = ssub.s32 %s9, %s16
    %p18 = scmp.eq.s32.totalorder %s17, 0
    %s20 = sadd.s32 %s19, 1
    %s21 = scalar_select %p18, %s19, %s20
    %p24 = pneg %p18
    %p25 = scmp.eq.s32.totalorder %s9, 1
    %p26 = por %p24, %p25
    %p27 = scmp.ne.s32.totalorder %s19, %s22
    %p28 = scmp.eq.s32.totalorder %s9, 0
    %p29 = por %p27, %p28
    %p30 = scmp.ne.s32.totalorder %s19, %s22
    %p31 = scmp.eq.s32.totalorder %s14, 1
    %p32 = por %p30, %p31
    %p33 = scmp.ne.s32.totalorder %s22, %s23
    %p34 = scmp.eq.s32.totalorder %s14, 0
    %p35 = por %p33, %p34
    %p36 = scmp.ne.s32.totalorder %s22, %s23
    %p37 = scmp.eq.s32.totalorder %s15, 1
    %p38 = por %p36, %p37
    %p40 = scmp.ne.s32.totalorder %s23, %s39
    %p41 = scmp.eq.s32.totalorder %s15, 0
    %p42 = por %p40, %p41
    %s44 = sadd.s32 %s43, 1
    %p47 = scmp.eq.s32.totalorder %s9, 1
    %p48 = scmp.ne.s32.totalorder %s43, %s45
    %p49 = scmp.eq.s32.totalorder %s9, 0
    %p50 = por %p48, %p49
    %p51 = scmp.ne.s32.totalorder %s43, %s45
    %p52 = scmp.eq.s32.totalorder %s14, 1
    %p53 = por %p51, %p52
    %p54 = scmp.ne.s32.totalorder %s45, %s46
    %p55 = scmp.eq.s32.totalorder %s14, 0
    %p56 = por %p54, %p55
    %p57 = scmp.ne.s32.totalorder %s45, %s46
    %p58 = scmp.eq.s32.totalorder %s15, 1
    %p59 = por %p57, %p58
    %p61 = scmp.ne.s32.totalorder %s46, %s60
    %p62 = scmp.eq.s32.totalorder %s15, 0
    %p63 = por %p61, %p62
    %s65 = sadd.s32 %s64, 1
    %p68 = scmp.eq.s32.totalorder %s9, 1
    %p69 = scmp.ne.s32.totalorder %s64, %s66
    %p70 = scmp.eq.s32.totalorder %s9, 0
    %p71 = por %p69, %p70
    %p72 = scmp.ne.s32.totalorder %s64, %s66
    %p73 = scmp.eq.s32.totalorder %s14, 1
    %p74 = por %p72, %p73
    %p75 = scmp.ne.s32.totalorder %s66, %s67
    %p76 = scmp.eq.s32.totalorder %s14, 0
    %p77 = por %p75, %p76
    %p78 = scmp.ne.s32.totalorder %s66, %s67
    %p79 = scmp.eq.s32.totalorder %s15, 1
    %p80 = por %p78, %p79
    %p82 = scmp.ne.s32.totalorder %s67, %s81
    %p83 = scmp.eq.s32.totalorder %s15, 0
    %p84 = por %p82, %p83
    %s85 = ssub.s32 %s9, %s16
    %p86 = scmp.eq.s32.totalorder %s85, 0
    %s88 = sadd.s32 %s87, 1
    %s89 = scalar_select %p86, %s87, %s88
    %p92 = pneg %p86
    %p93 = scmp.eq.s32.totalorder %s9, 1
    %p94 = por %p92, %p93
    %p95 = scmp.ne.s32.totalorder %s87, %s90
    %p96 = scmp.eq.s32.totalorder %s9, 0
    %p97 = por %p95, %p96
    %p98 = scmp.ne.s32.totalorder %s87, %s90
    %p99 = scmp.eq.s32.totalorder %s14, 1
    %p100 = por %p98, %p99
    %p101 = scmp.ne.s32.totalorder %s90, %s91
    %p102 = scmp.eq.s32.totalorder %s14, 0
    %p103 = por %p101, %p102
    %p104 = scmp.ne.s32.totalorder %s90, %s91
    %p105 = scmp.eq.s32.totalorder %s15, 1
    %p106 = por %p104, %p105
    %p108 = scmp.ne.s32.totalorder %s91, %s107
    %p109 = scmp.eq.s32.totalorder %s15, 0
    %p110 = por %p108, %p109
    %p111 = scmp.le.s32.totalorder 1, %s9
    %p112 = scmp.lt.s32.totalorder %s9, 3
    %p113 = pnand %p111, %p112
    %p114 = pneg %p113
    // Predicated region
    $region9: #{cnn_mnist_forward.2} parent=5 // pred_check
      _
    $region10: #{cnn_mnist_forward.2} parent=5 // pred_check_branch
      %116 = sbr.rel (%p113) target = $region12
    $region11: #{cnn_mnist_forward.2} parent=5 // pred_region
      %s117 = ssub.s32 %s9, 1
      // Predicated region
      $region13: #{cnn_mnist_forward.2} parent=11 // pred_check
        %p118 = pneg %p56
      $region14: #{cnn_mnist_forward.2} parent=11 // pred_check_branch
        %120 = sbr.rel (%p118) target = $region16
      $region15: #{cnn_mnist_forward.2} parent=11 // pred_region
        _
      $region16: #{cnn_mnist_forward.2} parent=11 // pred_fallthru
        _
      // Predicated region
      $region17: #{cnn_mnist_forward.2} parent=11 // pred_check
        %p121 = pneg %p77
      $region18: #{cnn_mnist_forward.2} parent=11 // pred_check_branch
        %123 = sbr.rel (%p121) target = $region20
      $region19: #{cnn_mnist_forward.2} parent=11 // pred_region
        _
      $region20: #{cnn_mnist_forward.2} parent=11 // pred_fallthru
        _
    $region12: #{cnn_mnist_forward.2} parent=5 // pred_fallthru
      _
    %p124 = scmp.lt.s32.totalorder %s9, 2
    // Predicated region
    $region21: #{cnn_mnist_forward.2} parent=5 // pred_check
      %p125 = pneg %p124
    $region22: #{cnn_mnist_forward.2} parent=5 // pred_check_branch
      %127 = sbr.rel (%p125) target = $region24
    $region23: #{cnn_mnist_forward.2} parent=5 // pred_region
      // Predicated region
      $region25: #{cnn_mnist_forward.2} parent=23 // pred_check
        %p128 = pneg %p29
      $region26: #{cnn_mnist_forward.2} parent=23 // pred_check_branch
        %130 = sbr.rel (%p128) target = $region28
      $region27: #{cnn_mnist_forward.2} parent=23 // pred_region
        %s131 = smul.u32 72, %s9
        %p132 = scmp.lt.s32.totalorder %s131, 143
        %s133 = scalar_select %p132, %s131, 143
        %s134 = smul.addr %s133, 4
        %s135 = scalar_lea.vmem %s0, %s134
        %s136 = smul.u32 72, %s9
      $region28: #{cnn_mnist_forward.2} parent=23 // pred_fallthru
        _
    $region24: #{cnn_mnist_forward.2} parent=5 // pred_fallthru
      _
    %p137 = scmp.le.s32.totalorder 1, %s9
    %p138 = scmp.lt.s32.totalorder %s9, 3
    %p139 = pnand %p137, %p138
    %p140 = pneg %p139
    // Predicated region
    $region29: #{cnn_mnist_forward.2} parent=5 // pred_check
      _
    $region30: #{cnn_mnist_forward.2} parent=5 // pred_check_branch
      %142 = sbr.rel (%p139) target = $region32
    $region31: #{cnn_mnist_forward.2} parent=5 // pred_region
      %s143 = ssub.s32 %s9, 1
      %s144 = smul.u32 72, %s14
      %p145 = scmp.lt.s32.totalorder %s144, 143
      %s146 = scalar_select %p145, %s144, 143
      %s147 = smul.addr %s146, 4
      %s148 = scalar_lea.vmem %s0, %s147
      %p149 = pneg %p35
      %p150 = pneg %p32
      %p151 = pneg %p56
      %p152 = pneg %p53
      %p153 = pneg %p77
      %p154 = pneg %p74
      %p155 = pneg %p103
      %p156 = pneg %p100
      %p157 = scmp.lt.s32.totalorder %s14, 1
      %s158 = scalar_select %p157, %s14, 1
      %s159 = smul.addr %s158, 24
      %s160 = smul.addr %s159, 8
      %s161 = scalar_lea.vmem %s3, %s160
      %s162 = smul.u32 72, %s14
      %p163 = scmp.lt.s32.totalorder %s162, 143
      %s164 = scalar_select %p163, %s162, 143
      %s165 = smul.addr %s164, 4
      %s166 = scalar_lea.vmem %s0, %s165
      %s167 = smul.u32 72, %s14
      %p168 = scmp.lt.s32.totalorder %s14, 1
      %s169 = scalar_select %p168, %s14, 1
      %s170 = smul.addr %s169, 24
      %s171 = smul.addr %s170, 8
      %s172 = scalar_lea.vmem %s3, %s171
      %v174 = vld [vmem:[%s166] sm:$0xf]
      %v175 = vld [vmem:[%s166 + $0x4] sm:$0xf]
      %v176 = vld [vmem:[%s166 + $0x8] sm:$0xf]
      %v177 = vld [vmem:[%s166 + $0xc] sm:$0xf]
      %v178 = vld [vmem:[%s166 + $0x10] sm:$0xf]
      %v179 = vld [vmem:[%s166 + $0x14] sm:$0xf]
      %v180 = vld [vmem:[%s166 + $0x18] sm:$0xf]
      %v181 = vld [vmem:[%s166 + $0x1c] sm:$0xf]
      %v182 = vld [vmem:[%s166 + $0x20] sm:$0xf]
      %v183 = vld [vmem:[%s166 + $0x24] sm:$0xf]
      %v184 = vld [vmem:[%s166 + $0x28] sm:$0xf]
      %v185 = vld [vmem:[%s166 + $0x2c] sm:$0xf]
      %v186 = vld [vmem:[%s166 + $0x30] sm:$0xf]
      %v187 = vld [vmem:[%s166 + $0x34] sm:$0xf]
      %v188 = vld [vmem:[%s166 + $0x38] sm:$0xf]
      %v189 = vld [vmem:[%s166 + $0x3c] sm:$0xf]
      %v190 = vld [vmem:[%s166 + $0x40] sm:$0xf]
      %v191 = vld [vmem:[%s166 + $0x44] sm:$0xf]
      %v192 = vld [vmem:[%s166 + $0x48] sm:$0xf]
      %v193 = vld [vmem:[%s166 + $0x4c] sm:$0xf]
      %v194 = vld [vmem:[%s166 + $0x50] sm:$0xf]
      %v195 = vld [vmem:[%s166 + $0x54] sm:$0xf]
      %v196 = vld [vmem:[%s166 + $0x58] sm:$0xf]
      %v197 = vld [vmem:[%s166 + $0x5c] sm:$0xf]
      %v198 = vld [vmem:[%s166 + $0x60] sm:$0xf]
      %v199 = vld [vmem:[%s166 + $0x64] sm:$0xf]
      %v200 = vld [vmem:[%s166 + $0x68] sm:$0xf]
      %v201 = vld [vmem:[%s166 + $0x6c] sm:$0xf]
      %v202 = vld [vmem:[%s166 + $0x70] sm:$0xf]
      %v203 = vld [vmem:[%s166 + $0x74] sm:$0xf]
      %v204 = vld [vmem:[%s166 + $0x78] sm:$0xf]
      %v205 = vld [vmem:[%s166 + $0x7c] sm:$0xf]
      %v206 = vld [vmem:[%s166 + $0x80] sm:$0xf]
      %v207 = vld [vmem:[%s166 + $0x84] sm:$0xf]
      %v208 = vld [vmem:[%s166 + $0x88] sm:$0xf]
      %v209 = vld [vmem:[%s166 + $0x8c] sm:$0xf]
      %v210 = vld [vmem:[%s166 + $0x90] sm:$0xf]
      %v211 = vld [vmem:[%s166 + $0x94] sm:$0xf]
      %v212 = vld [vmem:[%s166 + $0x98] sm:$0xf]
      %v213 = vld [vmem:[%s166 + $0x9c] sm:$0xf]
      %v214 = vld [vmem:[%s166 + $0xa0] sm:$0xf]
      %v215 = vld [vmem:[%s166 + $0xa4] sm:$0xf]
      %v216 = vld [vmem:[%s166 + $0xa8] sm:$0xf]
      %v217 = vld [vmem:[%s166 + $0xac] sm:$0xf]
      %v218 = vld [vmem:[%s166 + $0xb0] sm:$0xf]
      %v219 = vld [vmem:[%s166 + $0xb4] sm:$0xf]
      %v220 = vld [vmem:[%s166 + $0xb8] sm:$0xf]
      %v221 = vld [vmem:[%s166 + $0xbc] sm:$0xf]
      %v222 = vld [vmem:[%s166 + $0xc0] sm:$0xf]
      %v223 = vld [vmem:[%s166 + $0xc4] sm:$0xf]
      %v224 = vld [vmem:[%s166 + $0xc8] sm:$0xf]
      %v225 = vld [vmem:[%s166 + $0xcc] sm:$0xf]
      %v226 = vld [vmem:[%s166 + $0xd0] sm:$0xf]
      %v227 = vld [vmem:[%s166 + $0xd4] sm:$0xf]
      %v228 = vld [vmem:[%s166 + $0xd8] sm:$0xf]
      %v229 = vld [vmem:[%s166 + $0xdc] sm:$0xf]
      %v230 = vld [vmem:[%s166 + $0xe0] sm:$0xf]
      %v231 = vld [vmem:[%s166 + $0xe4] sm:$0xf]
      %v232 = vld [vmem:[%s166 + $0xe8] sm:$0xf]
      %v233 = vld [vmem:[%s166 + $0xec] sm:$0xf]
      %v234 = vld [vmem:[%s166 + $0xf0] sm:$0xf]
      %v235 = vld [vmem:[%s166 + $0xf4] sm:$0xf]
      %v236 = vld [vmem:[%s166 + $0xf8] sm:$0xf]
      %v237 = vld [vmem:[%s166 + $0xfc] sm:$0xf]
      %v238 = vld [vmem:[%s166 + $0x100] sm:$0xf]
      %v239 = vld [vmem:[%s166 + $0x104] sm:$0xf]
      %v240 = vld [vmem:[%s166 + $0x108] sm:$0xf]
      %v241 = vld [vmem:[%s166 + $0x10c] sm:$0xf]
      %v242 = vld [vmem:[%s166 + $0x110] sm:$0xf]
      %v243 = vld [vmem:[%s166 + $0x114] sm:$0xf]
      %v244 = vld [vmem:[%s166 + $0x118] sm:$0xf]
      %v245 = vld [vmem:[%s166 + $0x11c] sm:$0xf]
      %v246 = vld [vmem:[%s1] sm:$0xf]
      %v247 = vld [vmem:[%s1 + $0x4] sm:$0xf]
      %v248 = vld [vmem:[%s1 + $0x8] sm:$0xf]
      %v249 = vld [vmem:[%s1 + $0xc] sm:$0x1]
      %v250 = vld [vmem:[%s2] sm:$0x1]
      %v252 = vlaneseq
      %v253 = vshrl.u32 %v252, 7
      %v254 = vsub.s32 0, %v253
      %v255 = vrot.slane %v250, %v254
      %v329 = vunpack.c.l.b16 %v174
      %v330 = vunpack.c.l.b16 %v175
      %v331 = vunpack.c.l.b16 %v176
      %v332 = vunpack.c.l.b16 %v177
      %v333 = vunpack.c.l.b16 %v178
      %v334 = vunpack.c.l.b16 %v179
      %v335 = vunpack.c.l.b16 %v180
      %v336 = vunpack.c.l.b16 %v181
      %v337 = vunpack.c.l.b16 %v182
      %v338 = vunpack.c.l.b16 %v183
      %v339 = vunpack.c.l.b16 %v184
      %v340 = vunpack.c.l.b16 %v185
      %v341 = vunpack.c.l.b16 %v186
      %v342 = vunpack.c.l.b16 %v187
      %v343 = vunpack.c.l.b16 %v188
      %v344 = vunpack.c.l.b16 %v189
      %v345 = vunpack.c.l.b16 %v190
      %v346 = vunpack.c.l.b16 %v191
      %v347 = vunpack.c.l.b16 %v192
      %v348 = vunpack.c.l.b16 %v193
      %v349 = vunpack.c.l.b16 %v194
      %v350 = vunpack.c.l.b16 %v195
      %v351 = vunpack.c.l.b16 %v196
      %v352 = vunpack.c.l.b16 %v197
      %v353 = vunpack.c.l.b16 %v198
      %v354 = vunpack.c.l.b16 %v199
      %v355 = vunpack.c.l.b16 %v200
      %v356 = vunpack.c.l.b16 %v201
      %v357 = vunpack.c.l.b16 %v202
      %v358 = vunpack.c.l.b16 %v203
      %v359 = vunpack.c.l.b16 %v204
      %v360 = vunpack.c.l.b16 %v205
      %v361 = vunpack.c.l.b16 %v206
      %v362 = vunpack.c.l.b16 %v207
      %v363 = vunpack.c.l.b16 %v208
      %v364 = vunpack.c.l.b16 %v209
      %v365 = vunpack.c.l.b16 %v210
      %v366 = vunpack.c.l.b16 %v211
      %v367 = vunpack.c.l.b16 %v212
      %v368 = vunpack.c.l.b16 %v213
      %v369 = vunpack.c.l.b16 %v214
      %v370 = vunpack.c.l.b16 %v215
      %v371 = vunpack.c.l.b16 %v216
      %v372 = vunpack.c.l.b16 %v217
      %v373 = vunpack.c.l.b16 %v218
      %v374 = vunpack.c.l.b16 %v219
      %v375 = vunpack.c.l.b16 %v220
      %v376 = vunpack.c.l.b16 %v221
      %v377 = vunpack.c.l.b16 %v222
      %v378 = vunpack.c.l.b16 %v223
      %v379 = vunpack.c.l.b16 %v224
      %v380 = vunpack.c.l.b16 %v225
      %v381 = vunpack.c.l.b16 %v226
      %v382 = vunpack.c.l.b16 %v227
      %v383 = vunpack.c.l.b16 %v228
      %v384 = vunpack.c.l.b16 %v229
      %v385 = vunpack.c.l.b16 %v230
      %v386 = vunpack.c.l.b16 %v231
      %v387 = vunpack.c.l.b16 %v232
      %v388 = vunpack.c.l.b16 %v233
      %v389 = vunpack.c.l.b16 %v234
      %v390 = vunpack.c.l.b16 %v235
      %v391 = vunpack.c.l.b16 %v236
      %v392 = vunpack.c.l.b16 %v237
      %v393 = vunpack.c.l.b16 %v238
      %v394 = vunpack.c.l.b16 %v239
      %v395 = vunpack.c.l.b16 %v240
      %v396 = vunpack.c.l.b16 %v241
      %v397 = vunpack.c.l.b16 %v242
      %v398 = vunpack.c.l.b16 %v243
      %v399 = vunpack.c.l.b16 %v244
      %v400 = vunpack.c.l.b16 %v245
      %v401 = vpack.c.b16 %v330, %v329
      %v402 = vpack.c.b16 %v332, %v331
      %v403 = vpack.c.b16 %v334, %v333
      %v404 = vpack.c.b16 %v336, %v335
      %v405 = vpack.c.b16 %v338, %v337
      %v406 = vpack.c.b16 %v340, %v339
      %v407 = vpack.c.b16 %v342, %v341
      %v408 = vpack.c.b16 %v344, %v343
      %v409 = vpack.c.b16 %v346, %v345
      %v410 = vpack.c.b16 %v348, %v347
      %v411 = vpack.c.b16 %v350, %v349
      %v412 = vpack.c.b16 %v352, %v351
      %v413 = vpack.c.b16 %v354, %v353
      %v414 = vpack.c.b16 %v356, %v355
      %v415 = vpack.c.b16 %v358, %v357
      %v416 = vpack.c.b16 %v360, %v359
      %v417 = vpack.c.b16 %v362, %v361
      %v418 = vpack.c.b16 %v364, %v363
      %v419 = vpack.c.b16 %v366, %v365
      %v420 = vpack.c.b16 %v368, %v367
      %v421 = vpack.c.b16 %v370, %v369
      %v422 = vpack.c.b16 %v372, %v371
      %v423 = vpack.c.b16 %v374, %v373
      %v424 = vpack.c.b16 %v376, %v375
      %v425 = vpack.c.b16 %v378, %v377
      %v426 = vpack.c.b16 %v380, %v379
      %v427 = vpack.c.b16 %v382, %v381
      %v428 = vpack.c.b16 %v384, %v383
      %v429 = vpack.c.b16 %v386, %v385
      %v430 = vpack.c.b16 %v388, %v387
      %v431 = vpack.c.b16 %v390, %v389
      %v432 = vpack.c.b16 %v392, %v391
      %v433 = vpack.c.b16 %v394, %v393
      %v434 = vpack.c.b16 %v396, %v395
      %v435 = vpack.c.b16 %v398, %v397
      %v436 = vpack.c.b16 %v400, %v399
      %v441 = vunpack.c.l.b16 %v246
      %v442 = vunpack.c.l.b16 %v247
      %v443 = vunpack.c.l.b16 %v248
      %v444 = vunpack.c.l.b16 %v249
      %v445 = vpack.c.b16 %v442, %v441
      %v446 = vpack.c.b16 %v444, %v443
      %vm448 = vcmask 203776
      %v450 = vsel %vm448, %v401, 0
      %v453 = vsel %vm448, %v402, 0
      %v456 = vsel %vm448, %v403, 0
      %v459 = vsel %vm448, %v404, 0
      %v462 = vsel %vm448, %v405, 0
      %v465 = vsel %vm448, %v406, 0
      %v468 = vsel %vm448, %v407, 0
      %v471 = vsel %vm448, %v408, 0
      %v474 = vsel %vm448, %v409, 0
      %v477 = vsel %vm448, %v410, 0
      %v480 = vsel %vm448, %v411, 0
      %v483 = vsel %vm448, %v412, 0
      %v486 = vsel %vm448, %v413, 0
      %v489 = vsel %vm448, %v414, 0
      %v492 = vsel %vm448, %v415, 0
      %v495 = vsel %vm448, %v416, 0
      %v498 = vsel %vm448, %v417, 0
      %v501 = vsel %vm448, %v418, 0
      %v504 = vsel %vm448, %v419, 0
      %v507 = vsel %vm448, %v420, 0
      %v510 = vsel %vm448, %v421, 0
      %v513 = vsel %vm448, %v422, 0
      %v516 = vsel %vm448, %v423, 0
      %v519 = vsel %vm448, %v424, 0
      %v522 = vsel %vm448, %v425, 0
      %v525 = vsel %vm448, %v426, 0
      %v528 = vsel %vm448, %v427, 0
      %v531 = vsel %vm448, %v428, 0
      %v534 = vsel %vm448, %v429, 0
      %v537 = vsel %vm448, %v430, 0
      %v540 = vsel %vm448, %v431, 0
      %v543 = vsel %vm448, %v432, 0
      %v546 = vsel %vm448, %v433, 0
      %v549 = vsel %vm448, %v434, 0
      %v552 = vsel %vm448, %v435, 0
      %v555 = vsel %vm448, %v436, 0
      %vm557 = vcmask 1043456
      %vm558 = vcmask 1044480
      %v559 = vsel %vm557, 4294967295, 65535
      %v560 = vsel %vm558, %v559, 0
      %v562 = vand.u32 %v446, %v560
      %564 = vmatprep.subr.bf16.mxu0 0
      %565 = vmatpush1.bf16.msra.mxu0 %v445
      %566 = vmatprep.subr.bf16.mxu0 0
      %567 = vmatpush1.bf16.msra.mxu0 %v562
      %568 = vmatprep.subr.bf16.mxu0 0
      %569 = vmatpush1.bf16.msra.mxu0 0
      %570 = vmatprep.subr.bf16.mxu0 0
      %571 = vmatpush1.bf16.msra.mxu0 0
      %572 = vmatprep.subr.bf16.mxu0 0
      %573 = vmatpush1.bf16.msra.mxu0 0
      %574 = vmatprep.subr.bf16.mxu0 0
      %575 = vmatpush1.bf16.msra.mxu0 0
      %576 = vmatprep.subr.bf16.mxu0 0
      %577 = vmatpush1.bf16.msra.mxu0 0
      %578 = vmatprep.subr.bf16.mxu0 0
      %579 = vmatpush1.bf16.msra.mxu0 0
      %580 = vmatprep.subr.bf16.mxu0 0
      %581 = vmatpush1.bf16.msra.mxu0 0
      %582 = vmatprep.subr.bf16.mxu0 0
      %583 = vmatpush1.bf16.msra.mxu0 0
      %584 = vmatprep.subr.bf16.mxu0 0
      %585 = vmatpush1.bf16.msra.mxu0 0
      %586 = vmatprep.subr.bf16.mxu0 0
      %587 = vmatpush1.bf16.msra.mxu0 0
      %588 = vmatprep.subr.bf16.mxu0 0
      %589 = vmatpush1.bf16.msra.mxu0 0
      %590 = vmatprep.subr.bf16.mxu0 0
      %591 = vmatpush1.bf16.msra.mxu0 0
      %592 = vmatprep.subr.bf16.mxu0 0
      %593 = vmatpush1.bf16.msra.mxu0 0
      %594 = vmatprep.subr.bf16.mxu0 0
      %595 = vmatpush1.bf16.msra.mxu0 0
      %596 = vmatprep.mubr.bf16.mxu0 0
      %597 = vmatmul.mubr.bf16.gmra.mrb[0].mxu0 %v450
      %v598 = vpop.f32.mrb[0].mxu0
      %v599 = vadd.f32 %v255, %v598
      %v600 = vpop.f32.mrb[0].mxu0
      %v601 = vpop.f32.mrb[0].mxu0
      %v602 = vadd.f32 %v255, %v601
      %v603 = vpop.f32.mrb[0].mxu0
      %604 = vmatprep.mubr.bf16.mxu0 0
      %605 = vmatmul.mubr.bf16.gmra.mrb[0].mxu0 %v453
      %v606 = vpop.f32.mrb[0].mxu0
      %v607 = vadd.f32 %v255, %v606
      %v608 = vpop.f32.mrb[0].mxu0
      %v609 = vpop.f32.mrb[0].mxu0
      %v610 = vadd.f32 %v255, %v609
      %v611 = vpop.f32.mrb[0].mxu0
      %612 = vmatprep.mubr.bf16.mxu0 0
      %613 = vmatmul.mubr.bf16.gmra.mrb[0].mxu0 %v456
      %v614 = vpop.f32.mrb[0].mxu0
      %v615 = vadd.f32 %v255, %v614
      %v616 = vpop.f32.mrb[0].mxu0
      %v617 = vpop.f32.mrb[0].mxu0
      %v618 = vadd.f32 %v255, %v617
      %v619 = vpop.f32.mrb[0].mxu0
      %620 = vmatprep.mubr.bf16.mxu0 0
      %621 = vmatmul.mubr.bf16.gmra.mrb[0].mxu0 %v459
      %v622 = vpop.f32.mrb[0].mxu0
      %v623 = vadd.f32 %v255, %v622
      %v624 = vpop.f32.mrb[0].mxu0
      %v625 = vpop.f32.mrb[0].mxu0
      %v626 = vadd.f32 %v255, %v625
      %v627 = vpop.f32.mrb[0].mxu0
      %628 = vmatprep.mubr.bf16.mxu0 0
      %629 = vmatmul.mubr.bf16.gmra.mrb[0].mxu0 %v462
      %v630 = vpop.f32.mrb[0].mxu0
      %v631 = vadd.f32 %v255, %v630
      %v632 = vpop.f32.mrb[0].mxu0
      %v633 = vpop.f32.mrb[0].mxu0
      %v634 = vadd.f32 %v255, %v633
      %v635 = vpop.f32.mrb[0].mxu0
      %636 = vmatprep.mubr.bf16.mxu0 0
      %637 = vmatmul.mubr.bf16.gmra.mrb[0].mxu0 %v465
      %v638 = vpop.f32.mrb[0].mxu0
      %v639 = vadd.f32 %v255, %v638
      %v640 = vpop.f32.mrb[0].mxu0
      %v641 = vpop.f32.mrb[0].mxu0
      %v642 = vadd.f32 %v255, %v641
      %v643 = vpop.f32.mrb[0].mxu0
      %644 = vmatprep.mubr.bf16.mxu0 0
      %645 = vmatmul.mubr.bf16.gmra.mrb[0].mxu0 %v468
      %v646 = vpop.f32.mrb[0].mxu0
      %v647 = vadd.f32 %v255, %v646
      %v648 = vpop.f32.mrb[0].mxu0
      %v649 = vpop.f32.mrb[0].mxu0
      %v650 = vadd.f32 %v255, %v649
      %v651 = vpop.f32.mrb[0].mxu0
      %652 = vmatprep.mubr.bf16.mxu0 0
      %653 = vmatmul.mubr.bf16.gmra.mrb[0].mxu0 %v471
      %v654 = vpop.f32.mrb[0].mxu0
      %v655 = vadd.f32 %v255, %v654
      %v656 = vpop.f32.mrb[0].mxu0
      %v657 = vpop.f32.mrb[0].mxu0
      %v658 = vadd.f32 %v255, %v657
      %v659 = vpop.f32.mrb[0].mxu0
      %660 = vmatprep.mubr.bf16.mxu0 0
      %661 = vmatmul.mubr.bf16.gmra.mrb[0].mxu0 %v474
      %v662 = vpop.f32.mrb[0].mxu0
      %v663 = vadd.f32 %v255, %v662
      %v664 = vpop.f32.mrb[0].mxu0
      %v665 = vpop.f32.mrb[0].mxu0
      %v666 = vadd.f32 %v255, %v665
      %v667 = vpop.f32.mrb[0].mxu0
      %668 = vmatprep.mubr.bf16.mxu0 0
      %669 = vmatmul.mubr.bf16.gmra.mrb[0].mxu0 %v477
      %v670 = vpop.f32.mrb[0].mxu0
      %v671 = vadd.f32 %v255, %v670
      %v672 = vpop.f32.mrb[0].mxu0
      %v673 = vpop.f32.mrb[0].mxu0
      %v674 = vadd.f32 %v255, %v673
      %v675 = vpop.f32.mrb[0].mxu0
      %676 = vmatprep.mubr.bf16.mxu0 0
      %677 = vmatmul.mubr.bf16.gmra.mrb[0].mxu0 %v480
      %v678 = vpop.f32.mrb[0].mxu0
      %v679 = vadd.f32 %v255, %v678
      %v680 = vpop.f32.mrb[0].mxu0
      %v681 = vpop.f32.mrb[0].mxu0
      %v682 = vadd.f32 %v255, %v681
      %v683 = vpop.f32.mrb[0].mxu0
      %684 = vmatprep.mubr.bf16.mxu0 0
      %685 = vmatmul.mubr.bf16.gmra.mrb[0].mxu0 %v483
      %v686 = vpop.f32.mrb[0].mxu0
      %v687 = vadd.f32 %v255, %v686
      %v688 = vpop.f32.mrb[0].mxu0
      %v689 = vpop.f32.mrb[0].mxu0
      %v690 = vadd.f32 %v255, %v689
      %v691 = vpop.f32.mrb[0].mxu0
      %692 = vmatprep.mubr.bf16.mxu0 0
      %693 = vmatmul.mubr.bf16.gmra.mrb[0].mxu0 %v486
      %v694 = vpop.f32.mrb[0].mxu0
      %v695 = vadd.f32 %v255, %v694
      %v696 = vpop.f32.mrb[0].mxu0
      %v697 = vpop.f32.mrb[0].mxu0
      %v698 = vadd.f32 %v255, %v697
      %v699 = vpop.f32.mrb[0].mxu0
      %700 = vmatprep.mubr.bf16.mxu0 0
      %701 = vmatmul.mubr.bf16.gmra.mrb[0].mxu0 %v489
      %v702 = vpop.f32.mrb[0].mxu0
      %v703 = vadd.f32 %v255, %v702
      %v704 = vpop.f32.mrb[0].mxu0
      %v705 = vpop.f32.mrb[0].mxu0
      %v706 = vadd.f32 %v255, %v705
      %v707 = vpop.f32.mrb[0].mxu0
      %708 = vmatprep.mubr.bf16.mxu0 0
      %709 = vmatmul.mubr.bf16.gmra.mrb[0].mxu0 %v492
      %v710 = vpop.f32.mrb[0].mxu0
      %v711 = vadd.f32 %v255, %v710
      %v712 = vpop.f32.mrb[0].mxu0
      %v713 = vpop.f32.mrb[0].mxu0
      %v714 = vadd.f32 %v255, %v713
      %v715 = vpop.f32.mrb[0].mxu0
      %716 = vmatprep.mubr.bf16.mxu0 0
      %717 = vmatmul.mubr.bf16.gmra.mrb[0].mxu0 %v495
      %v718 = vpop.f32.mrb[0].mxu0
      %v719 = vadd.f32 %v255, %v718
      %v720 = vpop.f32.mrb[0].mxu0
      %v721 = vpop.f32.mrb[0].mxu0
      %v722 = vadd.f32 %v255, %v721
      %v723 = vpop.f32.mrb[0].mxu0
      %724 = vmatprep.mubr.bf16.mxu0 0
      %725 = vmatmul.mubr.bf16.gmra.mrb[0].mxu0 %v498
      %v726 = vpop.f32.mrb[0].mxu0
      %v727 = vadd.f32 %v255, %v726
      %v728 = vpop.f32.mrb[0].mxu0
      %v729 = vpop.f32.mrb[0].mxu0
      %v730 = vadd.f32 %v255, %v729
      %v731 = vpop.f32.mrb[0].mxu0
      %732 = vmatprep.mubr.bf16.mxu0 0
      %733 = vmatmul.mubr.bf16.gmra.mrb[0].mxu0 %v501
      %v734 = vpop.f32.mrb[0].mxu0
      %v735 = vadd.f32 %v255, %v734
      %v736 = vpop.f32.mrb[0].mxu0
      %v737 = vpop.f32.mrb[0].mxu0
      %v738 = vadd.f32 %v255, %v737
      %v739 = vpop.f32.mrb[0].mxu0
      %740 = vmatprep.mubr.bf16.mxu0 0
      %741 = vmatmul.mubr.bf16.gmra.mrb[0].mxu0 %v504
      %v742 = vpop.f32.mrb[0].mxu0
      %v743 = vadd.f32 %v255, %v742
      %v744 = vpop.f32.mrb[0].mxu0
      %v745 = vpop.f32.mrb[0].mxu0
      %v746 = vadd.f32 %v255, %v745
      %v747 = vpop.f32.mrb[0].mxu0
      %748 = vmatprep.mubr.bf16.mxu0 0
      %749 = vmatmul.mubr.bf16.gmra.mrb[0].mxu0 %v507
      %v750 = vpop.f32.mrb[0].mxu0
      %v751 = vadd.f32 %v255, %v750
      %v752 = vpop.f32.mrb[0].mxu0
      %v753 = vpop.f32.mrb[0].mxu0
      %v754 = vadd.f32 %v255, %v753
      %v755 = vpop.f32.mrb[0].mxu0
      %756 = vmatprep.mubr.bf16.mxu0 0
      %757 = vmatmul.mubr.bf16.gmra.mrb[0].mxu0 %v510
      %v758 = vpop.f32.mrb[0].mxu0
      %v759 = vadd.f32 %v255, %v758
      %v760 = vpop.f32.mrb[0].mxu0
      %v761 = vpop.f32.mrb[0].mxu0
      %v762 = vadd.f32 %v255, %v761
      %v763 = vpop.f32.mrb[0].mxu0
      %764 = vmatprep.mubr.bf16.mxu0 0
      %765 = vmatmul.mubr.bf16.gmra.mrb[0].mxu0 %v513
      %v766 = vpop.f32.mrb[0].mxu0
      %v767 = vadd.f32 %v255, %v766
      %v768 = vpop.f32.mrb[0].mxu0
      %v769 = vpop.f32.mrb[0].mxu0
      %v770 = vadd.f32 %v255, %v769
      %v771 = vpop.f32.mrb[0].mxu0
      %772 = vmatprep.mubr.bf16.mxu0 0
      %773 = vmatmul.mubr.bf16.gmra.mrb[0].mxu0 %v516
      %v774 = vpop.f32.mrb[0].mxu0
      %v775 = vadd.f32 %v255, %v774
      %v776 = vpop.f32.mrb[0].mxu0
      %v777 = vpop.f32.mrb[0].mxu0
      %v778 = vadd.f32 %v255, %v777
      %v779 = vpop.f32.mrb[0].mxu0
      %780 = vmatprep.mubr.bf16.mxu0 0
      %781 = vmatmul.mubr.bf16.gmra.mrb[0].mxu0 %v519
      %v782 = vpop.f32.mrb[0].mxu0
      %v783 = vadd.f32 %v255, %v782
      %v784 = vpop.f32.mrb[0].mxu0
      %v785 = vpop.f32.mrb[0].mxu0
      %v786 = vadd.f32 %v255, %v785
      %v787 = vpop.f32.mrb[0].mxu0
      %788 = vmatprep.mubr.bf16.mxu0 0
      %789 = vmatmul.mubr.bf16.gmra.mrb[0].mxu0 %v522
      %v790 = vpop.f32.mrb[0].mxu0
      %v791 = vadd.f32 %v255, %v790
      %v792 = vpop.f32.mrb[0].mxu0
      %v793 = vpop.f32.mrb[0].mxu0
      %v794 = vadd.f32 %v255, %v793
      %v795 = vpop.f32.mrb[0].mxu0
      %796 = vmatprep.mubr.bf16.mxu0 0
      %797 = vmatmul.mubr.bf16.gmra.mrb[0].mxu0 %v525
      %v798 = vpop.f32.mrb[0].mxu0
      %v799 = vadd.f32 %v255, %v798
      %v800 = vpop.f32.mrb[0].mxu0
      %v801 = vpop.f32.mrb[0].mxu0
      %v802 = vadd.f32 %v255, %v801
      %v803 = vpop.f32.mrb[0].mxu0
      %804 = vmatprep.mubr.bf16.mxu0 0
      %805 = vmatmul.mubr.bf16.gmra.mrb[0].mxu0 %v528
      %v806 = vpop.f32.mrb[0].mxu0
      %v807 = vadd.f32 %v255, %v806
      %v808 = vpop.f32.mrb[0].mxu0
      %v809 = vpop.f32.mrb[0].mxu0
      %v810 = vadd.f32 %v255, %v809
      %v811 = vpop.f32.mrb[0].mxu0
      %812 = vmatprep.mubr.bf16.mxu0 0
      %813 = vmatmul.mubr.bf16.gmra.mrb[0].mxu0 %v531
      %v814 = vpop.f32.mrb[0].mxu0
      %v815 = vadd.f32 %v255, %v814
      %v816 = vpop.f32.mrb[0].mxu0
      %v817 = vpop.f32.mrb[0].mxu0
      %v818 = vadd.f32 %v255, %v817
      %v819 = vpop.f32.mrb[0].mxu0
      %820 = vmatprep.mubr.bf16.mxu0 0
      %821 = vmatmul.mubr.bf16.gmra.mrb[0].mxu0 %v534
      %v822 = vpop.f32.mrb[0].mxu0
      %v823 = vadd.f32 %v255, %v822
      %v824 = vpop.f32.mrb[0].mxu0
      %v825 = vpop.f32.mrb[0].mxu0
      %v826 = vadd.f32 %v255, %v825
      %v827 = vpop.f32.mrb[0].mxu0
      %828 = vmatprep.mubr.bf16.mxu0 0
      %829 = vmatmul.mubr.bf16.gmra.mrb[0].mxu0 %v537
      %v830 = vpop.f32.mrb[0].mxu0
      %v831 = vadd.f32 %v255, %v830
      %v832 = vpop.f32.mrb[0].mxu0
      %v833 = vpop.f32.mrb[0].mxu0
      %v834 = vadd.f32 %v255, %v833
      %v835 = vpop.f32.mrb[0].mxu0
      %836 = vmatprep.mubr.bf16.mxu0 0
      %837 = vmatmul.mubr.bf16.gmra.mrb[0].mxu0 %v540
      %v838 = vpop.f32.mrb[0].mxu0
      %v839 = vadd.f32 %v255, %v838
      %v840 = vpop.f32.mrb[0].mxu0
      %v841 = vpop.f32.mrb[0].mxu0
      %v842 = vadd.f32 %v255, %v841
      %v843 = vpop.f32.mrb[0].mxu0
      %844 = vmatprep.mubr.bf16.mxu0 0
      %845 = vmatmul.mubr.bf16.gmra.mrb[0].mxu0 %v543
      %v846 = vpop.f32.mrb[0].mxu0
      %v847 = vadd.f32 %v255, %v846
      %v848 = vpop.f32.mrb[0].mxu0
      %v849 = vpop.f32.mrb[0].mxu0
      %v850 = vadd.f32 %v255, %v849
      %v851 = vpop.f32.mrb[0].mxu0
      %852 = vmatprep.mubr.bf16.mxu0 0
      %853 = vmatmul.mubr.bf16.gmra.mrb[0].mxu0 %v546
      %v854 = vpop.f32.mrb[0].mxu0
      %v855 = vadd.f32 %v255, %v854
      %v856 = vpop.f32.mrb[0].mxu0
      %v857 = vpop.f32.mrb[0].mxu0
      %v858 = vadd.f32 %v255, %v857
      %v859 = vpop.f32.mrb[0].mxu0
      %860 = vmatprep.mubr.bf16.mxu0 0
      %861 = vmatmul.mubr.bf16.gmra.mrb[0].mxu0 %v549
      %v862 = vpop.f32.mrb[0].mxu0
      %v863 = vadd.f32 %v255, %v862
      %v864 = vpop.f32.mrb[0].mxu0
      %v865 = vpop.f32.mrb[0].mxu0
      %v866 = vadd.f32 %v255, %v865
      %v867 = vpop.f32.mrb[0].mxu0
      %868 = vmatprep.mubr.bf16.mxu0 0
      %869 = vmatmul.mubr.bf16.gmra.mrb[0].mxu0 %v552
      %v870 = vpop.f32.mrb[0].mxu0
      %v871 = vadd.f32 %v255, %v870
      %v872 = vpop.f32.mrb[0].mxu0
      %v873 = vpop.f32.mrb[0].mxu0
      %v874 = vadd.f32 %v255, %v873
      %v875 = vpop.f32.mrb[0].mxu0
      %876 = vmatprep.mubr.bf16.mxu0 0
      %877 = vmatmul.mubr.bf16.gmra.mrb[0].mxu0 %v555
      %v878 = vpop.f32.mrb[0].mxu0
      %v879 = vadd.f32 %v255, %v878
      %v880 = vpop.f32.mrb[0].mxu0
      %v881 = vpop.f32.mrb[0].mxu0
      %v882 = vadd.f32 %v255, %v881
      %v883 = vpop.f32.mrb[0].mxu0
      %884 = vdwg.mxu0
      %vm885 = vcmask 130048
      %886 = vst.msk [vmem:[#allocation2] sm:$0xff] %vm885, %v599
      %887 = vst.msk [vmem:[#allocation2 + $0x8] sm:$0xff] %vm885, %v602
      %888 = vst.msk [vmem:[#allocation2 + $0x10] sm:$0xff] %vm885, %v607
      %889 = vst.msk [vmem:[#allocation2 + $0x18] sm:$0xff] %vm885, %v610
      %890 = vst.msk [vmem:[#allocation2 + $0x20] sm:$0xff] %vm885, %v615
      %891 = vst.msk [vmem:[#allocation2 + $0x28] sm:$0xff] %vm885, %v618
      %892 = vst.msk [vmem:[#allocation2 + $0x30] sm:$0xff] %vm885, %v623
      %893 = vst.msk [vmem:[#allocation2 + $0x38] sm:$0xff] %vm885, %v626
      %894 = vst.msk [vmem:[#allocation2 + $0x40] sm:$0xff] %vm885, %v631
      %895 = vst.msk [vmem:[#allocation2 + $0x48] sm:$0xff] %vm885, %v634
      %896 = vst.msk [vmem:[#allocation2 + $0x50] sm:$0xff] %vm885, %v639
      %897 = vst.msk [vmem:[#allocation2 + $0x58] sm:$0xff] %vm885, %v642
      %898 = vst.msk [vmem:[#allocation2 + $0x60] sm:$0xff] %vm885, %v647
      %899 = vst.msk [vmem:[#allocation2 + $0x68] sm:$0xff] %vm885, %v650
      %900 = vst.msk [vmem:[#allocation2 + $0x70] sm:$0xff] %vm885, %v655
      %901 = vst.msk [vmem:[#allocation2 + $0x78] sm:$0xff] %vm885, %v658
      %902 = vst.msk [vmem:[#allocation2 + $0x80] sm:$0xff] %vm885, %v663
      %903 = vst.msk [vmem:[#allocation2 + $0x88] sm:$0xff] %vm885, %v666
      %904 = vst.msk [vmem:[#allocation2 + $0x90] sm:$0xff] %vm885, %v671
      %905 = vst.msk [vmem:[#allocation2 + $0x98] sm:$0xff] %vm885, %v674
      %906 = vst.msk [vmem:[#allocation2 + $0xa0] sm:$0xff] %vm885, %v679
      %907 = vst.msk [vmem:[#allocation2 + $0xa8] sm:$0xff] %vm885, %v682
      %908 = vst.msk [vmem:[#allocation2 + $0xb0] sm:$0xff] %vm885, %v687
      %909 = vst.msk [vmem:[#allocation2 + $0xb8] sm:$0xff] %vm885, %v690
      %910 = vst.msk [vmem:[#allocation2 + $0xc0] sm:$0xff] %vm885, %v695
      %911 = vst.msk [vmem:[#allocation2 + $0xc8] sm:$0xff] %vm885, %v698
      %912 = vst.msk [vmem:[#allocation2 + $0xd0] sm:$0xff] %vm885, %v703
      %913 = vst.msk [vmem:[#allocation2 + $0xd8] sm:$0xff] %vm885, %v706
      %914 = vst.msk [vmem:[#allocation2 + $0xe0] sm:$0xff] %vm885, %v711
      %915 = vst.msk [vmem:[#allocation2 + $0xe8] sm:$0xff] %vm885, %v714
      %916 = vst.msk [vmem:[#allocation2 + $0xf0] sm:$0xff] %vm885, %v719
      %917 = vst.msk [vmem:[#allocation2 + $0xf8] sm:$0xff] %vm885, %v722
      %918 = vst.msk [vmem:[#allocation2 + $0x100] sm:$0xff] %vm885, %v727
      %919 = vst.msk [vmem:[#allocation2 + $0x108] sm:$0xff] %vm885, %v730
      %920 = vst.msk [vmem:[#allocation2 + $0x110] sm:$0xff] %vm885, %v735
      %921 = vst.msk [vmem:[#allocation2 + $0x118] sm:$0xff] %vm885, %v738
      %922 = vst.msk [vmem:[#allocation2 + $0x120] sm:$0xff] %vm885, %v743
      %923 = vst.msk [vmem:[#allocation2 + $0x128] sm:$0xff] %vm885, %v746
      %924 = vst.msk [vmem:[#allocation2 + $0x130] sm:$0xff] %vm885, %v751
      %925 = vst.msk [vmem:[#allocation2 + $0x138] sm:$0xff] %vm885, %v754
      %926 = vst.msk [vmem:[#allocation2 + $0x140] sm:$0xff] %vm885, %v759
      %927 = vst.msk [vmem:[#allocation2 + $0x148] sm:$0xff] %vm885, %v762
      %928 = vst.msk [vmem:[#allocation2 + $0x150] sm:$0xff] %vm885, %v767
      %929 = vst.msk [vmem:[#allocation2 + $0x158] sm:$0xff] %vm885, %v770
      %930 = vst.msk [vmem:[#allocation2 + $0x160] sm:$0xff] %vm885, %v775
      %931 = vst.msk [vmem:[#allocation2 + $0x168] sm:$0xff] %vm885, %v778
      %932 = vst.msk [vmem:[#allocation2 + $0x170] sm:$0xff] %vm885, %v783
      %933 = vst.msk [vmem:[#allocation2 + $0x178] sm:$0xff] %vm885, %v786
      %934 = vst.msk [vmem:[#allocation2 + $0x180] sm:$0xff] %vm885, %v791
      %935 = vst.msk [vmem:[#allocation2 + $0x188] sm:$0xff] %vm885, %v794
      %936 = vst.msk [vmem:[#allocation2 + $0x190] sm:$0xff] %vm885, %v799
      %937 = vst.msk [vmem:[#allocation2 + $0x198] sm:$0xff] %vm885, %v802
      %938 = vst.msk [vmem:[#allocation2 + $0x1a0] sm:$0xff] %vm885, %v807
      %939 = vst.msk [vmem:[#allocation2 + $0x1a8] sm:$0xff] %vm885, %v810
      %940 = vst.msk [vmem:[#allocation2 + $0x1b0] sm:$0xff] %vm885, %v815
      %941 = vst.msk [vmem:[#allocation2 + $0x1b8] sm:$0xff] %vm885, %v818
      %942 = vst.msk [vmem:[#allocation2 + $0x1c0] sm:$0xff] %vm885, %v823
      %943 = vst.msk [vmem:[#allocation2 + $0x1c8] sm:$0xff] %vm885, %v826
      %944 = vst.msk [vmem:[#allocation2 + $0x1d0] sm:$0xff] %vm885, %v831
      %945 = vst.msk [vmem:[#allocation2 + $0x1d8] sm:$0xff] %vm885, %v834
      %946 = vst.msk [vmem:[#allocation2 + $0x1e0] sm:$0xff] %vm885, %v839
      %947 = vst.msk [vmem:[#allocation2 + $0x1e8] sm:$0xff] %vm885, %v842
      %948 = vst.msk [vmem:[#allocation2 + $0x1f0] sm:$0xff] %vm885, %v847
      %949 = vst.msk [vmem:[#allocation2 + $0x1f8] sm:$0xff] %vm885, %v850
      %950 = vst.msk [vmem:[#allocation2 + $0x200] sm:$0xff] %vm885, %v855
      %951 = vst.msk [vmem:[#allocation2 + $0x208] sm:$0xff] %vm885, %v858
      %952 = vst.msk [vmem:[#allocation2 + $0x210] sm:$0xff] %vm885, %v863
      %953 = vst.msk [vmem:[#allocation2 + $0x218] sm:$0xff] %vm885, %v866
      %954 = vst.msk [vmem:[#allocation2 + $0x220] sm:$0xff] %vm885, %v871
      %955 = vst.msk [vmem:[#allocation2 + $0x228] sm:$0xff] %vm885, %v874
      %956 = vst.msk [vmem:[#allocation2 + $0x230] sm:$0xff] %vm885, %v879
      %957 = vst.msk [vmem:[#allocation2 + $0x238] sm:$0xff] %vm885, %v882
      %v958 = vld [vmem:[#allocation2] ss:$2 sm:$0xff]
      %s959 = scalar_lea.vmem [#allocation2], 16
      %v960 = vld [vmem:[%s959] ss:$2 sm:$0xff]
      %s961 = scalar_lea.vmem [#allocation2], 32
      %v962 = vld [vmem:[%s961] ss:$2 sm:$0xff]
      %s963 = scalar_lea.vmem [#allocation2], 48
      %v964 = vld [vmem:[%s963] ss:$2 sm:$0xff]
      %s965 = scalar_lea.vmem [#allocation2], 64
      %v966 = vld [vmem:[%s965] ss:$2 sm:$0xff]
      %s967 = scalar_lea.vmem [#allocation2], 80
      %v968 = vld [vmem:[%s967] ss:$2 sm:$0xff]
      %s969 = scalar_lea.vmem [#allocation2], 96
      %v970 = vld [vmem:[%s969] ss:$2 sm:$0xff]
      %s971 = scalar_lea.vmem [#allocation2], 112
      %v972 = vld [vmem:[%s971] ss:$2 sm:$0xff]
      %s973 = scalar_lea.vmem [#allocation2], 128
      %v974 = vld [vmem:[%s973] ss:$2 sm:$0xff]
      %s975 = scalar_lea.vmem [#allocation2], 144
      %v976 = vld [vmem:[%s975] ss:$2 sm:$0xff]
      %s977 = scalar_lea.vmem [#allocation2], 160
      %v978 = vld [vmem:[%s977] ss:$2 sm:$0xff]
      %s979 = scalar_lea.vmem [#allocation2], 176
      %v980 = vld [vmem:[%s979] ss:$2 sm:$0xff]
      %s981 = scalar_lea.vmem [#allocation2], 192
      %v982 = vld [vmem:[%s981] ss:$2 sm:$0xff]
      %s983 = scalar_lea.vmem [#allocation2], 208
      %v984 = vld [vmem:[%s983] ss:$2 sm:$0xff]
      %s985 = scalar_lea.vmem [#allocation2], 224
      %v986 = vld [vmem:[%s985] ss:$2 sm:$0xff]
      %s987 = scalar_lea.vmem [#allocation2], 240
      %v988 = vld [vmem:[%s987] ss:$2 sm:$0xff]
      %s989 = scalar_lea.vmem [#allocation2], 256
      %v990 = vld [vmem:[%s989] ss:$2 sm:$0xff]
      %s991 = scalar_lea.vmem [#allocation2], 272
      %v992 = vld [vmem:[%s991] ss:$2 sm:$0xff]
      %s993 = scalar_lea.vmem [#allocation2], 288
      %v994 = vld [vmem:[%s993] ss:$2 sm:$0xff]
      %s995 = scalar_lea.vmem [#allocation2], 304
      %v996 = vld [vmem:[%s995] ss:$2 sm:$0xff]
      %s997 = scalar_lea.vmem [#allocation2], 320
      %v998 = vld [vmem:[%s997] ss:$2 sm:$0xff]
      %s999 = scalar_lea.vmem [#allocation2], 336
      %v1000 = vld [vmem:[%s999] ss:$2 sm:$0xff]
      %s1001 = scalar_lea.vmem [#allocation2], 352
      %v1002 = vld [vmem:[%s1001] ss:$2 sm:$0xff]
      %s1003 = scalar_lea.vmem [#allocation2], 368
      %v1004 = vld [vmem:[%s1003] ss:$2 sm:$0xff]
      %s1005 = scalar_lea.vmem [#allocation2], 384
      %v1006 = vld [vmem:[%s1005] ss:$2 sm:$0xff]
      %s1007 = scalar_lea.vmem [#allocation2], 400
      %v1008 = vld [vmem:[%s1007] ss:$2 sm:$0xff]
      %s1009 = scalar_lea.vmem [#allocation2], 416
      %v1010 = vld [vmem:[%s1009] ss:$2 sm:$0xff]
      %s1011 = scalar_lea.vmem [#allocation2], 432
      %v1012 = vld [vmem:[%s1011] ss:$2 sm:$0xff]
      %s1013 = scalar_lea.vmem [#allocation2], 448
      %v1014 = vld [vmem:[%s1013] ss:$2 sm:$0xff]
      %s1015 = scalar_lea.vmem [#allocation2], 464
      %v1016 = vld [vmem:[%s1015] ss:$2 sm:$0xff]
      %s1017 = scalar_lea.vmem [#allocation2], 480
      %v1018 = vld [vmem:[%s1017] ss:$2 sm:$0xff]
      %s1019 = scalar_lea.vmem [#allocation2], 496
      %v1020 = vld [vmem:[%s1019] ss:$2 sm:$0xff]
      %s1021 = scalar_lea.vmem [#allocation2], 512
      %v1022 = vld [vmem:[%s1021] ss:$2 sm:$0xff]
      %s1023 = scalar_lea.vmem [#allocation2], 528
      %v1024 = vld [vmem:[%s1023] ss:$2 sm:$0xff]
      %s1025 = scalar_lea.vmem [#allocation2], 544
      %v1026 = vld [vmem:[%s1025] ss:$2 sm:$0xff]
      %s1027 = scalar_lea.vmem [#allocation2], 560
      %v1028 = vld [vmem:[%s1027] ss:$2 sm:$0xff]
      %s1029 = scalar_lea.vmem [#allocation2], 1
      %v1030 = vld [vmem:[%s1029] ss:$2 sm:$0xff]
      %s1031 = scalar_lea.vmem [#allocation2], 17
      %v1032 = vld [vmem:[%s1031] ss:$2 sm:$0xff]
      %s1033 = scalar_lea.vmem [#allocation2], 33
      %v1034 = vld [vmem:[%s1033] ss:$2 sm:$0xff]
      %s1035 = scalar_lea.vmem [#allocation2], 49
      %v1036 = vld [vmem:[%s1035] ss:$2 sm:$0xff]
      %s1037 = scalar_lea.vmem [#allocation2], 65
      %v1038 = vld [vmem:[%s1037] ss:$2 sm:$0xff]
      %s1039 = scalar_lea.vmem [#allocation2], 81
      %v1040 = vld [vmem:[%s1039] ss:$2 sm:$0xff]
      %s1041 = scalar_lea.vmem [#allocation2], 97
      %v1042 = vld [vmem:[%s1041] ss:$2 sm:$0xff]
      %s1043 = scalar_lea.vmem [#allocation2], 113
      %v1044 = vld [vmem:[%s1043] ss:$2 sm:$0xff]
      %s1045 = scalar_lea.vmem [#allocation2], 129
      %v1046 = vld [vmem:[%s1045] ss:$2 sm:$0xff]
      %s1047 = scalar_lea.vmem [#allocation2], 145
      %v1048 = vld [vmem:[%s1047] ss:$2 sm:$0xff]
      %s1049 = scalar_lea.vmem [#allocation2], 161
      %v1050 = vld [vmem:[%s1049] ss:$2 sm:$0xff]
      %s1051 = scalar_lea.vmem [#allocation2], 177
      %v1052 = vld [vmem:[%s1051] ss:$2 sm:$0xff]
      %s1053 = scalar_lea.vmem [#allocation2], 193
      %v1054 = vld [vmem:[%s1053] ss:$2 sm:$0xff]
      %s1055 = scalar_lea.vmem [#allocation2], 209
      %v1056 = vld [vmem:[%s1055] ss:$2 sm:$0xff]
      %s1057 = scalar_lea.vmem [#allocation2], 225
      %v1058 = vld [vmem:[%s1057] ss:$2 sm:$0xff]
      %s1059 = scalar_lea.vmem [#allocation2], 241
      %v1060 = vld [vmem:[%s1059] ss:$2 sm:$0xff]
      %s1061 = scalar_lea.vmem [#allocation2], 257
      %v1062 = vld [vmem:[%s1061] ss:$2 sm:$0xff]
      %s1063 = scalar_lea.vmem [#allocation2], 273
      %v1064 = vld [vmem:[%s1063] ss:$2 sm:$0xff]
      %s1065 = scalar_lea.vmem [#allocation2], 289
      %v1066 = vld [vmem:[%s1065] ss:$2 sm:$0xff]
      %s1067 = scalar_lea.vmem [#allocation2], 305
      %v1068 = vld [vmem:[%s1067] ss:$2 sm:$0xff]
      %s1069 = scalar_lea.vmem [#allocation2], 321
      %v1070 = vld [vmem:[%s1069] ss:$2 sm:$0xff]
      %s1071 = scalar_lea.vmem [#allocation2], 337
      %v1072 = vld [vmem:[%s1071] ss:$2 sm:$0xff]
      %s1073 = scalar_lea.vmem [#allocation2], 353
      %v1074 = vld [vmem:[%s1073] ss:$2 sm:$0xff]
      %s1075 = scalar_lea.vmem [#allocation2], 369
      %v1076 = vld [vmem:[%s1075] ss:$2 sm:$0xff]
      %s1077 = scalar_lea.vmem [#allocation2], 385
      %v1078 = vld [vmem:[%s1077] ss:$2 sm:$0xff]
      %s1079 = scalar_lea.vmem [#allocation2], 401
      %v1080 = vld [vmem:[%s1079] ss:$2 sm:$0xff]
      %s1081 = scalar_lea.vmem [#allocation2], 417
      %v1082 = vld [vmem:[%s1081] ss:$2 sm:$0xff]
      %s1083 = scalar_lea.vmem [#allocation2], 433
      %v1084 = vld [vmem:[%s1083] ss:$2 sm:$0xff]
      %s1085 = scalar_lea.vmem [#allocation2], 449
      %v1086 = vld [vmem:[%s1085] ss:$2 sm:$0xff]
      %s1087 = scalar_lea.vmem [#allocation2], 465
      %v1088 = vld [vmem:[%s1087] ss:$2 sm:$0xff]
      %s1089 = scalar_lea.vmem [#allocation2], 481
      %v1090 = vld [vmem:[%s1089] ss:$2 sm:$0xff]
      %s1091 = scalar_lea.vmem [#allocation2], 497
      %v1092 = vld [vmem:[%s1091] ss:$2 sm:$0xff]
      %s1093 = scalar_lea.vmem [#allocation2], 513
      %v1094 = vld [vmem:[%s1093] ss:$2 sm:$0xff]
      %s1095 = scalar_lea.vmem [#allocation2], 529
      %v1096 = vld [vmem:[%s1095] ss:$2 sm:$0xff]
      %s1097 = scalar_lea.vmem [#allocation2], 545
      %v1098 = vld [vmem:[%s1097] ss:$2 sm:$0xff]
      %s1099 = scalar_lea.vmem [#allocation2], 561
      %v1100 = vld [vmem:[%s1099] ss:$2 sm:$0xff]
      %v1101 = vmax.f32 %v958, %v1030
      %v1102 = vmax.f32 %v960, %v1032
      %v1103 = vmax.f32 %v962, %v1034
      %v1104 = vmax.f32 %v964, %v1036
      %v1105 = vmax.f32 %v966, %v1038
      %v1106 = vmax.f32 %v968, %v1040
      %v1107 = vmax.f32 %v970, %v1042
      %v1108 = vmax.f32 %v972, %v1044
      %v1109 = vmax.f32 %v974, %v1046
      %v1110 = vmax.f32 %v976, %v1048
      %v1111 = vmax.f32 %v978, %v1050
      %v1112 = vmax.f32 %v980, %v1052
      %v1113 = vmax.f32 %v982, %v1054
      %v1114 = vmax.f32 %v984, %v1056
      %v1115 = vmax.f32 %v986, %v1058
      %v1116 = vmax.f32 %v988, %v1060
      %v1117 = vmax.f32 %v990, %v1062
      %v1118 = vmax.f32 %v992, %v1064
      %v1119 = vmax.f32 %v994, %v1066
      %v1120 = vmax.f32 %v996, %v1068
      %v1121 = vmax.f32 %v998, %v1070
      %v1122 = vmax.f32 %v1000, %v1072
      %v1123 = vmax.f32 %v1002, %v1074
      %v1124 = vmax.f32 %v1004, %v1076
      %v1125 = vmax.f32 %v1006, %v1078
      %v1126 = vmax.f32 %v1008, %v1080
      %v1127 = vmax.f32 %v1010, %v1082
      %v1128 = vmax.f32 %v1012, %v1084
      %v1129 = vmax.f32 %v1014, %v1086
      %v1130 = vmax.f32 %v1016, %v1088
      %v1131 = vmax.f32 %v1018, %v1090
      %v1132 = vmax.f32 %v1020, %v1092
      %v1133 = vmax.f32 %v1022, %v1094
      %v1134 = vmax.f32 %v1024, %v1096
      %v1135 = vmax.f32 %v1026, %v1098
      %v1136 = vmax.f32 %v1028, %v1100
      %1137 = vst.msk [vmem:[#allocation3] sm:$0xff] %vm885, %v1101
      %1138 = vst.msk [vmem:[#allocation3 + $0x8] sm:$0xff] %vm885, %v1102
      %1139 = vst.msk [vmem:[#allocation3 + $0x10] sm:$0xff] %vm885, %v1103
      %1140 = vst.msk [vmem:[#allocation3 + $0x18] sm:$0xff] %vm885, %v1104
      %1141 = vst.msk [vmem:[#allocation3 + $0x20] sm:$0xff] %vm885, %v1105
      %1142 = vst.msk [vmem:[#allocation3 + $0x28] sm:$0xff] %vm885, %v1106
      %1143 = vst.msk [vmem:[#allocation3 + $0x30] sm:$0xff] %vm885, %v1107
      %1144 = vst.msk [vmem:[#allocation3 + $0x38] sm:$0xff] %vm885, %v1108
      %1145 = vst.msk [vmem:[#allocation3 + $0x40] sm:$0xff] %vm885, %v1109
      %1146 = vst.msk [vmem:[#allocation3 + $0x48] sm:$0xff] %vm885, %v1110
      %1147 = vst.msk [vmem:[#allocation3 + $0x50] sm:$0xff] %vm885, %v1111
      %1148 = vst.msk [vmem:[#allocation3 + $0x58] sm:$0xff] %vm885, %v1112
      %1149 = vst.msk [vmem:[#allocation3 + $0x60] sm:$0xff] %vm885, %v1113
      %1150 = vst.msk [vmem:[#allocation3 + $0x68] sm:$0xff] %vm885, %v1114
      %1151 = vst.msk [vmem:[#allocation3 + $0x70] sm:$0xff] %vm885, %v1115
      %1152 = vst.msk [vmem:[#allocation3 + $0x78] sm:$0xff] %vm885, %v1116
      %1153 = vst.msk [vmem:[#allocation3 + $0x80] sm:$0xff] %vm885, %v1117
      %1154 = vst.msk [vmem:[#allocation3 + $0x88] sm:$0xff] %vm885, %v1118
      %1155 = vst.msk [vmem:[#allocation3 + $0x90] sm:$0xff] %vm885, %v1119
      %1156 = vst.msk [vmem:[#allocation3 + $0x98] sm:$0xff] %vm885, %v1120
      %1157 = vst.msk [vmem:[#allocation3 + $0xa0] sm:$0xff] %vm885, %v1121
      %1158 = vst.msk [vmem:[#allocation3 + $0xa8] sm:$0xff] %vm885, %v1122
      %1159 = vst.msk [vmem:[#allocation3 + $0xb0] sm:$0xff] %vm885, %v1123
      %1160 = vst.msk [vmem:[#allocation3 + $0xb8] sm:$0xff] %vm885, %v1124
      %1161 = vst.msk [vmem:[#allocation3 + $0xc0] sm:$0xff] %vm885, %v1125
      %1162 = vst.msk [vmem:[#allocation3 + $0xc8] sm:$0xff] %vm885, %v1126
      %1163 = vst.msk [vmem:[#allocation3 + $0xd0] sm:$0xff] %vm885, %v1127
      %1164 = vst.msk [vmem:[#allocation3 + $0xd8] sm:$0xff] %vm885, %v1128
      %1165 = vst.msk [vmem:[#allocation3 + $0xe0] sm:$0xff] %vm885, %v1129
      %1166 = vst.msk [vmem:[#allocation3 + $0xe8] sm:$0xff] %vm885, %v1130
      %1167 = vst.msk [vmem:[#allocation3 + $0xf0] sm:$0xff] %vm885, %v1131
      %1168 = vst.msk [vmem:[#allocation3 + $0xf8] sm:$0xff] %vm885, %v1132
      %1169 = vst.msk [vmem:[#allocation3 + $0x100] sm:$0xff] %vm885, %v1133
      %1170 = vst.msk [vmem:[#allocation3 + $0x108] sm:$0xff] %vm885, %v1134
      %1171 = vst.msk [vmem:[#allocation3 + $0x110] sm:$0xff] %vm885, %v1135
      %1172 = vst.msk [vmem:[#allocation3 + $0x118] sm:$0xff] %vm885, %v1136
      %v1173 = vld [vmem:[#allocation3] ss:$24 sm:$0xf]
      %v1174 = vld [vmem:[#allocation3] ss:$24 sm:$0xf0]
      %v1175 = vor.u32 %v1173, %v1174
      %s1176 = scalar_lea.vmem [#allocation3], 192
      %v1177 = vld [vmem:[%s1176] ss:$24 sm:$0xf]
      %s1178 = scalar_lea.vmem [#allocation3], 12
      %v1179 = vld [vmem:[%s1178] ss:$24 sm:$0xf]
      %v1180 = vld [vmem:[%s1178] ss:$24 sm:$0xf0]
      %v1181 = vor.u32 %v1179, %v1180
      %s1182 = scalar_lea.vmem [#allocation3], 204
      %v1183 = vld [vmem:[%s1182] ss:$24 sm:$0xf]
      %v1184 = vmax.f32 %v1175, %v1181
      %v1185 = vmax.f32 %v1177, %v1183
      %v1186 = vmax.f32 %v1184, 0.0
      %v1187 = vmax.f32 %v1185, 0.0
      %1188 = vst.msk [vmem:[%s172] sm:$0xff] %vm885, %v1186
      %vm1189 = vcmask 125952
      %1190 = vst.msk [vmem:[%s172 + $0x8] sm:$0xf] %vm1189, %v1187
      %s1191 = scalar_lea.vmem [#allocation3], 1
      %v1192 = vld [vmem:[%s1191] ss:$24 sm:$0xf]
      %v1193 = vld [vmem:[%s1191] ss:$24 sm:$0xf0]
      %v1194 = vor.u32 %v1192, %v1193
      %s1195 = scalar_lea.vmem [#allocation3], 193
      %v1196 = vld [vmem:[%s1195] ss:$24 sm:$0xf]
      %s1197 = scalar_lea.vmem [#allocation3], 13
      %v1198 = vld [vmem:[%s1197] ss:$24 sm:$0xf]
      %v1199 = vld [vmem:[%s1197] ss:$24 sm:$0xf0]
      %v1200 = vor.u32 %v1198, %v1199
      %s1201 = scalar_lea.vmem [#allocation3], 205
      %v1202 = vld [vmem:[%s1201] ss:$24 sm:$0xf]
      %v1203 = vmax.f32 %v1194, %v1200
      %v1204 = vmax.f32 %v1196, %v1202
      %v1205 = vmax.f32 %v1203, 0.0
      %v1206 = vmax.f32 %v1204, 0.0
      %s1207 = scalar_lea.vmem %s172, 16
      %1208 = vst.msk [vmem:[%s1207] sm:$0xff] %vm885, %v1205
      %1209 = vst.msk [vmem:[%s1207 + $0x8] sm:$0xf] %vm1189, %v1206
      %s1210 = scalar_lea.vmem [#allocation3], 2
      %v1211 = vld [vmem:[%s1210] ss:$24 sm:$0xf]
      %v1212 = vld [vmem:[%s1210] ss:$24 sm:$0xf0]
      %v1213 = vor.u32 %v1211, %v1212
      %s1214 = scalar_lea.vmem [#allocation3], 194
      %v1215 = vld [vmem:[%s1214] ss:$24 sm:$0xf]
      %s1216 = scalar_lea.vmem [#allocation3], 14
      %v1217 = vld [vmem:[%s1216] ss:$24 sm:$0xf]
      %v1218 = vld [vmem:[%s1216] ss:$24 sm:$0xf0]
      %v1219 = vor.u32 %v1217, %v1218
      %s1220 = scalar_lea.vmem [#allocation3], 206
      %v1221 = vld [vmem:[%s1220] ss:$24 sm:$0xf]
      %v1222 = vmax.f32 %v1213, %v1219
      %v1223 = vmax.f32 %v1215, %v1221
      %v1224 = vmax.f32 %v1222, 0.0
      %v1225 = vmax.f32 %v1223, 0.0
      %s1226 = scalar_lea.vmem %s172, 32
      %1227 = vst.msk [vmem:[%s1226] sm:$0xff] %vm885, %v1224
      %1228 = vst.msk [vmem:[%s1226 + $0x8] sm:$0xf] %vm1189, %v1225
      %s1229 = scalar_lea.vmem [#allocation3], 3
      %v1230 = vld [vmem:[%s1229] ss:$24 sm:$0xf]
      %v1231 = vld [vmem:[%s1229] ss:$24 sm:$0xf0]
      %v1232 = vor.u32 %v1230, %v1231
      %s1233 = scalar_lea.vmem [#allocation3], 195
      %v1234 = vld [vmem:[%s1233] ss:$24 sm:$0xf]
      %s1235 = scalar_lea.vmem [#allocation3], 15
      %v1236 = vld [vmem:[%s1235] ss:$24 sm:$0xf]
      %v1237 = vld [vmem:[%s1235] ss:$24 sm:$0xf0]
      %v1238 = vor.u32 %v1236, %v1237
      %s1239 = scalar_lea.vmem [#allocation3], 207
      %v1240 = vld [vmem:[%s1239] ss:$24 sm:$0xf]
      %v1241 = vmax.f32 %v1232, %v1238
      %v1242 = vmax.f32 %v1234, %v1240
      %v1243 = vmax.f32 %v1241, 0.0
      %v1244 = vmax.f32 %v1242, 0.0
      %s1245 = scalar_lea.vmem %s172, 48
      %1246 = vst.msk [vmem:[%s1245] sm:$0xff] %vm885, %v1243
      %1247 = vst.msk [vmem:[%s1245 + $0x8] sm:$0xf] %vm1189, %v1244
      %s1248 = scalar_lea.vmem [#allocation3], 4
      %v1249 = vld [vmem:[%s1248] ss:$24 sm:$0xf]
      %v1250 = vld [vmem:[%s1248] ss:$24 sm:$0xf0]
      %v1251 = vor.u32 %v1249, %v1250
      %s1252 = scalar_lea.vmem [#allocation3], 196
      %v1253 = vld [vmem:[%s1252] ss:$24 sm:$0xf]
      %s1254 = scalar_lea.vmem [#allocation3], 16
      %v1255 = vld [vmem:[%s1254] ss:$24 sm:$0xf]
      %v1256 = vld [vmem:[%s1254] ss:$24 sm:$0xf0]
      %v1257 = vor.u32 %v1255, %v1256
      %s1258 = scalar_lea.vmem [#allocation3], 208
      %v1259 = vld [vmem:[%s1258] ss:$24 sm:$0xf]
      %v1260 = vmax.f32 %v1251, %v1257
      %v1261 = vmax.f32 %v1253, %v1259
      %v1262 = vmax.f32 %v1260, 0.0
      %v1263 = vmax.f32 %v1261, 0.0
      %s1264 = scalar_lea.vmem %s172, 64
      %1265 = vst.msk [vmem:[%s1264] sm:$0xff] %vm885, %v1262
      %1266 = vst.msk [vmem:[%s1264 + $0x8] sm:$0xf] %vm1189, %v1263
      %s1267 = scalar_lea.vmem [#allocation3], 5
      %v1268 = vld [vmem:[%s1267] ss:$24 sm:$0xf]
      %v1269 = vld [vmem:[%s1267] ss:$24 sm:$0xf0]
      %v1270 = vor.u32 %v1268, %v1269
      %s1271 = scalar_lea.vmem [#allocation3], 197
      %v1272 = vld [vmem:[%s1271] ss:$24 sm:$0xf]
      %s1273 = scalar_lea.vmem [#allocation3], 17
      %v1274 = vld [vmem:[%s1273] ss:$24 sm:$0xf]
      %v1275 = vld [vmem:[%s1273] ss:$24 sm:$0xf0]
      %v1276 = vor.u32 %v1274, %v1275
      %s1277 = scalar_lea.vmem [#allocation3], 209
      %v1278 = vld [vmem:[%s1277] ss:$24 sm:$0xf]
      %v1279 = vmax.f32 %v1270, %v1276
      %v1280 = vmax.f32 %v1272, %v1278
      %v1281 = vmax.f32 %v1279, 0.0
      %v1282 = vmax.f32 %v1280, 0.0
      %s1283 = scalar_lea.vmem %s172, 80
      %1284 = vst.msk [vmem:[%s1283] sm:$0xff] %vm885, %v1281
      %1285 = vst.msk [vmem:[%s1283 + $0x8] sm:$0xf] %vm1189, %v1282
      %s1286 = scalar_lea.vmem [#allocation3], 6
      %v1287 = vld [vmem:[%s1286] ss:$24 sm:$0xf]
      %v1288 = vld [vmem:[%s1286] ss:$24 sm:$0xf0]
      %v1289 = vor.u32 %v1287, %v1288
      %s1290 = scalar_lea.vmem [#allocation3], 198
      %v1291 = vld [vmem:[%s1290] ss:$24 sm:$0xf]
      %s1292 = scalar_lea.vmem [#allocation3], 18
      %v1293 = vld [vmem:[%s1292] ss:$24 sm:$0xf]
      %v1294 = vld [vmem:[%s1292] ss:$24 sm:$0xf0]
      %v1295 = vor.u32 %v1293, %v1294
      %s1296 = scalar_lea.vmem [#allocation3], 210
      %v1297 = vld [vmem:[%s1296] ss:$24 sm:$0xf]
      %v1298 = vmax.f32 %v1289, %v1295
      %v1299 = vmax.f32 %v1291, %v1297
      %v1300 = vmax.f32 %v1298, 0.0
      %v1301 = vmax.f32 %v1299, 0.0
      %s1302 = scalar_lea.vmem %s172, 96
      %1303 = vst.msk [vmem:[%s1302] sm:$0xff] %vm885, %v1300
      %1304 = vst.msk [vmem:[%s1302 + $0x8] sm:$0xf] %vm1189, %v1301
      %s1305 = scalar_lea.vmem [#allocation3], 7
      %v1306 = vld [vmem:[%s1305] ss:$24 sm:$0xf]
      %v1307 = vld [vmem:[%s1305] ss:$24 sm:$0xf0]
      %v1308 = vor.u32 %v1306, %v1307
      %s1309 = scalar_lea.vmem [#allocation3], 199
      %v1310 = vld [vmem:[%s1309] ss:$24 sm:$0xf]
      %s1311 = scalar_lea.vmem [#allocation3], 19
      %v1312 = vld [vmem:[%s1311] ss:$24 sm:$0xf]
      %v1313 = vld [vmem:[%s1311] ss:$24 sm:$0xf0]
      %v1314 = vor.u32 %v1312, %v1313
      %s1315 = scalar_lea.vmem [#allocation3], 211
      %v1316 = vld [vmem:[%s1315] ss:$24 sm:$0xf]
      %v1317 = vmax.f32 %v1308, %v1314
      %v1318 = vmax.f32 %v1310, %v1316
      %v1319 = vmax.f32 %v1317, 0.0
      %v1320 = vmax.f32 %v1318, 0.0
      %s1321 = scalar_lea.vmem %s172, 112
      %1322 = vst.msk [vmem:[%s1321] sm:$0xff] %vm885, %v1319
      %1323 = vst.msk [vmem:[%s1321 + $0x8] sm:$0xf] %vm1189, %v1320
      %s1324 = scalar_lea.vmem [#allocation3], 8
      %v1325 = vld [vmem:[%s1324] ss:$24 sm:$0xf]
      %v1326 = vld [vmem:[%s1324] ss:$24 sm:$0xf0]
      %v1327 = vor.u32 %v1325, %v1326
      %s1328 = scalar_lea.vmem [#allocation3], 200
      %v1329 = vld [vmem:[%s1328] ss:$24 sm:$0xf]
      %s1330 = scalar_lea.vmem [#allocation3], 20
      %v1331 = vld [vmem:[%s1330] ss:$24 sm:$0xf]
      %v1332 = vld [vmem:[%s1330] ss:$24 sm:$0xf0]
      %v1333 = vor.u32 %v1331, %v1332
      %s1334 = scalar_lea.vmem [#allocation3], 212
      %v1335 = vld [vmem:[%s1334] ss:$24 sm:$0xf]
      %v1336 = vmax.f32 %v1327, %v1333
      %v1337 = vmax.f32 %v1329, %v1335
      %v1338 = vmax.f32 %v1336, 0.0
      %v1339 = vmax.f32 %v1337, 0.0
      %s1340 = scalar_lea.vmem %s172, 128
      %1341 = vst.msk [vmem:[%s1340] sm:$0xff] %vm885, %v1338
      %1342 = vst.msk [vmem:[%s1340 + $0x8] sm:$0xf] %vm1189, %v1339
      %s1343 = scalar_lea.vmem [#allocation3], 9
      %v1344 = vld [vmem:[%s1343] ss:$24 sm:$0xf]
      %v1345 = vld [vmem:[%s1343] ss:$24 sm:$0xf0]
      %v1346 = vor.u32 %v1344, %v1345
      %s1347 = scalar_lea.vmem [#allocation3], 201
      %v1348 = vld [vmem:[%s1347] ss:$24 sm:$0xf]
      %s1349 = scalar_lea.vmem [#allocation3], 21
      %v1350 = vld [vmem:[%s1349] ss:$24 sm:$0xf]
      %v1351 = vld [vmem:[%s1349] ss:$24 sm:$0xf0]
      %v1352 = vor.u32 %v1350, %v1351
      %s1353 = scalar_lea.vmem [#allocation3], 213
      %v1354 = vld [vmem:[%s1353] ss:$24 sm:$0xf]
      %v1355 = vmax.f32 %v1346, %v1352
      %v1356 = vmax.f32 %v1348, %v1354
      %v1357 = vmax.f32 %v1355, 0.0
      %v1358 = vmax.f32 %v1356, 0.0
      %s1359 = scalar_lea.vmem %s172, 144
      %1360 = vst.msk [vmem:[%s1359] sm:$0xff] %vm885, %v1357
      %1361 = vst.msk [vmem:[%s1359 + $0x8] sm:$0xf] %vm1189, %v1358
      %s1362 = scalar_lea.vmem [#allocation3], 10
      %v1363 = vld [vmem:[%s1362] ss:$24 sm:$0xf]
      %v1364 = vld [vmem:[%s1362] ss:$24 sm:$0xf0]
      %v1365 = vor.u32 %v1363, %v1364
      %s1366 = scalar_lea.vmem [#allocation3], 202
      %v1367 = vld [vmem:[%s1366] ss:$24 sm:$0xf]
      %s1368 = scalar_lea.vmem [#allocation3], 22
      %v1369 = vld [vmem:[%s1368] ss:$24 sm:$0xf]
      %v1370 = vld [vmem:[%s1368] ss:$24 sm:$0xf0]
      %v1371 = vor.u32 %v1369, %v1370
      %s1372 = scalar_lea.vmem [#allocation3], 214
      %v1373 = vld [vmem:[%s1372] ss:$24 sm:$0xf]
      %v1374 = vmax.f32 %v1365, %v1371
      %v1375 = vmax.f32 %v1367, %v1373
      %v1376 = vmax.f32 %v1374, 0.0
      %v1377 = vmax.f32 %v1375, 0.0
      %s1378 = scalar_lea.vmem %s172, 160
      %1379 = vst.msk [vmem:[%s1378] sm:$0xff] %vm885, %v1376
      %1380 = vst.msk [vmem:[%s1378 + $0x8] sm:$0xf] %vm1189, %v1377
      %s1381 = scalar_lea.vmem [#allocation3], 11
      %v1382 = vld [vmem:[%s1381] ss:$24 sm:$0xf]
      %v1383 = vld [vmem:[%s1381] ss:$24 sm:$0xf0]
      %v1384 = vor.u32 %v1382, %v1383
      %s1385 = scalar_lea.vmem [#allocation3], 203
      %v1386 = vld [vmem:[%s1385] ss:$24 sm:$0xf]
      %s1387 = scalar_lea.vmem [#allocation3], 23
      %v1388 = vld [vmem:[%s1387] ss:$24 sm:$0xf]
      %v1389 = vld [vmem:[%s1387] ss:$24 sm:$0xf0]
      %v1390 = vor.u32 %v1388, %v1389
      %s1391 = scalar_lea.vmem [#allocation3], 215
      %v1392 = vld [vmem:[%s1391] ss:$24 sm:$0xf]
      %v1393 = vmax.f32 %v1384, %v1390
      %v1394 = vmax.f32 %v1386, %v1392
      %v1395 = vmax.f32 %v1393, 0.0
      %v1396 = vmax.f32 %v1394, 0.0
      %s1397 = scalar_lea.vmem %s172, 176
      %1398 = vst.msk [vmem:[%s1397] sm:$0xff] %vm885, %v1395
      %1399 = vst.msk [vmem:[%s1397 + $0x8] sm:$0xf] %vm1189, %v1396
      %p1400 = scmp.lt.s32.totalorder %s14, 1
      %s1401 = scalar_select %p1400, %s14, 1
      %s1402 = smul.addr %s1401, 24
      %s1403 = smul.addr %s1402, 8
      %s1404 = scalar_lea.vmem %s3, %s1403
      // Predicated region
      $region33: #{cnn_mnist_forward.2} parent=31 // pred_check
        %p1405 = pneg %p100
      $region34: #{cnn_mnist_forward.2} parent=31 // pred_check_branch
        %1407 = sbr.rel (%p1405) target = $region36
      $region35: #{cnn_mnist_forward.2} parent=31 // pred_region
        _
      $region36: #{cnn_mnist_forward.2} parent=31 // pred_fallthru
        _
    $region32: #{cnn_mnist_forward.2} parent=5 // pred_fallthru
      _
    %p1408 = scmp.le.s32.totalorder 2, %s9
    // Predicated region
    $region37: #{cnn_mnist_forward.2} parent=5 // pred_check
      %p1409 = pneg %p1408
    $region38: #{cnn_mnist_forward.2} parent=5 // pred_check_branch
      %1411 = sbr.rel (%p1409) target = $region40
    $region39: #{cnn_mnist_forward.2} parent=5 // pred_region
      %s1412 = ssub.s32 %s9, 2
      // Predicated region
      $region41: #{cnn_mnist_forward.2} parent=39 // pred_check
        %p1413 = pneg %p106
      $region42: #{cnn_mnist_forward.2} parent=39 // pred_check_branch
        %1415 = sbr.rel (%p1413) target = $region44
      $region43: #{cnn_mnist_forward.2} parent=39 // pred_region
        %p1416 = scmp.lt.s32.totalorder %s15, 1
        %s1417 = scalar_select %p1416, %s15, 1
        %s1418 = smul.addr %s1417, 24
        %s1419 = smul.addr %s1418, 8
        %s1420 = scalar_lea.vmem %s3, %s1419
      $region44: #{cnn_mnist_forward.2} parent=39 // pred_fallthru
        _
    $region40: #{cnn_mnist_forward.2} parent=5 // pred_fallthru
      _
  $region6: #{cnn_mnist_forward.2} parent=0 // loop_footer
    %s13 = sadd.s32 1, %s9
  $region7: #{cnn_mnist_forward.2} parent=0 // loop_footer_branch
    %8 = sbr.rel target = $region3
  $region8: #{cnn_mnist_forward.2} parent=0 // loop_exit
    _

// kernel: cnn_mnist_forward.3
$region0: #{cnn_mnist_forward.3}
  #allocation0 [shape = 'u32[]', space=smem, size = 0x4, offset = 0x4, fixed_abs, tag = 'smem constant byte address 0x4 - core index']
  #allocation1 [shape = 'u32[144,128]{1,0:T(1,128)}', space=vmem, size = 0x12000, scoped, tag = 'internal scratch']
  #allocation2 [shape = 'f32[64,32]{1,0:T(8,128)}', space=vmem, size = 0x8000, scoped, tag = 'scratch operand']
  #allocation3 [shape = 'f32[32,32]{1,0:T(8,128)}', space=vmem, size = 0x4000, scoped, tag = 'scratch operand']
  %s0 = inlined_call_operand.vmem [shape: bf16[128,250], index: 0, kind: input, shape index: {}]
  %s1 = inlined_call_operand.vmem [shape: bf16[250,32], index: 1, kind: input, shape index: {}]
  %s2 = inlined_call_operand.vmem [shape: f32[1,32], index: 2, kind: input, shape index: {}]
  %s3 = inlined_call_operand.vmem [shape: f32[16,32,64], index: 3, kind: input, shape index: {}]
  %s4 = inlined_call_operand.vmem [shape: f32[1,64], index: 4, kind: input, shape index: {}]
  %s5 = inlined_call_operand.vmem [shape: f32[64,10], index: 5, kind: input, shape index: {}]
  %s6 = inlined_call_operand.vmem [shape: f32[1,10], index: 6, kind: input, shape index: {}]
  %s7 = inlined_call_operand.hbm [shape: f32[2,1,10], index: 7, kind: output, shape index: {0}]
  %s8 = inlined_call_operand.hbm [shape: f32[2,16,1,32], index: 8, kind: output, shape index: {1}]
  %9 = xla_tuple %s7, %s8
  %s10 = sld [smem:[#allocation0]]
  $region69: #{cnn_mnist_forward.3} parent=0
    _
  %s12 = ssub.s32 1, %s10
  %s13 = scalar_select 0, %s12, %s10
  $region1: #{cnn_mnist_forward.3} parent=0
    #allocation4 [shape = 'u8[1024]{0}', space=vmem, size = 0x400, scoped, tag = 'output window, operand 0']
    #allocation5 [shape = 's32[2]{0}', space=sflag, size = 0x8, scoped, tag = 'scoped memory for cnn_mnist_forward.3']
    #allocation6 [shape = 'u8[16384]{0}', space=vmem, size = 0x4000, scoped, tag = 'output window, operand 1']
    #allocation7 [shape = 's32[2]{0}', space=sflag, size = 0x8, scoped, tag = 'scoped memory for cnn_mnist_forward.3']
    %14 = vsyncpa [#allocation5], 0
    %s15 = scalar_lea.sflag [#allocation5], 1
    %16 = vsyncpa %s15, 0
    %17 = vsyncpa [#allocation7], 0
    %s18 = scalar_lea.sflag [#allocation7], 1
    %19 = vsyncpa %s18, 0
    loop: start=0, step=1, limit=4
    $region2: #{cnn_mnist_forward.3} parent=1 // loop_pre_header
      _
    $region3: #{cnn_mnist_forward.3} parent=1 // loop_header
      %s21 = sphi 0, %s25
      %p22 = scmp.ge.s32.totalorder %s21, 4
      %s31 = sphi 0, %s33
      %s34 = sphi 0, %s31
      %s35 = sphi 0, %s34
      %s51 = sphi 0, %s35
      %s55 = sphi 0, %s55
      %s57 = sphi 0, %s55
      %s58 = sphi 0, %s57
      %s72 = sphi 0, %s58
      %s76 = sphi 0, %s76
      %s78 = sphi 0, %s76
      %s79 = sphi 0, %s78
      %s93 = sphi 0, %s79
      %s97 = sphi 0, %s97
      %s99 = sphi 0, %s97
      %s100 = sphi 0, %s99
      %s114 = sphi 0, %s100
      %s118 = sphi 0, %s118
      %s120 = sphi 0, %s118
      %s121 = sphi 0, %s120
      %s135 = sphi 0, %s121
      %s139 = sphi 0, %s139
      %s141 = sphi 0, %s139
      %s142 = sphi 0, %s141
      %s156 = sphi 0, %s142
      %s160 = sphi 0, %s160
      %s162 = sphi 0, %s160
      %s163 = sphi 0, %s162
      %s177 = sphi 0, %s163
      %s183 = sphi 0, %s185
      %s186 = sphi 0, %s183
      %s187 = sphi 0, %s186
      %s203 = sphi 0, %s187
      %s209 = sphi 0, %s211
      %s212 = sphi 0, %s209
      %s213 = sphi 0, %s212
      %s229 = sphi 0, %s213
    $region4: #{cnn_mnist_forward.3} parent=1 // loop_header_branch
      %24 = sbr.rel (%p22) target = $region8
    $region5: #{cnn_mnist_forward.3} parent=1 // loop_body
      %s26 = ssub.s32 %s21, 1
      %s27 = ssub.s32 %s21, 2
      %s28 = sadd.s32 %s21, 1
      %s29 = ssub.s32 %s21, %s28
      %p30 = scmp.eq.s32.totalorder %s29, 0
      %s32 = sadd.s32 %s31, 1
      %s33 = scalar_select %p30, %s31, %s32
      %p36 = pneg %p30
      %p37 = scmp.eq.s32.totalorder %s21, 1
      %p38 = por %p36, %p37
      %p39 = scmp.ne.s32.totalorder %s31, %s34
      %p40 = scmp.eq.s32.totalorder %s21, 0
      %p41 = por %p39, %p40
      %p42 = scmp.ne.s32.totalorder %s31, %s34
      %p43 = scmp.eq.s32.totalorder %s26, 1
      %p44 = por %p42, %p43
      %p45 = scmp.ne.s32.totalorder %s34, %s35
      %p46 = scmp.eq.s32.totalorder %s26, 0
      %p47 = por %p45, %p46
      %p48 = scmp.ne.s32.totalorder %s34, %s35
      %p49 = scmp.eq.s32.totalorder %s27, 1
      %p50 = por %p48, %p49
      %p52 = scmp.ne.s32.totalorder %s35, %s51
      %p53 = scmp.eq.s32.totalorder %s27, 0
      %p54 = por %p52, %p53
      %s56 = sadd.s32 %s55, 1
      %p59 = scmp.eq.s32.totalorder %s21, 1
      %p60 = scmp.ne.s32.totalorder %s55, %s57
      %p61 = scmp.eq.s32.totalorder %s21, 0
      %p62 = por %p60, %p61
      %p63 = scmp.ne.s32.totalorder %s55, %s57
      %p64 = scmp.eq.s32.totalorder %s26, 1
      %p65 = por %p63, %p64
      %p66 = scmp.ne.s32.totalorder %s57, %s58
      %p67 = scmp.eq.s32.totalorder %s26, 0
      %p68 = por %p66, %p67
      %p69 = scmp.ne.s32.totalorder %s57, %s58
      %p70 = scmp.eq.s32.totalorder %s27, 1
      %p71 = por %p69, %p70
      %p73 = scmp.ne.s32.totalorder %s58, %s72
      %p74 = scmp.eq.s32.totalorder %s27, 0
      %p75 = por %p73, %p74
      %s77 = sadd.s32 %s76, 1
      %p80 = scmp.eq.s32.totalorder %s21, 1
      %p81 = scmp.ne.s32.totalorder %s76, %s78
      %p82 = scmp.eq.s32.totalorder %s21, 0
      %p83 = por %p81, %p82
      %p84 = scmp.ne.s32.totalorder %s76, %s78
      %p85 = scmp.eq.s32.totalorder %s26, 1
      %p86 = por %p84, %p85
      %p87 = scmp.ne.s32.totalorder %s78, %s79
      %p88 = scmp.eq.s32.totalorder %s26, 0
      %p89 = por %p87, %p88
      %p90 = scmp.ne.s32.totalorder %s78, %s79
      %p91 = scmp.eq.s32.totalorder %s27, 1
      %p92 = por %p90, %p91
      %p94 = scmp.ne.s32.totalorder %s79, %s93
      %p95 = scmp.eq.s32.totalorder %s27, 0
      %p96 = por %p94, %p95
      %s98 = sadd.s32 %s97, 1
      %p101 = scmp.eq.s32.totalorder %s21, 1
      %p102 = scmp.ne.s32.totalorder %s97, %s99
      %p103 = scmp.eq.s32.totalorder %s21, 0
      %p104 = por %p102, %p103
      %p105 = scmp.ne.s32.totalorder %s97, %s99
      %p106 = scmp.eq.s32.totalorder %s26, 1
      %p107 = por %p105, %p106
      %p108 = scmp.ne.s32.totalorder %s99, %s100
      %p109 = scmp.eq.s32.totalorder %s26, 0
      %p110 = por %p108, %p109
      %p111 = scmp.ne.s32.totalorder %s99, %s100
      %p112 = scmp.eq.s32.totalorder %s27, 1
      %p113 = por %p111, %p112
      %p115 = scmp.ne.s32.totalorder %s100, %s114
      %p116 = scmp.eq.s32.totalorder %s27, 0
      %p117 = por %p115, %p116
      %s119 = sadd.s32 %s118, 1
      %p122 = scmp.eq.s32.totalorder %s21, 1
      %p123 = scmp.ne.s32.totalorder %s118, %s120
      %p124 = scmp.eq.s32.totalorder %s21, 0
      %p125 = por %p123, %p124
      %p126 = scmp.ne.s32.totalorder %s118, %s120
      %p127 = scmp.eq.s32.totalorder %s26, 1
      %p128 = por %p126, %p127
      %p129 = scmp.ne.s32.totalorder %s120, %s121
      %p130 = scmp.eq.s32.totalorder %s26, 0
      %p131 = por %p129, %p130
      %p132 = scmp.ne.s32.totalorder %s120, %s121
      %p133 = scmp.eq.s32.totalorder %s27, 1
      %p134 = por %p132, %p133
      %p136 = scmp.ne.s32.totalorder %s121, %s135
      %p137 = scmp.eq.s32.totalorder %s27, 0
      %p138 = por %p136, %p137
      %s140 = sadd.s32 %s139, 1
      %p143 = scmp.eq.s32.totalorder %s21, 1
      %p144 = scmp.ne.s32.totalorder %s139, %s141
      %p145 = scmp.eq.s32.totalorder %s21, 0
      %p146 = por %p144, %p145
      %p147 = scmp.ne.s32.totalorder %s139, %s141
      %p148 = scmp.eq.s32.totalorder %s26, 1
      %p149 = por %p147, %p148
      %p150 = scmp.ne.s32.totalorder %s141, %s142
      %p151 = scmp.eq.s32.totalorder %s26, 0
      %p152 = por %p150, %p151
      %p153 = scmp.ne.s32.totalorder %s141, %s142
      %p154 = scmp.eq.s32.totalorder %s27, 1
      %p155 = por %p153, %p154
      %p157 = scmp.ne.s32.totalorder %s142, %s156
      %p158 = scmp.eq.s32.totalorder %s27, 0
      %p159 = por %p157, %p158
      %s161 = sadd.s32 %s160, 1
      %p164 = scmp.eq.s32.totalorder %s21, 1
      %p165 = scmp.ne.s32.totalorder %s160, %s162
      %p166 = scmp.eq.s32.totalorder %s21, 0
      %p167 = por %p165, %p166
      %p168 = scmp.ne.s32.totalorder %s160, %s162
      %p169 = scmp.eq.s32.totalorder %s26, 1
      %p170 = por %p168, %p169
      %p171 = scmp.ne.s32.totalorder %s162, %s163
      %p172 = scmp.eq.s32.totalorder %s26, 0
      %p173 = por %p171, %p172
      %p174 = scmp.ne.s32.totalorder %s162, %s163
      %p175 = scmp.eq.s32.totalorder %s27, 1
      %p176 = por %p174, %p175
      %p178 = scmp.ne.s32.totalorder %s163, %s177
      %p179 = scmp.eq.s32.totalorder %s27, 0
      %p180 = por %p178, %p179
      %s181 = ssub.s32 %s21, %s28
      %p182 = scmp.eq.s32.totalorder %s181, 0
      %s184 = sadd.s32 %s183, 1
      %s185 = scalar_select %p182, %s183, %s184
      %p188 = pneg %p182
      %p189 = scmp.eq.s32.totalorder %s21, 1
      %p190 = por %p188, %p189
      %p191 = scmp.ne.s32.totalorder %s183, %s186
      %p192 = scmp.eq.s32.totalorder %s21, 0
      %p193 = por %p191, %p192
      %p194 = scmp.ne.s32.totalorder %s183, %s186
      %p195 = scmp.eq.s32.totalorder %s26, 1
      %p196 = por %p194, %p195
      %p197 = scmp.ne.s32.totalorder %s186, %s187
      %p198 = scmp.eq.s32.totalorder %s26, 0
      %p199 = por %p197, %p198
      %p200 = scmp.ne.s32.totalorder %s186, %s187
      %p201 = scmp.eq.s32.totalorder %s27, 1
      %p202 = por %p200, %p201
      %p204 = scmp.ne.s32.totalorder %s187, %s203
      %p205 = scmp.eq.s32.totalorder %s27, 0
      %p206 = por %p204, %p205
      %s207 = ssub.s32 %s21, %s28
      %p208 = scmp.eq.s32.totalorder %s207, 0
      %s210 = sadd.s32 %s209, 1
      %s211 = scalar_select %p208, %s209, %s210
      %p214 = pneg %p208
      %p215 = scmp.eq.s32.totalorder %s21, 1
      %p216 = por %p214, %p215
      %p217 = scmp.ne.s32.totalorder %s209, %s212
      %p218 = scmp.eq.s32.totalorder %s21, 0
      %p219 = por %p217, %p218
      %p220 = scmp.ne.s32.totalorder %s209, %s212
      %p221 = scmp.eq.s32.totalorder %s26, 1
      %p222 = por %p220, %p221
      %p223 = scmp.ne.s32.totalorder %s212, %s213
      %p224 = scmp.eq.s32.totalorder %s26, 0
      %p225 = por %p223, %p224
      %p226 = scmp.ne.s32.totalorder %s212, %s213
      %p227 = scmp.eq.s32.totalorder %s27, 1
      %p228 = por %p226, %p227
      %p230 = scmp.ne.s32.totalorder %s213, %s229
      %p231 = scmp.eq.s32.totalorder %s27, 0
      %p232 = por %p230, %p231
      %p233 = scmp.le.s32.totalorder 1, %s21
      %p234 = scmp.lt.s32.totalorder %s21, 3
      %p235 = pnand %p233, %p234
      %p236 = pneg %p235
      // Predicated region
      $region9: #{cnn_mnist_forward.3} parent=5 // pred_check
        _
      $region10: #{cnn_mnist_forward.3} parent=5 // pred_check_branch
        %238 = sbr.rel (%p235) target = $region12
      $region11: #{cnn_mnist_forward.3} parent=5 // pred_region
        %s239 = ssub.s32 %s21, 1
        // Predicated region
        $region13: #{cnn_mnist_forward.3} parent=11 // pred_check
          %p240 = pneg %p68
        $region14: #{cnn_mnist_forward.3} parent=11 // pred_check_branch
          %242 = sbr.rel (%p240) target = $region16
        $region15: #{cnn_mnist_forward.3} parent=11 // pred_region
          _
        $region16: #{cnn_mnist_forward.3} parent=11 // pred_fallthru
          _
        // Predicated region
        $region17: #{cnn_mnist_forward.3} parent=11 // pred_check
          %p243 = pneg %p89
        $region18: #{cnn_mnist_forward.3} parent=11 // pred_check_branch
          %245 = sbr.rel (%p243) target = $region20
        $region19: #{cnn_mnist_forward.3} parent=11 // pred_region
          _
        $region20: #{cnn_mnist_forward.3} parent=11 // pred_fallthru
          _
        // Predicated region
        $region21: #{cnn_mnist_forward.3} parent=11 // pred_check
          %p246 = pneg %p110
        $region22: #{cnn_mnist_forward.3} parent=11 // pred_check_branch
          %248 = sbr.rel (%p246) target = $region24
        $region23: #{cnn_mnist_forward.3} parent=11 // pred_region
          _
        $region24: #{cnn_mnist_forward.3} parent=11 // pred_fallthru
          _
        // Predicated region
        $region25: #{cnn_mnist_forward.3} parent=11 // pred_check
          %p249 = pneg %p131
        $region26: #{cnn_mnist_forward.3} parent=11 // pred_check_branch
          %251 = sbr.rel (%p249) target = $region28
        $region27: #{cnn_mnist_forward.3} parent=11 // pred_region
          _
        $region28: #{cnn_mnist_forward.3} parent=11 // pred_fallthru
          _
        // Predicated region
        $region29: #{cnn_mnist_forward.3} parent=11 // pred_check
          %p252 = pneg %p152
        $region30: #{cnn_mnist_forward.3} parent=11 // pred_check_branch
          %254 = sbr.rel (%p252) target = $region32
        $region31: #{cnn_mnist_forward.3} parent=11 // pred_region
          _
        $region32: #{cnn_mnist_forward.3} parent=11 // pred_fallthru
          _
        // Predicated region
        $region33: #{cnn_mnist_forward.3} parent=11 // pred_check
          %p255 = pneg %p173
        $region34: #{cnn_mnist_forward.3} parent=11 // pred_check_branch
          %257 = sbr.rel (%p255) target = $region36
        $region35: #{cnn_mnist_forward.3} parent=11 // pred_region
          _
        $region36: #{cnn_mnist_forward.3} parent=11 // pred_fallthru
          _
      $region12: #{cnn_mnist_forward.3} parent=5 // pred_fallthru
        _
      %p258 = scmp.lt.s32.totalorder %s21, 2
      // Predicated region
      $region37: #{cnn_mnist_forward.3} parent=5 // pred_check
        %p259 = pneg %p258
      $region38: #{cnn_mnist_forward.3} parent=5 // pred_check_branch
        %261 = sbr.rel (%p259) target = $region40
      $region39: #{cnn_mnist_forward.3} parent=5 // pred_region
        // Predicated region
        $region41: #{cnn_mnist_forward.3} parent=39 // pred_check
          %p262 = pneg %p41
        $region42: #{cnn_mnist_forward.3} parent=39 // pred_check_branch
          %264 = sbr.rel (%p262) target = $region44
        $region43: #{cnn_mnist_forward.3} parent=39 // pred_region
          %s265 = smul.u32 8, %s21
          %p266 = scmp.lt.s32.totalorder %s265, 15
          %s267 = scalar_select %p266, %s265, 15
          %s268 = smul.addr %s267, 2
          %s269 = smul.addr %s268, 4
          %s270 = scalar_lea.vmem %s0, %s269
          %s271 = smul.u32 8, %s21
        $region44: #{cnn_mnist_forward.3} parent=39 // pred_fallthru
          _
      $region40: #{cnn_mnist_forward.3} parent=5 // pred_fallthru
        _
      %p272 = scmp.le.s32.totalorder 1, %s21
      %p273 = scmp.lt.s32.totalorder %s21, 3
      %p274 = pnand %p272, %p273
      %p275 = pneg %p274
      // Predicated region
      $region45: #{cnn_mnist_forward.3} parent=5 // pred_check
        _
      $region46: #{cnn_mnist_forward.3} parent=5 // pred_check_branch
        %277 = sbr.rel (%p274) target = $region48
      $region47: #{cnn_mnist_forward.3} parent=5 // pred_region
        %s278 = ssub.s32 %s21, 1
        %s279 = smul.u32 8, %s26
        %p280 = scmp.lt.s32.totalorder %s279, 15
        %s281 = scalar_select %p280, %s279, 15
        %s282 = smul.addr %s281, 2
        %s283 = smul.addr %s282, 4
        %s284 = scalar_lea.vmem %s0, %s283
        %p285 = pneg %p47
        %p286 = pneg %p44
        %p287 = pneg %p68
        %p288 = pneg %p65
        %p289 = pneg %p89
        %p290 = pneg %p86
        %p291 = pneg %p110
        %p292 = pneg %p107
        %p293 = pneg %p131
        %p294 = pneg %p128
        %p295 = pneg %p152
        %p296 = pneg %p149
        %p297 = pneg %p173
        %p298 = pneg %p170
        %p299 = pneg %p199
        %p300 = pneg %p196
        %s301 = sand.u32 %s186, 1
        %s302 = scalar_lea.sflag [#allocation5], %s301
        %s303 = sand.u32 %s186, 1
        %s304 = scalar_lea.vmem [#allocation4], %s303
        %p305 = pneg %p225
        %p306 = pneg %p222
        %s307 = sand.u32 %s212, 1
        %s308 = scalar_lea.sflag [#allocation7], %s307
        %s309 = sand.u32 %s212, 1
        %s310 = smul.addr %s309, 16
        %s311 = scalar_lea.vmem [#allocation6], %s310
        %s312 = smul.u32 8, %s26
        %p313 = scmp.lt.s32.totalorder %s312, 15
        %s314 = scalar_select %p313, %s312, 15
        %s315 = smul.addr %s314, 2
        %s316 = smul.addr %s315, 4
        %s317 = scalar_lea.vmem %s0, %s316
        %s318 = smul.u32 8, %s26
        %v320 = vld [vmem:[%s317] sm:$0xff]
        %v321 = vld [vmem:[%s317 + $0x8] sm:$0xff]
        %v322 = vld [vmem:[%s317 + $0x10] sm:$0xff]
        %v323 = vld [vmem:[%s317 + $0x18] sm:$0xff]
        %v324 = vld [vmem:[%s317 + $0x20] sm:$0xff]
        %v325 = vld [vmem:[%s317 + $0x28] sm:$0xff]
        %v326 = vld [vmem:[%s317 + $0x30] sm:$0xff]
        %v327 = vld [vmem:[%s317 + $0x38] sm:$0xff]
        %v328 = vld [vmem:[%s1] sm:$0xf]
        %v329 = vld [vmem:[%s1 + $0x4] sm:$0xf]
        %v330 = vld [vmem:[%s1 + $0x8] sm:$0xf]
        %v331 = vld [vmem:[%s1 + $0xc] sm:$0xf]
        %v332 = vld [vmem:[%s1 + $0x10] sm:$0xf]
        %v333 = vld [vmem:[%s1 + $0x14] sm:$0xf]
        %v334 = vld [vmem:[%s1 + $0x18] sm:$0xf]
        %v335 = vld [vmem:[%s1 + $0x1c] sm:$0xf]
        %v336 = vld [vmem:[%s1 + $0x20] sm:$0xf]
        %v337 = vld [vmem:[%s1 + $0x24] sm:$0xf]
        %v338 = vld [vmem:[%s1 + $0x28] sm:$0xf]
        %v339 = vld [vmem:[%s1 + $0x2c] sm:$0xf]
        %v340 = vld [vmem:[%s1 + $0x30] sm:$0xf]
        %v341 = vld [vmem:[%s1 + $0x34] sm:$0xf]
        %v342 = vld [vmem:[%s1 + $0x38] sm:$0xf]
        %v343 = vld [vmem:[%s1 + $0x3c] sm:$0xf]
        %v344 = vld [vmem:[%s1 + $0x40] sm:$0xf]
        %v345 = vld [vmem:[%s1 + $0x44] sm:$0xf]
        %v346 = vld [vmem:[%s1 + $0x48] sm:$0xf]
        %v347 = vld [vmem:[%s1 + $0x4c] sm:$0xf]
        %v348 = vld [vmem:[%s1 + $0x50] sm:$0xf]
        %v349 = vld [vmem:[%s1 + $0x54] sm:$0xf]
        %v350 = vld [vmem:[%s1 + $0x58] sm:$0xf]
        %v351 = vld [vmem:[%s1 + $0x5c] sm:$0xf]
        %v352 = vld [vmem:[%s1 + $0x60] sm:$0xf]
        %v353 = vld [vmem:[%s1 + $0x64] sm:$0xf]
        %v354 = vld [vmem:[%s1 + $0x68] sm:$0xf]
        %v355 = vld [vmem:[%s1 + $0x6c] sm:$0xf]
        %v356 = vld [vmem:[%s1 + $0x70] sm:$0xf]
        %v357 = vld [vmem:[%s1 + $0x74] sm:$0xf]
        %v358 = vld [vmem:[%s1 + $0x78] sm:$0xf]
        %v359 = vld [vmem:[%s1 + $0x7c] sm:$0x1]
        %v360 = vld [vmem:[%s2] sm:$0x1]
        %v362 = vlaneseq
        %v363 = vshrl.u32 %v362, 7
        %v364 = vsub.s32 0, %v363
        %v365 = vrot.slane %v360, %v364
        %v375 = vunpack.c.l.b16 %v320
        %v376 = vunpack.c.h.b16 %v320
        %v377 = vunpack.c.l.b16 %v321
        %v378 = vunpack.c.h.b16 %v321
        %v379 = vunpack.c.l.b16 %v322
        %v380 = vunpack.c.h.b16 %v322
        %v381 = vunpack.c.l.b16 %v323
        %v382 = vunpack.c.h.b16 %v323
        %v383 = vunpack.c.l.b16 %v324
        %v384 = vunpack.c.h.b16 %v324
        %v385 = vunpack.c.l.b16 %v325
        %v386 = vunpack.c.h.b16 %v325
        %v387 = vunpack.c.l.b16 %v326
        %v388 = vunpack.c.h.b16 %v326
        %v389 = vunpack.c.l.b16 %v327
        %v390 = vunpack.c.h.b16 %v327
        %v391 = vpack.c.b16 %v377, %v375
        %v392 = vpack.c.b16 %v378, %v376
        %v393 = vpack.c.b16 %v381, %v379
        %v394 = vpack.c.b16 %v382, %v380
        %v395 = vpack.c.b16 %v385, %v383
        %v396 = vpack.c.b16 %v386, %v384
        %v397 = vpack.c.b16 %v389, %v387
        %v398 = vpack.c.b16 %v390, %v388
        %v435 = vunpack.c.l.b16 %v328
        %v436 = vunpack.c.l.b16 %v329
        %v437 = vunpack.c.l.b16 %v330
        %v438 = vunpack.c.l.b16 %v331
        %v439 = vunpack.c.l.b16 %v332
        %v440 = vunpack.c.l.b16 %v333
        %v441 = vunpack.c.l.b16 %v334
        %v442 = vunpack.c.l.b16 %v335
        %v443 = vunpack.c.l.b16 %v336
        %v444 = vunpack.c.l.b16 %v337
        %v445 = vunpack.c.l.b16 %v338
        %v446 = vunpack.c.l.b16 %v339
        %v447 = vunpack.c.l.b16 %v340
        %v448 = vunpack.c.l.b16 %v341
        %v449 = vunpack.c.l.b16 %v342
        %v450 = vunpack.c.l.b16 %v343
        %v451 = vunpack.c.l.b16 %v344
        %v452 = vunpack.c.l.b16 %v345
        %v453 = vunpack.c.l.b16 %v346
        %v454 = vunpack.c.l.b16 %v347
        %v455 = vunpack.c.l.b16 %v348
        %v456 = vunpack.c.l.b16 %v349
        %v457 = vunpack.c.l.b16 %v350
        %v458 = vunpack.c.l.b16 %v351
        %v459 = vunpack.c.l.b16 %v352
        %v460 = vunpack.c.l.b16 %v353
        %v461 = vunpack.c.l.b16 %v354
        %v462 = vunpack.c.l.b16 %v355
        %v463 = vunpack.c.l.b16 %v356
        %v464 = vunpack.c.l.b16 %v357
        %v465 = vunpack.c.l.b16 %v358
        %v466 = vunpack.c.l.b16 %v359
        %v467 = vpack.c.b16 %v436, %v435
        %v468 = vpack.c.b16 %v438, %v437
        %v469 = vpack.c.b16 %v440, %v439
        %v470 = vpack.c.b16 %v442, %v441
        %v471 = vpack.c.b16 %v444, %v443
        %v472 = vpack.c.b16 %v446, %v445
        %v473 = vpack.c.b16 %v448, %v447
        %v474 = vpack.c.b16 %v450, %v449
        %v475 = vpack.c.b16 %v452, %v451
        %v476 = vpack.c.b16 %v454, %v453
        %v477 = vpack.c.b16 %v456, %v455
        %v478 = vpack.c.b16 %v458, %v457
        %v479 = vpack.c.b16 %v460, %v459
        %v480 = vpack.c.b16 %v462, %v461
        %v481 = vpack.c.b16 %v464, %v463
        %v482 = vpack.c.b16 %v466, %v465
        %vm498 = vcmask 998400
        %v500 = vsel %vm498, %v392, 0
        %v503 = vsel %vm498, %v394, 0
        %v506 = vsel %vm498, %v396, 0
        %v509 = vsel %vm498, %v398, 0
        %vm511 = vcmask 1044480
        %v513 = vsel %vm511, %v482, 0
        %515 = vmatprep.subr.bf16.mxu0 0
        %516 = vmatpush1.bf16.msra.mxu0 %v467
        %517 = vmatprep.subr.bf16.mxu0 0
        %518 = vmatpush1.bf16.msra.mxu0 %v468
        %519 = vmatprep.subr.bf16.mxu0 0
        %520 = vmatpush1.bf16.msra.mxu0 %v469
        %521 = vmatprep.subr.bf16.mxu0 0
        %522 = vmatpush1.bf16.msra.mxu0 %v470
        %523 = vmatprep.subr.bf16.mxu0 0
        %524 = vmatpush1.bf16.msra.mxu0 %v471
        %525 = vmatprep.subr.bf16.mxu0 0
        %526 = vmatpush1.bf16.msra.mxu0 %v472
        %527 = vmatprep.subr.bf16.mxu0 0
        %528 = vmatpush1.bf16.msra.mxu0 %v473
        %529 = vmatprep.subr.bf16.mxu0 0
        %530 = vmatpush1.bf16.msra.mxu0 %v474
        %531 = vmatprep.subr.bf16.mxu0 0
        %532 = vmatpush1.bf16.msra.mxu0 %v475
        %533 = vmatprep.subr.bf16.mxu0 0
        %534 = vmatpush1.bf16.msra.mxu0 %v476
        %535 = vmatprep.subr.bf16.mxu0 0
        %536 = vmatpush1.bf16.msra.mxu0 %v477
        %537 = vmatprep.subr.bf16.mxu0 0
        %538 = vmatpush1.bf16.msra.mxu0 %v478
        %539 = vmatprep.subr.bf16.mxu0 0
        %540 = vmatpush1.bf16.msra.mxu0 %v479
        %541 = vmatprep.subr.bf16.mxu0 0
        %542 = vmatpush1.bf16.msra.mxu0 %v480
        %543 = vmatprep.subr.bf16.mxu0 0
        %544 = vmatpush1.bf16.msra.mxu0 %v481
        %545 = vmatprep.subr.bf16.mxu0 0
        %546 = vmatpush1.bf16.msra.mxu0 %v513
        %547 = vmatprep.mubr.bf16.mxu0 %v500
        %548 = vmatmul.mubr.bf16.gmra.mrb[0].mxu0 %v391
        %v549 = vpop.f32.mrb[0].mxu0
        %v550 = vadd.f32 %v365, %v549
        %v551 = vpop.f32.mrb[0].mxu0
        %v552 = vpop.f32.mrb[0].mxu0
        %v553 = vadd.f32 %v365, %v552
        %v554 = vpop.f32.mrb[0].mxu0
        %555 = vmatprep.mubr.bf16.mxu0 %v503
        %556 = vmatmul.mubr.bf16.gmra.mrb[0].mxu0 %v393
        %v557 = vpop.f32.mrb[0].mxu0
        %v558 = vadd.f32 %v365, %v557
        %v559 = vpop.f32.mrb[0].mxu0
        %v560 = vpop.f32.mrb[0].mxu0
        %v561 = vadd.f32 %v365, %v560
        %v562 = vpop.f32.mrb[0].mxu0
        %563 = vmatprep.mubr.bf16.mxu0 %v506
        %564 = vmatmul.mubr.bf16.gmra.mrb[0].mxu0 %v395
        %v565 = vpop.f32.mrb[0].mxu0
        %v566 = vadd.f32 %v365, %v565
        %v567 = vpop.f32.mrb[0].mxu0
        %v568 = vpop.f32.mrb[0].mxu0
        %v569 = vadd.f32 %v365, %v568
        %v570 = vpop.f32.mrb[0].mxu0
        %571 = vmatprep.mubr.bf16.mxu0 %v509
        %572 = vmatmul.mubr.bf16.gmra.mrb[0].mxu0 %v397
        %v573 = vpop.f32.mrb[0].mxu0
        %v574 = vadd.f32 %v365, %v573
        %v575 = vpop.f32.mrb[0].mxu0
        %v576 = vpop.f32.mrb[0].mxu0
        %v577 = vadd.f32 %v365, %v576
        %v578 = vpop.f32.mrb[0].mxu0
        %579 = vdwg.mxu0
        %vm580 = vcmask 261120
        %581 = vst.msk [vmem:[#allocation2] sm:$0xff] %vm580, %v550
        %582 = vst.msk [vmem:[#allocation2 + $0x8] sm:$0xff] %vm580, %v553
        %583 = vst.msk [vmem:[#allocation2 + $0x10] sm:$0xff] %vm580, %v558
        %584 = vst.msk [vmem:[#allocation2 + $0x18] sm:$0xff] %vm580, %v561
        %585 = vst.msk [vmem:[#allocation2 + $0x20] sm:$0xff] %vm580, %v566
        %586 = vst.msk [vmem:[#allocation2 + $0x28] sm:$0xff] %vm580, %v569
        %587 = vst.msk [vmem:[#allocation2 + $0x30] sm:$0xff] %vm580, %v574
        %588 = vst.msk [vmem:[#allocation2 + $0x38] sm:$0xff] %vm580, %v577
        %v589 = vld [vmem:[#allocation2] ss:$2 sm:$0xff]
        %s590 = scalar_lea.vmem [#allocation2], 16
        %v591 = vld [vmem:[%s590] ss:$2 sm:$0xff]
        %s592 = scalar_lea.vmem [#allocation2], 32
        %v593 = vld [vmem:[%s592] ss:$2 sm:$0xff]
        %s594 = scalar_lea.vmem [#allocation2], 48
        %v595 = vld [vmem:[%s594] ss:$2 sm:$0xff]
        %s596 = scalar_lea.vmem [#allocation2], 1
        %v597 = vld [vmem:[%s596] ss:$2 sm:$0xff]
        %s598 = scalar_lea.vmem [#allocation2], 17
        %v599 = vld [vmem:[%s598] ss:$2 sm:$0xff]
        %s600 = scalar_lea.vmem [#allocation2], 33
        %v601 = vld [vmem:[%s600] ss:$2 sm:$0xff]
        %s602 = scalar_lea.vmem [#allocation2], 49
        %v603 = vld [vmem:[%s602] ss:$2 sm:$0xff]
        %v604 = vmax.f32 %v589, %v597
        %v605 = vmax.f32 %v591, %v599
        %v606 = vmax.f32 %v593, %v601
        %v607 = vmax.f32 %v595, %v603
        %608 = vst.msk [vmem:[#allocation3] sm:$0xff] %vm580, %v604
        %609 = vst.msk [vmem:[#allocation3 + $0x8] sm:$0xff] %vm580, %v605
        %610 = vst.msk [vmem:[#allocation3 + $0x10] sm:$0xff] %vm580, %v606
        %611 = vst.msk [vmem:[#allocation3 + $0x18] sm:$0xff] %vm580, %v607
        %v612 = vld [vmem:[%s4] sm:$0x1]
        %v613 = vadd.f32 %v612, 0.0
        %v614 = vld [vmem:[#allocation3] ss:$32 sm:$0x1]
        %s615 = scalar_lea.vmem [#allocation3], 4
        %v616 = vld [vmem:[%s615] ss:$32 sm:$0x1]
        %v617 = vmax.f32 %v614, %v616
        %v618 = vmax.f32 %v617, 0.0
        %vm619 = vcmask 253952
        %620 = vst.msk [vmem:[%s311] sm:$0x1] %vm619, %v618
        %v621 = vld [vmem:[%s3] sm:$0xff]
        %v622 = vld [vmem:[%s3 + $0x8] sm:$0xff]
        %v623 = vld [vmem:[%s3 + $0x10] sm:$0xff]
        %v624 = vld [vmem:[%s3 + $0x18] sm:$0xff]
        %v626 = vsel %vm580, %v618, 0
        %628 = vmatprep.subr.mxu0 0.0
        %629 = vmatpush1.msra.mxu0 %v621
        %630 = vmatprep.subr.mxu0 0.0
        %631 = vmatpush1.msra.mxu0 %v622
        %632 = vmatprep.subr.mxu0 0.0
        %633 = vmatpush1.msra.mxu0 %v623
        %634 = vmatprep.subr.mxu0 0.0
        %635 = vmatpush1.msra.mxu0 %v624
        %636 = vmatprep.subr.mxu0 0.0
        %637 = vmatpush1.msra.mxu0 0.0
        %638 = vmatprep.subr.mxu0 0.0
        %639 = vmatpush1.msra.mxu0 0.0
        %640 = vmatprep.subr.mxu0 0.0
        %641 = vmatpush1.msra.mxu0 0.0
        %642 = vmatprep.subr.mxu0 0.0
        %643 = vmatpush1.msra.mxu0 0.0
        %644 = vmatprep.subr.mxu0 0.0
        %645 = vmatpush1.msra.mxu0 0.0
        %646 = vmatprep.subr.mxu0 0.0
        %647 = vmatpush1.msra.mxu0 0.0
        %648 = vmatprep.subr.mxu0 0.0
        %649 = vmatpush1.msra.mxu0 0.0
        %650 = vmatprep.subr.mxu0 0.0
        %651 = vmatpush1.msra.mxu0 0.0
        %652 = vmatprep.subr.mxu0 0.0
        %653 = vmatpush1.msra.mxu0 0.0
        %654 = vmatprep.subr.mxu0 0.0
        %655 = vmatpush1.msra.mxu0 0.0
        %656 = vmatprep.subr.mxu0 0.0
        %657 = vmatpush1.msra.mxu0 0.0
        %658 = vmatprep.subr.mxu0 0.0
        %659 = vmatpush1.msra.mxu0 0.0
        %660 = vmatprep.subr.mxu0 0.0
        %661 = vmatpush1.msra.mxu0 0.0
        %662 = vmatprep.subr.mxu0 0.0
        %663 = vmatpush1.msra.mxu0 0.0
        %664 = vmatprep.subr.mxu0 0.0
        %665 = vmatpush1.msra.mxu0 0.0
        %666 = vmatprep.subr.mxu0 0.0
        %667 = vmatpush1.msra.mxu0 0.0
        %668 = vmatprep.subr.mxu0 0.0
        %669 = vmatpush1.msra.mxu0 0.0
        %670 = vmatprep.subr.mxu0 0.0
        %671 = vmatpush1.msra.mxu0 0.0
        %672 = vmatprep.subr.mxu0 0.0
        %673 = vmatpush1.msra.mxu0 0.0
        %674 = vmatprep.subr.mxu0 0.0
        %675 = vmatpush1.msra.mxu0 0.0
        %676 = vmatprep.subr.mxu0 0.0
        %677 = vmatpush1.msra.mxu0 0.0
        %678 = vmatprep.subr.mxu0 0.0
        %679 = vmatpush1.msra.mxu0 0.0
        %680 = vmatprep.subr.mxu0 0.0
        %681 = vmatpush1.msra.mxu0 0.0
        %682 = vmatprep.subr.mxu0 0.0
        %683 = vmatpush1.msra.mxu0 0.0
        %684 = vmatprep.subr.mxu0 0.0
        %685 = vmatpush1.msra.mxu0 0.0
        %686 = vmatprep.subr.mxu0 0.0
        %687 = vmatpush1.msra.mxu0 0.0
        %688 = vmatprep.subr.mxu0 0.0
        %689 = vmatpush1.msra.mxu0 0.0
        %690 = vmatprep.subr.mxu0 0.0
        %691 = vmatpush1.msra.mxu0 0.0
        %692 = vmatprep.mubr.f32.mxu0 0.0
        %693 = vmatmul.mubr.f32.gmra.mrb[0].mxu0 %v626
        %v694 = vpop.f32.mrb[0].mxu0
        %v695 = vadd.f32 0.0, %v694
        %v696 = vpop.f32.mrb[0].mxu0
        %697 = vdwg.mxu0
        %v698 = vadd.f32 %v613, %v695
        %s699 = scalar_lea.vmem [#allocation3], 1
        %v700 = vld [vmem:[%s699] ss:$32 sm:$0x1]
        %s701 = scalar_lea.vmem [#allocation3], 5
        %v702 = vld [vmem:[%s701] ss:$32 sm:$0x1]
        %v703 = vmax.f32 %v700, %v702
        %v704 = vmax.f32 %v703, 0.0
        %s705 = scalar_lea.vmem %s311, 1 [#allocation6]
        %706 = vst.msk [vmem:[%s705] sm:$0x1] %vm619, %v704
        %s707 = scalar_lea.vmem %s3, 32
        %v708 = vld [vmem:[%s707] sm:$0xff]
        %v709 = vld [vmem:[%s707 + $0x8] sm:$0xff]
        %v710 = vld [vmem:[%s707 + $0x10] sm:$0xff]
        %v711 = vld [vmem:[%s707 + $0x18] sm:$0xff]
        %v713 = vsel %vm580, %v704, 0
        %715 = vmatprep.subr.mxu0 0.0
        %716 = vmatpush1.msra.mxu0 %v708
        %717 = vmatprep.subr.mxu0 0.0
        %718 = vmatpush1.msra.mxu0 %v709
        %719 = vmatprep.subr.mxu0 0.0
        %720 = vmatpush1.msra.mxu0 %v710
        %721 = vmatprep.subr.mxu0 0.0
        %722 = vmatpush1.msra.mxu0 %v711
        %723 = vmatprep.subr.mxu0 0.0
        %724 = vmatpush1.msra.mxu0 0.0
        %725 = vmatprep.subr.mxu0 0.0
        %726 = vmatpush1.msra.mxu0 0.0
        %727 = vmatprep.subr.mxu0 0.0
        %728 = vmatpush1.msra.mxu0 0.0
        %729 = vmatprep.subr.mxu0 0.0
        %730 = vmatpush1.msra.mxu0 0.0
        %731 = vmatprep.subr.mxu0 0.0
        %732 = vmatpush1.msra.mxu0 0.0
        %733 = vmatprep.subr.mxu0 0.0
        %734 = vmatpush1.msra.mxu0 0.0
        %735 = vmatprep.subr.mxu0 0.0
        %736 = vmatpush1.msra.mxu0 0.0
        %737 = vmatprep.subr.mxu0 0.0
        %738 = vmatpush1.msra.mxu0 0.0
        %739 = vmatprep.subr.mxu0 0.0
        %740 = vmatpush1.msra.mxu0 0.0
        %741 = vmatprep.subr.mxu0 0.0
        %742 = vmatpush1.msra.mxu0 0.0
        %743 = vmatprep.subr.mxu0 0.0
        %744 = vmatpush1.msra.mxu0 0.0
        %745 = vmatprep.subr.mxu0 0.0
        %746 = vmatpush1.msra.mxu0 0.0
        %747 = vmatprep.subr.mxu0 0.0
        %748 = vmatpush1.msra.mxu0 0.0
        %749 = vmatprep.subr.mxu0 0.0
        %750 = vmatpush1.msra.mxu0 0.0
        %751 = vmatprep.subr.mxu0 0.0
        %752 = vmatpush1.msra.mxu0 0.0
        %753 = vmatprep.subr.mxu0 0.0
        %754 = vmatpush1.msra.mxu0 0.0
        %755 = vmatprep.subr.mxu0 0.0
        %756 = vmatpush1.msra.mxu0 0.0
        %757 = vmatprep.subr.mxu0 0.0
        %758 = vmatpush1.msra.mxu0 0.0
        %759 = vmatprep.subr.mxu0 0.0
        %760 = vmatpush1.msra.mxu0 0.0
        %761 = vmatprep.subr.mxu0 0.0
        %762 = vmatpush1.msra.mxu0 0.0
        %763 = vmatprep.subr.mxu0 0.0
        %764 = vmatpush1.msra.mxu0 0.0
        %765 = vmatprep.subr.mxu0 0.0
        %766 = vmatpush1.msra.mxu0 0.0
        %767 = vmatprep.subr.mxu0 0.0
        %768 = vmatpush1.msra.mxu0 0.0
        %769 = vmatprep.subr.mxu0 0.0
        %770 = vmatpush1.msra.mxu0 0.0
        %771 = vmatprep.subr.mxu0 0.0
        %772 = vmatpush1.msra.mxu0 0.0
        %773 = vmatprep.subr.mxu0 0.0
        %774 = vmatpush1.msra.mxu0 0.0
        %775 = vmatprep.subr.mxu0 0.0
        %776 = vmatpush1.msra.mxu0 0.0
        %777 = vmatprep.subr.mxu0 0.0
        %778 = vmatpush1.msra.mxu0 0.0
        %779 = vmatprep.mubr.f32.mxu0 0.0
        %780 = vmatmul.mubr.f32.gmra.mrb[0].mxu0 %v713
        %v781 = vpop.f32.mrb[0].mxu0
        %v782 = vadd.f32 0.0, %v781
        %v783 = vpop.f32.mrb[0].mxu0
        %784 = vdwg.mxu0
        %v785 = vadd.f32 %v698, %v782
        %s786 = scalar_lea.vmem [#allocation3], 2
        %v787 = vld [vmem:[%s786] ss:$32 sm:$0x1]
        %s788 = scalar_lea.vmem [#allocation3], 6
        %v789 = vld [vmem:[%s788] ss:$32 sm:$0x1]
        %v790 = vmax.f32 %v787, %v789
        %v791 = vmax.f32 %v790, 0.0
        %s792 = scalar_lea.vmem %s311, 2 [#allocation6]
        %793 = vst.msk [vmem:[%s792] sm:$0x1] %vm619, %v791
        %s794 = scalar_lea.vmem %s3, 64
        %v795 = vld [vmem:[%s794] sm:$0xff]
        %v796 = vld [vmem:[%s794 + $0x8] sm:$0xff]
        %v797 = vld [vmem:[%s794 + $0x10] sm:$0xff]
        %v798 = vld [vmem:[%s794 + $0x18] sm:$0xff]
        %v800 = vsel %vm580, %v791, 0
        %802 = vmatprep.subr.mxu0 0.0
        %803 = vmatpush1.msra.mxu0 %v795
        %804 = vmatprep.subr.mxu0 0.0
        %805 = vmatpush1.msra.mxu0 %v796
        %806 = vmatprep.subr.mxu0 0.0
        %807 = vmatpush1.msra.mxu0 %v797
        %808 = vmatprep.subr.mxu0 0.0
        %809 = vmatpush1.msra.mxu0 %v798
        %810 = vmatprep.subr.mxu0 0.0
        %811 = vmatpush1.msra.mxu0 0.0
        %812 = vmatprep.subr.mxu0 0.0
        %813 = vmatpush1.msra.mxu0 0.0
        %814 = vmatprep.subr.mxu0 0.0
        %815 = vmatpush1.msra.mxu0 0.0
        %816 = vmatprep.subr.mxu0 0.0
        %817 = vmatpush1.msra.mxu0 0.0
        %818 = vmatprep.subr.mxu0 0.0
        %819 = vmatpush1.msra.mxu0 0.0
        %820 = vmatprep.subr.mxu0 0.0
        %821 = vmatpush1.msra.mxu0 0.0
        %822 = vmatprep.subr.mxu0 0.0
        %823 = vmatpush1.msra.mxu0 0.0
        %824 = vmatprep.subr.mxu0 0.0
        %825 = vmatpush1.msra.mxu0 0.0
        %826 = vmatprep.subr.mxu0 0.0
        %827 = vmatpush1.msra.mxu0 0.0
        %828 = vmatprep.subr.mxu0 0.0
        %829 = vmatpush1.msra.mxu0 0.0
        %830 = vmatprep.subr.mxu0 0.0
        %831 = vmatpush1.msra.mxu0 0.0
        %832 = vmatprep.subr.mxu0 0.0
        %833 = vmatpush1.msra.mxu0 0.0
        %834 = vmatprep.subr.mxu0 0.0
        %835 = vmatpush1.msra.mxu0 0.0
        %836 = vmatprep.subr.mxu0 0.0
        %837 = vmatpush1.msra.mxu0 0.0
        %838 = vmatprep.subr.mxu0 0.0
        %839 = vmatpush1.msra.mxu0 0.0
        %840 = vmatprep.subr.mxu0 0.0
        %841 = vmatpush1.msra.mxu0 0.0
        %842 = vmatprep.subr.mxu0 0.0
        %843 = vmatpush1.msra.mxu0 0.0
        %844 = vmatprep.subr.mxu0 0.0
        %845 = vmatpush1.msra.mxu0 0.0
        %846 = vmatprep.subr.mxu0 0.0
        %847 = vmatpush1.msra.mxu0 0.0
        %848 = vmatprep.subr.mxu0 0.0
        %849 = vmatpush1.msra.mxu0 0.0
        %850 = vmatprep.subr.mxu0 0.0
        %851 = vmatpush1.msra.mxu0 0.0
        %852 = vmatprep.subr.mxu0 0.0
        %853 = vmatpush1.msra.mxu0 0.0
        %854 = vmatprep.subr.mxu0 0.0
        %855 = vmatpush1.msra.mxu0 0.0
        %856 = vmatprep.subr.mxu0 0.0
        %857 = vmatpush1.msra.mxu0 0.0
        %858 = vmatprep.subr.mxu0 0.0
        %859 = vmatpush1.msra.mxu0 0.0
        %860 = vmatprep.subr.mxu0 0.0
        %861 = vmatpush1.msra.mxu0 0.0
        %862 = vmatprep.subr.mxu0 0.0
        %863 = vmatpush1.msra.mxu0 0.0
        %864 = vmatprep.subr.mxu0 0.0
        %865 = vmatpush1.msra.mxu0 0.0
        %866 = vmatprep.mubr.f32.mxu0 0.0
        %867 = vmatmul.mubr.f32.gmra.mrb[0].mxu0 %v800
        %v868 = vpop.f32.mrb[0].mxu0
        %v869 = vadd.f32 0.0, %v868
        %v870 = vpop.f32.mrb[0].mxu0
        %871 = vdwg.mxu0
        %v872 = vadd.f32 %v785, %v869
        %s873 = scalar_lea.vmem [#allocation3], 3
        %v874 = vld [vmem:[%s873] ss:$32 sm:$0x1]
        %s875 = scalar_lea.vmem [#allocation3], 7
        %v876 = vld [vmem:[%s875] ss:$32 sm:$0x1]
        %v877 = vmax.f32 %v874, %v876
        %v878 = vmax.f32 %v877, 0.0
        %s879 = scalar_lea.vmem %s311, 3 [#allocation6]
        %880 = vst.msk [vmem:[%s879] sm:$0x1] %vm619, %v878
        %s881 = scalar_lea.vmem %s3, 96
        %v882 = vld [vmem:[%s881] sm:$0xff]
        %v883 = vld [vmem:[%s881 + $0x8] sm:$0xff]
        %v884 = vld [vmem:[%s881 + $0x10] sm:$0xff]
        %v885 = vld [vmem:[%s881 + $0x18] sm:$0xff]
        %v887 = vsel %vm580, %v878, 0
        %889 = vmatprep.subr.mxu0 0.0
        %890 = vmatpush1.msra.mxu0 %v882
        %891 = vmatprep.subr.mxu0 0.0
        %892 = vmatpush1.msra.mxu0 %v883
        %893 = vmatprep.subr.mxu0 0.0
        %894 = vmatpush1.msra.mxu0 %v884
        %895 = vmatprep.subr.mxu0 0.0
        %896 = vmatpush1.msra.mxu0 %v885
        %897 = vmatprep.subr.mxu0 0.0
        %898 = vmatpush1.msra.mxu0 0.0
        %899 = vmatprep.subr.mxu0 0.0
        %900 = vmatpush1.msra.mxu0 0.0
        %901 = vmatprep.subr.mxu0 0.0
        %902 = vmatpush1.msra.mxu0 0.0
        %903 = vmatprep.subr.mxu0 0.0
        %904 = vmatpush1.msra.mxu0 0.0
        %905 = vmatprep.subr.mxu0 0.0
        %906 = vmatpush1.msra.mxu0 0.0
        %907 = vmatprep.subr.mxu0 0.0
        %908 = vmatpush1.msra.mxu0 0.0
        %909 = vmatprep.subr.mxu0 0.0
        %910 = vmatpush1.msra.mxu0 0.0
        %911 = vmatprep.subr.mxu0 0.0
        %912 = vmatpush1.msra.mxu0 0.0
        %913 = vmatprep.subr.mxu0 0.0
        %914 = vmatpush1.msra.mxu0 0.0
        %915 = vmatprep.subr.mxu0 0.0
        %916 = vmatpush1.msra.mxu0 0.0
        %917 = vmatprep.subr.mxu0 0.0
        %918 = vmatpush1.msra.mxu0 0.0
        %919 = vmatprep.subr.mxu0 0.0
        %920 = vmatpush1.msra.mxu0 0.0
        %921 = vmatprep.subr.mxu0 0.0
        %922 = vmatpush1.msra.mxu0 0.0
        %923 = vmatprep.subr.mxu0 0.0
        %924 = vmatpush1.msra.mxu0 0.0
        %925 = vmatprep.subr.mxu0 0.0
        %926 = vmatpush1.msra.mxu0 0.0
        %927 = vmatprep.subr.mxu0 0.0
        %928 = vmatpush1.msra.mxu0 0.0
        %929 = vmatprep.subr.mxu0 0.0
        %930 = vmatpush1.msra.mxu0 0.0
        %931 = vmatprep.subr.mxu0 0.0
        %932 = vmatpush1.msra.mxu0 0.0
        %933 = vmatprep.subr.mxu0 0.0
        %934 = vmatpush1.msra.mxu0 0.0
        %935 = vmatprep.subr.mxu0 0.0
        %936 = vmatpush1.msra.mxu0 0.0
        %937 = vmatprep.subr.mxu0 0.0
        %938 = vmatpush1.msra.mxu0 0.0
        %939 = vmatprep.subr.mxu0 0.0
        %940 = vmatpush1.msra.mxu0 0.0
        %941 = vmatprep.subr.mxu0 0.0
        %942 = vmatpush1.msra.mxu0 0.0
        %943 = vmatprep.subr.mxu0 0.0
        %944 = vmatpush1.msra.mxu0 0.0
        %945 = vmatprep.subr.mxu0 0.0
        %946 = vmatpush1.msra.mxu0 0.0
        %947 = vmatprep.subr.mxu0 0.0
        %948 = vmatpush1.msra.mxu0 0.0
        %949 = vmatprep.subr.mxu0 0.0
        %950 = vmatpush1.msra.mxu0 0.0
        %951 = vmatprep.subr.mxu0 0.0
        %952 = vmatpush1.msra.mxu0 0.0
        %953 = vmatprep.mubr.f32.mxu0 0.0
        %954 = vmatmul.mubr.f32.gmra.mrb[0].mxu0 %v887
        %v955 = vpop.f32.mrb[0].mxu0
        %v956 = vadd.f32 0.0, %v955
        %v957 = vpop.f32.mrb[0].mxu0
        %958 = vdwg.mxu0
        %v959 = vadd.f32 %v872, %v956
        %s960 = scalar_lea.vmem [#allocation3], 8
        %v961 = vld [vmem:[%s960] ss:$32 sm:$0x1]
        %s962 = scalar_lea.vmem [#allocation3], 12
        %v963 = vld [vmem:[%s962] ss:$32 sm:$0x1]
        %v964 = vmax.f32 %v961, %v963
        %v965 = vmax.f32 %v964, 0.0
        %s966 = scalar_lea.vmem %s311, 4 [#allocation6]
        %967 = vst.msk [vmem:[%s966] sm:$0x1] %vm619, %v965
        %s968 = scalar_lea.vmem %s3, 128
        %v969 = vld [vmem:[%s968] sm:$0xff]
        %v970 = vld [vmem:[%s968 + $0x8] sm:$0xff]
        %v971 = vld [vmem:[%s968 + $0x10] sm:$0xff]
        %v972 = vld [vmem:[%s968 + $0x18] sm:$0xff]
        %v974 = vsel %vm580, %v965, 0
        %976 = vmatprep.subr.mxu0 0.0
        %977 = vmatpush1.msra.mxu0 %v969
        %978 = vmatprep.subr.mxu0 0.0
        %979 = vmatpush1.msra.mxu0 %v970
        %980 = vmatprep.subr.mxu0 0.0
        %981 = vmatpush1.msra.mxu0 %v971
        %982 = vmatprep.subr.mxu0 0.0
        %983 = vmatpush1.msra.mxu0 %v972
        %984 = vmatprep.subr.mxu0 0.0
        %985 = vmatpush1.msra.mxu0 0.0
        %986 = vmatprep.subr.mxu0 0.0
        %987 = vmatpush1.msra.mxu0 0.0
        %988 = vmatprep.subr.mxu0 0.0
        %989 = vmatpush1.msra.mxu0 0.0
        %990 = vmatprep.subr.mxu0 0.0
        %991 = vmatpush1.msra.mxu0 0.0
        %992 = vmatprep.subr.mxu0 0.0
        %993 = vmatpush1.msra.mxu0 0.0
        %994 = vmatprep.subr.mxu0 0.0
        %995 = vmatpush1.msra.mxu0 0.0
        %996 = vmatprep.subr.mxu0 0.0
        %997 = vmatpush1.msra.mxu0 0.0
        %998 = vmatprep.subr.mxu0 0.0
        %999 = vmatpush1.msra.mxu0 0.0
        %1000 = vmatprep.subr.mxu0 0.0
        %1001 = vmatpush1.msra.mxu0 0.0
        %1002 = vmatprep.subr.mxu0 0.0
        %1003 = vmatpush1.msra.mxu0 0.0
        %1004 = vmatprep.subr.mxu0 0.0
        %1005 = vmatpush1.msra.mxu0 0.0
        %1006 = vmatprep.subr.mxu0 0.0
        %1007 = vmatpush1.msra.mxu0 0.0
        %1008 = vmatprep.subr.mxu0 0.0
        %1009 = vmatpush1.msra.mxu0 0.0
        %1010 = vmatprep.subr.mxu0 0.0
        %1011 = vmatpush1.msra.mxu0 0.0
        %1012 = vmatprep.subr.mxu0 0.0
        %1013 = vmatpush1.msra.mxu0 0.0
        %1014 = vmatprep.subr.mxu0 0.0
        %1015 = vmatpush1.msra.mxu0 0.0
        %1016 = vmatprep.subr.mxu0 0.0
        %1017 = vmatpush1.msra.mxu0 0.0
        %1018 = vmatprep.subr.mxu0 0.0
        %1019 = vmatpush1.msra.mxu0 0.0
        %1020 = vmatprep.subr.mxu0 0.0
        %1021 = vmatpush1.msra.mxu0 0.0
        %1022 = vmatprep.subr.mxu0 0.0
        %1023 = vmatpush1.msra.mxu0 0.0
        %1024 = vmatprep.subr.mxu0 0.0
        %1025 = vmatpush1.msra.mxu0 0.0
        %1026 = vmatprep.subr.mxu0 0.0
        %1027 = vmatpush1.msra.mxu0 0.0
        %1028 = vmatprep.subr.mxu0 0.0
        %1029 = vmatpush1.msra.mxu0 0.0
        %1030 = vmatprep.subr.mxu0 0.0
        %1031 = vmatpush1.msra.mxu0 0.0
        %1032 = vmatprep.subr.mxu0 0.0
        %1033 = vmatpush1.msra.mxu0 0.0
        %1034 = vmatprep.subr.mxu0 0.0
        %1035 = vmatpush1.msra.mxu0 0.0
        %1036 = vmatprep.subr.mxu0 0.0
        %1037 = vmatpush1.msra.mxu0 0.0
        %1038 = vmatprep.subr.mxu0 0.0
        %1039 = vmatpush1.msra.mxu0 0.0
        %1040 = vmatprep.mubr.f32.mxu0 0.0
        %1041 = vmatmul.mubr.f32.gmra.mrb[0].mxu0 %v974
        %v1042 = vpop.f32.mrb[0].mxu0
        %v1043 = vadd.f32 0.0, %v1042
        %v1044 = vpop.f32.mrb[0].mxu0
        %1045 = vdwg.mxu0
        %v1046 = vadd.f32 %v959, %v1043
        %s1047 = scalar_lea.vmem [#allocation3], 9
        %v1048 = vld [vmem:[%s1047] ss:$32 sm:$0x1]
        %s1049 = scalar_lea.vmem [#allocation3], 13
        %v1050 = vld [vmem:[%s1049] ss:$32 sm:$0x1]
        %v1051 = vmax.f32 %v1048, %v1050
        %v1052 = vmax.f32 %v1051, 0.0
        %s1053 = scalar_lea.vmem %s311, 5 [#allocation6]
        %1054 = vst.msk [vmem:[%s1053] sm:$0x1] %vm619, %v1052
        %s1055 = scalar_lea.vmem %s3, 160
        %v1056 = vld [vmem:[%s1055] sm:$0xff]
        %v1057 = vld [vmem:[%s1055 + $0x8] sm:$0xff]
        %v1058 = vld [vmem:[%s1055 + $0x10] sm:$0xff]
        %v1059 = vld [vmem:[%s1055 + $0x18] sm:$0xff]
        %v1061 = vsel %vm580, %v1052, 0
        %1063 = vmatprep.subr.mxu0 0.0
        %1064 = vmatpush1.msra.mxu0 %v1056
        %1065 = vmatprep.subr.mxu0 0.0
        %1066 = vmatpush1.msra.mxu0 %v1057
        %1067 = vmatprep.subr.mxu0 0.0
        %1068 = vmatpush1.msra.mxu0 %v1058
        %1069 = vmatprep.subr.mxu0 0.0
        %1070 = vmatpush1.msra.mxu0 %v1059
        %1071 = vmatprep.subr.mxu0 0.0
        %1072 = vmatpush1.msra.mxu0 0.0
        %1073 = vmatprep.subr.mxu0 0.0
        %1074 = vmatpush1.msra.mxu0 0.0
        %1075 = vmatprep.subr.mxu0 0.0
        %1076 = vmatpush1.msra.mxu0 0.0
        %1077 = vmatprep.subr.mxu0 0.0
        %1078 = vmatpush1.msra.mxu0 0.0
        %1079 = vmatprep.subr.mxu0 0.0
        %1080 = vmatpush1.msra.mxu0 0.0
        %1081 = vmatprep.subr.mxu0 0.0
        %1082 = vmatpush1.msra.mxu0 0.0
        %1083 = vmatprep.subr.mxu0 0.0
        %1084 = vmatpush1.msra.mxu0 0.0
        %1085 = vmatprep.subr.mxu0 0.0
        %1086 = vmatpush1.msra.mxu0 0.0
        %1087 = vmatprep.subr.mxu0 0.0
        %1088 = vmatpush1.msra.mxu0 0.0
        %1089 = vmatprep.subr.mxu0 0.0
        %1090 = vmatpush1.msra.mxu0 0.0
        %1091 = vmatprep.subr.mxu0 0.0
        %1092 = vmatpush1.msra.mxu0 0.0
        %1093 = vmatprep.subr.mxu0 0.0
        %1094 = vmatpush1.msra.mxu0 0.0
        %1095 = vmatprep.subr.mxu0 0.0
        %1096 = vmatpush1.msra.mxu0 0.0
        %1097 = vmatprep.subr.mxu0 0.0
        %1098 = vmatpush1.msra.mxu0 0.0
        %1099 = vmatprep.subr.mxu0 0.0
        %1100 = vmatpush1.msra.mxu0 0.0
        %1101 = vmatprep.subr.mxu0 0.0
        %1102 = vmatpush1.msra.mxu0 0.0
        %1103 = vmatprep.subr.mxu0 0.0
        %1104 = vmatpush1.msra.mxu0 0.0
        %1105 = vmatprep.subr.mxu0 0.0
        %1106 = vmatpush1.msra.mxu0 0.0
        %1107 = vmatprep.subr.mxu0 0.0
        %1108 = vmatpush1.msra.mxu0 0.0
        %1109 = vmatprep.subr.mxu0 0.0
        %1110 = vmatpush1.msra.mxu0 0.0
        %1111 = vmatprep.subr.mxu0 0.0
        %1112 = vmatpush1.msra.mxu0 0.0
        %1113 = vmatprep.subr.mxu0 0.0
        %1114 = vmatpush1.msra.mxu0 0.0
        %1115 = vmatprep.subr.mxu0 0.0
        %1116 = vmatpush1.msra.mxu0 0.0
        %1117 = vmatprep.subr.mxu0 0.0
        %1118 = vmatpush1.msra.mxu0 0.0
        %1119 = vmatprep.subr.mxu0 0.0
        %1120 = vmatpush1.msra.mxu0 0.0
        %1121 = vmatprep.subr.mxu0 0.0
        %1122 = vmatpush1.msra.mxu0 0.0
        %1123 = vmatprep.subr.mxu0 0.0
        %1124 = vmatpush1.msra.mxu0 0.0
        %1125 = vmatprep.subr.mxu0 0.0
        %1126 = vmatpush1.msra.mxu0 0.0
        %1127 = vmatprep.mubr.f32.mxu0 0.0
        %1128 = vmatmul.mubr.f32.gmra.mrb[0].mxu0 %v1061
        %v1129 = vpop.f32.mrb[0].mxu0
        %v1130 = vadd.f32 0.0, %v1129
        %v1131 = vpop.f32.mrb[0].mxu0
        %1132 = vdwg.mxu0
        %v1133 = vadd.f32 %v1046, %v1130
        %s1134 = scalar_lea.vmem [#allocation3], 10
        %v1135 = vld [vmem:[%s1134] ss:$32 sm:$0x1]
        %s1136 = scalar_lea.vmem [#allocation3], 14
        %v1137 = vld [vmem:[%s1136] ss:$32 sm:$0x1]
        %v1138 = vmax.f32 %v1135, %v1137
        %v1139 = vmax.f32 %v1138, 0.0
        %s1140 = scalar_lea.vmem %s311, 6 [#allocation6]
        %1141 = vst.msk [vmem:[%s1140] sm:$0x1] %vm619, %v1139
        %s1142 = scalar_lea.vmem %s3, 192
        %v1143 = vld [vmem:[%s1142] sm:$0xff]
        %v1144 = vld [vmem:[%s1142 + $0x8] sm:$0xff]
        %v1145 = vld [vmem:[%s1142 + $0x10] sm:$0xff]
        %v1146 = vld [vmem:[%s1142 + $0x18] sm:$0xff]
        %v1148 = vsel %vm580, %v1139, 0
        %1150 = vmatprep.subr.mxu0 0.0
        %1151 = vmatpush1.msra.mxu0 %v1143
        %1152 = vmatprep.subr.mxu0 0.0
        %1153 = vmatpush1.msra.mxu0 %v1144
        %1154 = vmatprep.subr.mxu0 0.0
        %1155 = vmatpush1.msra.mxu0 %v1145
        %1156 = vmatprep.subr.mxu0 0.0
        %1157 = vmatpush1.msra.mxu0 %v1146
        %1158 = vmatprep.subr.mxu0 0.0
        %1159 = vmatpush1.msra.mxu0 0.0
        %1160 = vmatprep.subr.mxu0 0.0
        %1161 = vmatpush1.msra.mxu0 0.0
        %1162 = vmatprep.subr.mxu0 0.0
        %1163 = vmatpush1.msra.mxu0 0.0
        %1164 = vmatprep.subr.mxu0 0.0
        %1165 = vmatpush1.msra.mxu0 0.0
        %1166 = vmatprep.subr.mxu0 0.0
        %1167 = vmatpush1.msra.mxu0 0.0
        %1168 = vmatprep.subr.mxu0 0.0
        %1169 = vmatpush1.msra.mxu0 0.0
        %1170 = vmatprep.subr.mxu0 0.0
        %1171 = vmatpush1.msra.mxu0 0.0
        %1172 = vmatprep.subr.mxu0 0.0
        %1173 = vmatpush1.msra.mxu0 0.0
        %1174 = vmatprep.subr.mxu0 0.0
        %1175 = vmatpush1.msra.mxu0 0.0
        %1176 = vmatprep.subr.mxu0 0.0
        %1177 = vmatpush1.msra.mxu0 0.0
        %1178 = vmatprep.subr.mxu0 0.0
        %1179 = vmatpush1.msra.mxu0 0.0
        %1180 = vmatprep.subr.mxu0 0.0
        %1181 = vmatpush1.msra.mxu0 0.0
        %1182 = vmatprep.subr.mxu0 0.0
        %1183 = vmatpush1.msra.mxu0 0.0
        %1184 = vmatprep.subr.mxu0 0.0
        %1185 = vmatpush1.msra.mxu0 0.0
        %1186 = vmatprep.subr.mxu0 0.0
        %1187 = vmatpush1.msra.mxu0 0.0
        %1188 = vmatprep.subr.mxu0 0.0
        %1189 = vmatpush1.msra.mxu0 0.0
        %1190 = vmatprep.subr.mxu0 0.0
        %1191 = vmatpush1.msra.mxu0 0.0
        %1192 = vmatprep.subr.mxu0 0.0
        %1193 = vmatpush1.msra.mxu0 0.0
        %1194 = vmatprep.subr.mxu0 0.0
        %1195 = vmatpush1.msra.mxu0 0.0
        %1196 = vmatprep.subr.mxu0 0.0
        %1197 = vmatpush1.msra.mxu0 0.0
        %1198 = vmatprep.subr.mxu0 0.0
        %1199 = vmatpush1.msra.mxu0 0.0
        %1200 = vmatprep.subr.mxu0 0.0
        %1201 = vmatpush1.msra.mxu0 0.0
        %1202 = vmatprep.subr.mxu0 0.0
        %1203 = vmatpush1.msra.mxu0 0.0
        %1204 = vmatprep.subr.mxu0 0.0
        %1205 = vmatpush1.msra.mxu0 0.0
        %1206 = vmatprep.subr.mxu0 0.0
        %1207 = vmatpush1.msra.mxu0 0.0
        %1208 = vmatprep.subr.mxu0 0.0
        %1209 = vmatpush1.msra.mxu0 0.0
        %1210 = vmatprep.subr.mxu0 0.0
        %1211 = vmatpush1.msra.mxu0 0.0
        %1212 = vmatprep.subr.mxu0 0.0
        %1213 = vmatpush1.msra.mxu0 0.0
        %1214 = vmatprep.mubr.f32.mxu0 0.0
        %1215 = vmatmul.mubr.f32.gmra.mrb[0].mxu0 %v1148
        %v1216 = vpop.f32.mrb[0].mxu0
        %v1217 = vadd.f32 0.0, %v1216
        %v1218 = vpop.f32.mrb[0].mxu0
        %1219 = vdwg.mxu0
        %v1220 = vadd.f32 %v1133, %v1217
        %s1221 = scalar_lea.vmem [#allocation3], 11
        %v1222 = vld [vmem:[%s1221] ss:$32 sm:$0x1]
        %s1223 = scalar_lea.vmem [#allocation3], 15
        %v1224 = vld [vmem:[%s1223] ss:$32 sm:$0x1]
        %v1225 = vmax.f32 %v1222, %v1224
        %v1226 = vmax.f32 %v1225, 0.0
        %s1227 = scalar_lea.vmem %s311, 7 [#allocation6]
        %1228 = vst.msk [vmem:[%s1227] sm:$0x1] %vm619, %v1226
        %s1229 = scalar_lea.vmem %s3, 224
        %v1230 = vld [vmem:[%s1229] sm:$0xff]
        %v1231 = vld [vmem:[%s1229 + $0x8] sm:$0xff]
        %v1232 = vld [vmem:[%s1229 + $0x10] sm:$0xff]
        %v1233 = vld [vmem:[%s1229 + $0x18] sm:$0xff]
        %v1235 = vsel %vm580, %v1226, 0
        %1237 = vmatprep.subr.mxu0 0.0
        %1238 = vmatpush1.msra.mxu0 %v1230
        %1239 = vmatprep.subr.mxu0 0.0
        %1240 = vmatpush1.msra.mxu0 %v1231
        %1241 = vmatprep.subr.mxu0 0.0
        %1242 = vmatpush1.msra.mxu0 %v1232
        %1243 = vmatprep.subr.mxu0 0.0
        %1244 = vmatpush1.msra.mxu0 %v1233
        %1245 = vmatprep.subr.mxu0 0.0
        %1246 = vmatpush1.msra.mxu0 0.0
        %1247 = vmatprep.subr.mxu0 0.0
        %1248 = vmatpush1.msra.mxu0 0.0
        %1249 = vmatprep.subr.mxu0 0.0
        %1250 = vmatpush1.msra.mxu0 0.0
        %1251 = vmatprep.subr.mxu0 0.0
        %1252 = vmatpush1.msra.mxu0 0.0
        %1253 = vmatprep.subr.mxu0 0.0
        %1254 = vmatpush1.msra.mxu0 0.0
        %1255 = vmatprep.subr.mxu0 0.0
        %1256 = vmatpush1.msra.mxu0 0.0
        %1257 = vmatprep.subr.mxu0 0.0
        %1258 = vmatpush1.msra.mxu0 0.0
        %1259 = vmatprep.subr.mxu0 0.0
        %1260 = vmatpush1.msra.mxu0 0.0
        %1261 = vmatprep.subr.mxu0 0.0
        %1262 = vmatpush1.msra.mxu0 0.0
        %1263 = vmatprep.subr.mxu0 0.0
        %1264 = vmatpush1.msra.mxu0 0.0
        %1265 = vmatprep.subr.mxu0 0.0
        %1266 = vmatpush1.msra.mxu0 0.0
        %1267 = vmatprep.subr.mxu0 0.0
        %1268 = vmatpush1.msra.mxu0 0.0
        %1269 = vmatprep.subr.mxu0 0.0
        %1270 = vmatpush1.msra.mxu0 0.0
        %1271 = vmatprep.subr.mxu0 0.0
        %1272 = vmatpush1.msra.mxu0 0.0
        %1273 = vmatprep.subr.mxu0 0.0
        %1274 = vmatpush1.msra.mxu0 0.0
        %1275 = vmatprep.subr.mxu0 0.0
        %1276 = vmatpush1.msra.mxu0 0.0
        %1277 = vmatprep.subr.mxu0 0.0
        %1278 = vmatpush1.msra.mxu0 0.0
        %1279 = vmatprep.subr.mxu0 0.0
        %1280 = vmatpush1.msra.mxu0 0.0
        %1281 = vmatprep.subr.mxu0 0.0
        %1282 = vmatpush1.msra.mxu0 0.0
        %1283 = vmatprep.subr.mxu0 0.0
        %1284 = vmatpush1.msra.mxu0 0.0
        %1285 = vmatprep.subr.mxu0 0.0
        %1286 = vmatpush1.msra.mxu0 0.0
        %1287 = vmatprep.subr.mxu0 0.0
        %1288 = vmatpush1.msra.mxu0 0.0
        %1289 = vmatprep.subr.mxu0 0.0
        %1290 = vmatpush1.msra.mxu0 0.0
        %1291 = vmatprep.subr.mxu0 0.0
        %1292 = vmatpush1.msra.mxu0 0.0
        %1293 = vmatprep.subr.mxu0 0.0
        %1294 = vmatpush1.msra.mxu0 0.0
        %1295 = vmatprep.subr.mxu0 0.0
        %1296 = vmatpush1.msra.mxu0 0.0
        %1297 = vmatprep.subr.mxu0 0.0
        %1298 = vmatpush1.msra.mxu0 0.0
        %1299 = vmatprep.subr.mxu0 0.0
        %1300 = vmatpush1.msra.mxu0 0.0
        %1301 = vmatprep.mubr.f32.mxu0 0.0
        %1302 = vmatmul.mubr.f32.gmra.mrb[0].mxu0 %v1235
        %v1303 = vpop.f32.mrb[0].mxu0
        %v1304 = vadd.f32 0.0, %v1303
        %v1305 = vpop.f32.mrb[0].mxu0
        %1306 = vdwg.mxu0
        %v1307 = vadd.f32 %v1220, %v1304
        %s1308 = scalar_lea.vmem [#allocation3], 16
        %v1309 = vld [vmem:[%s1308] ss:$32 sm:$0x1]
        %s1310 = scalar_lea.vmem [#allocation3], 20
        %v1311 = vld [vmem:[%s1310] ss:$32 sm:$0x1]
        %v1312 = vmax.f32 %v1309, %v1311
        %v1313 = vmax.f32 %v1312, 0.0
        %s1314 = scalar_lea.vmem %s311, 8 [#allocation6]
        %1315 = vst.msk [vmem:[%s1314] sm:$0x1] %vm619, %v1313
        %s1316 = scalar_lea.vmem %s3, 256
        %v1317 = vld [vmem:[%s1316] sm:$0xff]
        %v1318 = vld [vmem:[%s1316 + $0x8] sm:$0xff]
        %v1319 = vld [vmem:[%s1316 + $0x10] sm:$0xff]
        %v1320 = vld [vmem:[%s1316 + $0x18] sm:$0xff]
        %v1322 = vsel %vm580, %v1313, 0
        %1324 = vmatprep.subr.mxu0 0.0
        %1325 = vmatpush1.msra.mxu0 %v1317
        %1326 = vmatprep.subr.mxu0 0.0
        %1327 = vmatpush1.msra.mxu0 %v1318
        %1328 = vmatprep.subr.mxu0 0.0
        %1329 = vmatpush1.msra.mxu0 %v1319
        %1330 = vmatprep.subr.mxu0 0.0
        %1331 = vmatpush1.msra.mxu0 %v1320
        %1332 = vmatprep.subr.mxu0 0.0
        %1333 = vmatpush1.msra.mxu0 0.0
        %1334 = vmatprep.subr.mxu0 0.0
        %1335 = vmatpush1.msra.mxu0 0.0
        %1336 = vmatprep.subr.mxu0 0.0
        %1337 = vmatpush1.msra.mxu0 0.0
        %1338 = vmatprep.subr.mxu0 0.0
        %1339 = vmatpush1.msra.mxu0 0.0
        %1340 = vmatprep.subr.mxu0 0.0
        %1341 = vmatpush1.msra.mxu0 0.0
        %1342 = vmatprep.subr.mxu0 0.0
        %1343 = vmatpush1.msra.mxu0 0.0
        %1344 = vmatprep.subr.mxu0 0.0
        %1345 = vmatpush1.msra.mxu0 0.0
        %1346 = vmatprep.subr.mxu0 0.0
        %1347 = vmatpush1.msra.mxu0 0.0
        %1348 = vmatprep.subr.mxu0 0.0
        %1349 = vmatpush1.msra.mxu0 0.0
        %1350 = vmatprep.subr.mxu0 0.0
        %1351 = vmatpush1.msra.mxu0 0.0
        %1352 = vmatprep.subr.mxu0 0.0
        %1353 = vmatpush1.msra.mxu0 0.0
        %1354 = vmatprep.subr.mxu0 0.0
        %1355 = vmatpush1.msra.mxu0 0.0
        %1356 = vmatprep.subr.mxu0 0.0
        %1357 = vmatpush1.msra.mxu0 0.0
        %1358 = vmatprep.subr.mxu0 0.0
        %1359 = vmatpush1.msra.mxu0 0.0
        %1360 = vmatprep.subr.mxu0 0.0
        %1361 = vmatpush1.msra.mxu0 0.0
        %1362 = vmatprep.subr.mxu0 0.0
        %1363 = vmatpush1.msra.mxu0 0.0
        %1364 = vmatprep.subr.mxu0 0.0
        %1365 = vmatpush1.msra.mxu0 0.0
        %1366 = vmatprep.subr.mxu0 0.0
        %1367 = vmatpush1.msra.mxu0 0.0
        %1368 = vmatprep.subr.mxu0 0.0
        %1369 = vmatpush1.msra.mxu0 0.0
        %1370 = vmatprep.subr.mxu0 0.0
        %1371 = vmatpush1.msra.mxu0 0.0
        %1372 = vmatprep.subr.mxu0 0.0
        %1373 = vmatpush1.msra.mxu0 0.0
        %1374 = vmatprep.subr.mxu0 0.0
        %1375 = vmatpush1.msra.mxu0 0.0
        %1376 = vmatprep.subr.mxu0 0.0
        %1377 = vmatpush1.msra.mxu0 0.0
        %1378 = vmatprep.subr.mxu0 0.0
        %1379 = vmatpush1.msra.mxu0 0.0
        %1380 = vmatprep.subr.mxu0 0.0
        %1381 = vmatpush1.msra.mxu0 0.0
        %1382 = vmatprep.subr.mxu0 0.0
        %1383 = vmatpush1.msra.mxu0 0.0
        %1384 = vmatprep.subr.mxu0 0.0
        %1385 = vmatpush1.msra.mxu0 0.0
        %1386 = vmatprep.subr.mxu0 0.0
        %1387 = vmatpush1.msra.mxu0 0.0
        %1388 = vmatprep.mubr.f32.mxu0 0.0
        %1389 = vmatmul.mubr.f32.gmra.mrb[0].mxu0 %v1322
        %v1390 = vpop.f32.mrb[0].mxu0
        %v1391 = vadd.f32 0.0, %v1390
        %v1392 = vpop.f32.mrb[0].mxu0
        %1393 = vdwg.mxu0
        %v1394 = vadd.f32 %v1307, %v1391
        %s1395 = scalar_lea.vmem [#allocation3], 17
        %v1396 = vld [vmem:[%s1395] ss:$32 sm:$0x1]
        %s1397 = scalar_lea.vmem [#allocation3], 21
        %v1398 = vld [vmem:[%s1397] ss:$32 sm:$0x1]
        %v1399 = vmax.f32 %v1396, %v1398
        %v1400 = vmax.f32 %v1399, 0.0
        %s1401 = scalar_lea.vmem %s311, 9 [#allocation6]
        %1402 = vst.msk [vmem:[%s1401] sm:$0x1] %vm619, %v1400
        %s1403 = scalar_lea.vmem %s3, 288
        %v1404 = vld [vmem:[%s1403] sm:$0xff]
        %v1405 = vld [vmem:[%s1403 + $0x8] sm:$0xff]
        %v1406 = vld [vmem:[%s1403 + $0x10] sm:$0xff]
        %v1407 = vld [vmem:[%s1403 + $0x18] sm:$0xff]
        %v1409 = vsel %vm580, %v1400, 0
        %1411 = vmatprep.subr.mxu0 0.0
        %1412 = vmatpush1.msra.mxu0 %v1404
        %1413 = vmatprep.subr.mxu0 0.0
        %1414 = vmatpush1.msra.mxu0 %v1405
        %1415 = vmatprep.subr.mxu0 0.0
        %1416 = vmatpush1.msra.mxu0 %v1406
        %1417 = vmatprep.subr.mxu0 0.0
        %1418 = vmatpush1.msra.mxu0 %v1407
        %1419 = vmatprep.subr.mxu0 0.0
        %1420 = vmatpush1.msra.mxu0 0.0
        %1421 = vmatprep.subr.mxu0 0.0
        %1422 = vmatpush1.msra.mxu0 0.0
        %1423 = vmatprep.subr.mxu0 0.0
        %1424 = vmatpush1.msra.mxu0 0.0
        %1425 = vmatprep.subr.mxu0 0.0
        %1426 = vmatpush1.msra.mxu0 0.0
        %1427 = vmatprep.subr.mxu0 0.0
        %1428 = vmatpush1.msra.mxu0 0.0
        %1429 = vmatprep.subr.mxu0 0.0
        %1430 = vmatpush1.msra.mxu0 0.0
        %1431 = vmatprep.subr.mxu0 0.0
        %1432 = vmatpush1.msra.mxu0 0.0
        %1433 = vmatprep.subr.mxu0 0.0
        %1434 = vmatpush1.msra.mxu0 0.0
        %1435 = vmatprep.subr.mxu0 0.0
        %1436 = vmatpush1.msra.mxu0 0.0
        %1437 = vmatprep.subr.mxu0 0.0
        %1438 = vmatpush1.msra.mxu0 0.0
        %1439 = vmatprep.subr.mxu0 0.0
        %1440 = vmatpush1.msra.mxu0 0.0
        %1441 = vmatprep.subr.mxu0 0.0
        %1442 = vmatpush1.msra.mxu0 0.0
        %1443 = vmatprep.subr.mxu0 0.0
        %1444 = vmatpush1.msra.mxu0 0.0
        %1445 = vmatprep.subr.mxu0 0.0
        %1446 = vmatpush1.msra.mxu0 0.0
        %1447 = vmatprep.subr.mxu0 0.0
        %1448 = vmatpush1.msra.mxu0 0.0
        %1449 = vmatprep.subr.mxu0 0.0
        %1450 = vmatpush1.msra.mxu0 0.0
        %1451 = vmatprep.subr.mxu0 0.0
        %1452 = vmatpush1.msra.mxu0 0.0
        %1453 = vmatprep.subr.mxu0 0.0
        %1454 = vmatpush1.msra.mxu0 0.0
        %1455 = vmatprep.subr.mxu0 0.0
        %1456 = vmatpush1.msra.mxu0 0.0
        %1457 = vmatprep.subr.mxu0 0.0
        %1458 = vmatpush1.msra.mxu0 0.0
        %1459 = vmatprep.subr.mxu0 0.0
        %1460 = vmatpush1.msra.mxu0 0.0
        %1461 = vmatprep.subr.mxu0 0.0
        %1462 = vmatpush1.msra.mxu0 0.0
        %1463 = vmatprep.subr.mxu0 0.0
        %1464 = vmatpush1.msra.mxu0 0.0
        %1465 = vmatprep.subr.mxu0 0.0
        %1466 = vmatpush1.msra.mxu0 0.0
        %1467 = vmatprep.subr.mxu0 0.0
        %1468 = vmatpush1.msra.mxu0 0.0
        %1469 = vmatprep.subr.mxu0 0.0
        %1470 = vmatpush1.msra.mxu0 0.0
        %1471 = vmatprep.subr.mxu0 0.0
        %1472 = vmatpush1.msra.mxu0 0.0
        %1473 = vmatprep.subr.mxu0 0.0
        %1474 = vmatpush1.msra.mxu0 0.0
        %1475 = vmatprep.mubr.f32.mxu0 0.0
        %1476 = vmatmul.mubr.f32.gmra.mrb[0].mxu0 %v1409
        %v1477 = vpop.f32.mrb[0].mxu0
        %v1478 = vadd.f32 0.0, %v1477
        %v1479 = vpop.f32.mrb[0].mxu0
        %1480 = vdwg.mxu0
        %v1481 = vadd.f32 %v1394, %v1478
        %s1482 = scalar_lea.vmem [#allocation3], 18
        %v1483 = vld [vmem:[%s1482] ss:$32 sm:$0x1]
        %s1484 = scalar_lea.vmem [#allocation3], 22
        %v1485 = vld [vmem:[%s1484] ss:$32 sm:$0x1]
        %v1486 = vmax.f32 %v1483, %v1485
        %v1487 = vmax.f32 %v1486, 0.0
        %s1488 = scalar_lea.vmem %s311, 10 [#allocation6]
        %1489 = vst.msk [vmem:[%s1488] sm:$0x1] %vm619, %v1487
        %s1490 = scalar_lea.vmem %s3, 320
        %v1491 = vld [vmem:[%s1490] sm:$0xff]
        %v1492 = vld [vmem:[%s1490 + $0x8] sm:$0xff]
        %v1493 = vld [vmem:[%s1490 + $0x10] sm:$0xff]
        %v1494 = vld [vmem:[%s1490 + $0x18] sm:$0xff]
        %v1496 = vsel %vm580, %v1487, 0
        %1498 = vmatprep.subr.mxu0 0.0
        %1499 = vmatpush1.msra.mxu0 %v1491
        %1500 = vmatprep.subr.mxu0 0.0
        %1501 = vmatpush1.msra.mxu0 %v1492
        %1502 = vmatprep.subr.mxu0 0.0
        %1503 = vmatpush1.msra.mxu0 %v1493
        %1504 = vmatprep.subr.mxu0 0.0
        %1505 = vmatpush1.msra.mxu0 %v1494
        %1506 = vmatprep.subr.mxu0 0.0
        %1507 = vmatpush1.msra.mxu0 0.0
        %1508 = vmatprep.subr.mxu0 0.0
        %1509 = vmatpush1.msra.mxu0 0.0
        %1510 = vmatprep.subr.mxu0 0.0
        %1511 = vmatpush1.msra.mxu0 0.0
        %1512 = vmatprep.subr.mxu0 0.0
        %1513 = vmatpush1.msra.mxu0 0.0
        %1514 = vmatprep.subr.mxu0 0.0
        %1515 = vmatpush1.msra.mxu0 0.0
        %1516 = vmatprep.subr.mxu0 0.0
        %1517 = vmatpush1.msra.mxu0 0.0
        %1518 = vmatprep.subr.mxu0 0.0
        %1519 = vmatpush1.msra.mxu0 0.0
        %1520 = vmatprep.subr.mxu0 0.0
        %1521 = vmatpush1.msra.mxu0 0.0
        %1522 = vmatprep.subr.mxu0 0.0
        %1523 = vmatpush1.msra.mxu0 0.0
        %1524 = vmatprep.subr.mxu0 0.0
        %1525 = vmatpush1.msra.mxu0 0.0
        %1526 = vmatprep.subr.mxu0 0.0
        %1527 = vmatpush1.msra.mxu0 0.0
        %1528 = vmatprep.subr.mxu0 0.0
        %1529 = vmatpush1.msra.mxu0 0.0
        %1530 = vmatprep.subr.mxu0 0.0
        %1531 = vmatpush1.msra.mxu0 0.0
        %1532 = vmatprep.subr.mxu0 0.0
        %1533 = vmatpush1.msra.mxu0 0.0
        %1534 = vmatprep.subr.mxu0 0.0
        %1535 = vmatpush1.msra.mxu0 0.0
        %1536 = vmatprep.subr.mxu0 0.0
        %1537 = vmatpush1.msra.mxu0 0.0
        %1538 = vmatprep.subr.mxu0 0.0
        %1539 = vmatpush1.msra.mxu0 0.0
        %1540 = vmatprep.subr.mxu0 0.0
        %1541 = vmatpush1.msra.mxu0 0.0
        %1542 = vmatprep.subr.mxu0 0.0
        %1543 = vmatpush1.msra.mxu0 0.0
        %1544 = vmatprep.subr.mxu0 0.0
        %1545 = vmatpush1.msra.mxu0 0.0
        %1546 = vmatprep.subr.mxu0 0.0
        %1547 = vmatpush1.msra.mxu0 0.0
        %1548 = vmatprep.subr.mxu0 0.0
        %1549 = vmatpush1.msra.mxu0 0.0
        %1550 = vmatprep.subr.mxu0 0.0
        %1551 = vmatpush1.msra.mxu0 0.0
        %1552 = vmatprep.subr.mxu0 0.0
        %1553 = vmatpush1.msra.mxu0 0.0
        %1554 = vmatprep.subr.mxu0 0.0
        %1555 = vmatpush1.msra.mxu0 0.0
        %1556 = vmatprep.subr.mxu0 0.0
        %1557 = vmatpush1.msra.mxu0 0.0
        %1558 = vmatprep.subr.mxu0 0.0
        %1559 = vmatpush1.msra.mxu0 0.0
        %1560 = vmatprep.subr.mxu0 0.0
        %1561 = vmatpush1.msra.mxu0 0.0
        %1562 = vmatprep.mubr.f32.mxu0 0.0
        %1563 = vmatmul.mubr.f32.gmra.mrb[0].mxu0 %v1496
        %v1564 = vpop.f32.mrb[0].mxu0
        %v1565 = vadd.f32 0.0, %v1564
        %v1566 = vpop.f32.mrb[0].mxu0
        %1567 = vdwg.mxu0
        %v1568 = vadd.f32 %v1481, %v1565
        %s1569 = scalar_lea.vmem [#allocation3], 19
        %v1570 = vld [vmem:[%s1569] ss:$32 sm:$0x1]
        %s1571 = scalar_lea.vmem [#allocation3], 23
        %v1572 = vld [vmem:[%s1571] ss:$32 sm:$0x1]
        %v1573 = vmax.f32 %v1570, %v1572
        %v1574 = vmax.f32 %v1573, 0.0
        %s1575 = scalar_lea.vmem %s311, 11 [#allocation6]
        %1576 = vst.msk [vmem:[%s1575] sm:$0x1] %vm619, %v1574
        %s1577 = scalar_lea.vmem %s3, 352
        %v1578 = vld [vmem:[%s1577] sm:$0xff]
        %v1579 = vld [vmem:[%s1577 + $0x8] sm:$0xff]
        %v1580 = vld [vmem:[%s1577 + $0x10] sm:$0xff]
        %v1581 = vld [vmem:[%s1577 + $0x18] sm:$0xff]
        %v1583 = vsel %vm580, %v1574, 0
        %1585 = vmatprep.subr.mxu0 0.0
        %1586 = vmatpush1.msra.mxu0 %v1578
        %1587 = vmatprep.subr.mxu0 0.0
        %1588 = vmatpush1.msra.mxu0 %v1579
        %1589 = vmatprep.subr.mxu0 0.0
        %1590 = vmatpush1.msra.mxu0 %v1580
        %1591 = vmatprep.subr.mxu0 0.0
        %1592 = vmatpush1.msra.mxu0 %v1581
        %1593 = vmatprep.subr.mxu0 0.0
        %1594 = vmatpush1.msra.mxu0 0.0
        %1595 = vmatprep.subr.mxu0 0.0
        %1596 = vmatpush1.msra.mxu0 0.0
        %1597 = vmatprep.subr.mxu0 0.0
        %1598 = vmatpush1.msra.mxu0 0.0
        %1599 = vmatprep.subr.mxu0 0.0
        %1600 = vmatpush1.msra.mxu0 0.0
        %1601 = vmatprep.subr.mxu0 0.0
        %1602 = vmatpush1.msra.mxu0 0.0
        %1603 = vmatprep.subr.mxu0 0.0
        %1604 = vmatpush1.msra.mxu0 0.0
        %1605 = vmatprep.subr.mxu0 0.0
        %1606 = vmatpush1.msra.mxu0 0.0
        %1607 = vmatprep.subr.mxu0 0.0
        %1608 = vmatpush1.msra.mxu0 0.0
        %1609 = vmatprep.subr.mxu0 0.0
        %1610 = vmatpush1.msra.mxu0 0.0
        %1611 = vmatprep.subr.mxu0 0.0
        %1612 = vmatpush1.msra.mxu0 0.0
        %1613 = vmatprep.subr.mxu0 0.0
        %1614 = vmatpush1.msra.mxu0 0.0
        %1615 = vmatprep.subr.mxu0 0.0
        %1616 = vmatpush1.msra.mxu0 0.0
        %1617 = vmatprep.subr.mxu0 0.0
        %1618 = vmatpush1.msra.mxu0 0.0
        %1619 = vmatprep.subr.mxu0 0.0
        %1620 = vmatpush1.msra.mxu0 0.0
        %1621 = vmatprep.subr.mxu0 0.0
        %1622 = vmatpush1.msra.mxu0 0.0
        %1623 = vmatprep.subr.mxu0 0.0
        %1624 = vmatpush1.msra.mxu0 0.0
        %1625 = vmatprep.subr.mxu0 0.0
        %1626 = vmatpush1.msra.mxu0 0.0
        %1627 = vmatprep.subr.mxu0 0.0
        %1628 = vmatpush1.msra.mxu0 0.0
        %1629 = vmatprep.subr.mxu0 0.0
        %1630 = vmatpush1.msra.mxu0 0.0
        %1631 = vmatprep.subr.mxu0 0.0
        %1632 = vmatpush1.msra.mxu0 0.0
        %1633 = vmatprep.subr.mxu0 0.0
        %1634 = vmatpush1.msra.mxu0 0.0
        %1635 = vmatprep.subr.mxu0 0.0
        %1636 = vmatpush1.msra.mxu0 0.0
        %1637 = vmatprep.subr.mxu0 0.0
        %1638 = vmatpush1.msra.mxu0 0.0
        %1639 = vmatprep.subr.mxu0 0.0
        %1640 = vmatpush1.msra.mxu0 0.0
        %1641 = vmatprep.subr.mxu0 0.0
        %1642 = vmatpush1.msra.mxu0 0.0
        %1643 = vmatprep.subr.mxu0 0.0
        %1644 = vmatpush1.msra.mxu0 0.0
        %1645 = vmatprep.subr.mxu0 0.0
        %1646 = vmatpush1.msra.mxu0 0.0
        %1647 = vmatprep.subr.mxu0 0.0
        %1648 = vmatpush1.msra.mxu0 0.0
        %1649 = vmatprep.mubr.f32.mxu0 0.0
        %1650 = vmatmul.mubr.f32.gmra.mrb[0].mxu0 %v1583
        %v1651 = vpop.f32.mrb[0].mxu0
        %v1652 = vadd.f32 0.0, %v1651
        %v1653 = vpop.f32.mrb[0].mxu0
        %1654 = vdwg.mxu0
        %v1655 = vadd.f32 %v1568, %v1652
        %s1656 = scalar_lea.vmem [#allocation3], 24
        %v1657 = vld [vmem:[%s1656] ss:$32 sm:$0x1]
        %s1658 = scalar_lea.vmem [#allocation3], 28
        %v1659 = vld [vmem:[%s1658] ss:$32 sm:$0x1]
        %v1660 = vmax.f32 %v1657, %v1659
        %v1661 = vmax.f32 %v1660, 0.0
        %s1662 = scalar_lea.vmem %s311, 12 [#allocation6]
        %1663 = vst.msk [vmem:[%s1662] sm:$0x1] %vm619, %v1661
        %s1664 = scalar_lea.vmem %s3, 384
        %v1665 = vld [vmem:[%s1664] sm:$0xff]
        %v1666 = vld [vmem:[%s1664 + $0x8] sm:$0xff]
        %v1667 = vld [vmem:[%s1664 + $0x10] sm:$0xff]
        %v1668 = vld [vmem:[%s1664 + $0x18] sm:$0xff]
        %v1670 = vsel %vm580, %v1661, 0
        %1672 = vmatprep.subr.mxu0 0.0
        %1673 = vmatpush1.msra.mxu0 %v1665
        %1674 = vmatprep.subr.mxu0 0.0
        %1675 = vmatpush1.msra.mxu0 %v1666
        %1676 = vmatprep.subr.mxu0 0.0
        %1677 = vmatpush1.msra.mxu0 %v1667
        %1678 = vmatprep.subr.mxu0 0.0
        %1679 = vmatpush1.msra.mxu0 %v1668
        %1680 = vmatprep.subr.mxu0 0.0
        %1681 = vmatpush1.msra.mxu0 0.0
        %1682 = vmatprep.subr.mxu0 0.0
        %1683 = vmatpush1.msra.mxu0 0.0
        %1684 = vmatprep.subr.mxu0 0.0
        %1685 = vmatpush1.msra.mxu0 0.0
        %1686 = vmatprep.subr.mxu0 0.0
        %1687 = vmatpush1.msra.mxu0 0.0
        %1688 = vmatprep.subr.mxu0 0.0
        %1689 = vmatpush1.msra.mxu0 0.0
        %1690 = vmatprep.subr.mxu0 0.0
        %1691 = vmatpush1.msra.mxu0 0.0
        %1692 = vmatprep.subr.mxu0 0.0
        %1693 = vmatpush1.msra.mxu0 0.0
        %1694 = vmatprep.subr.mxu0 0.0
        %1695 = vmatpush1.msra.mxu0 0.0
        %1696 = vmatprep.subr.mxu0 0.0
        %1697 = vmatpush1.msra.mxu0 0.0
        %1698 = vmatprep.subr.mxu0 0.0
        %1699 = vmatpush1.msra.mxu0 0.0
        %1700 = vmatprep.subr.mxu0 0.0
        %1701 = vmatpush1.msra.mxu0 0.0
        %1702 = vmatprep.subr.mxu0 0.0
        %1703 = vmatpush1.msra.mxu0 0.0
        %1704 = vmatprep.subr.mxu0 0.0
        %1705 = vmatpush1.msra.mxu0 0.0
        %1706 = vmatprep.subr.mxu0 0.0
        %1707 = vmatpush1.msra.mxu0 0.0
        %1708 = vmatprep.subr.mxu0 0.0
        %1709 = vmatpush1.msra.mxu0 0.0
        %1710 = vmatprep.subr.mxu0 0.0
        %1711 = vmatpush1.msra.mxu0 0.0
        %1712 = vmatprep.subr.mxu0 0.0
        %1713 = vmatpush1.msra.mxu0 0.0
        %1714 = vmatprep.subr.mxu0 0.0
        %1715 = vmatpush1.msra.mxu0 0.0
        %1716 = vmatprep.subr.mxu0 0.0
        %1717 = vmatpush1.msra.mxu0 0.0
        %1718 = vmatprep.subr.mxu0 0.0
        %1719 = vmatpush1.msra.mxu0 0.0
        %1720 = vmatprep.subr.mxu0 0.0
        %1721 = vmatpush1.msra.mxu0 0.0
        %1722 = vmatprep.subr.mxu0 0.0
        %1723 = vmatpush1.msra.mxu0 0.0
        %1724 = vmatprep.subr.mxu0 0.0
        %1725 = vmatpush1.msra.mxu0 0.0
        %1726 = vmatprep.subr.mxu0 0.0
        %1727 = vmatpush1.msra.mxu0 0.0
        %1728 = vmatprep.subr.mxu0 0.0
        %1729 = vmatpush1.msra.mxu0 0.0
        %1730 = vmatprep.subr.mxu0 0.0
        %1731 = vmatpush1.msra.mxu0 0.0
        %1732 = vmatprep.subr.mxu0 0.0
        %1733 = vmatpush1.msra.mxu0 0.0
        %1734 = vmatprep.subr.mxu0 0.0
        %1735 = vmatpush1.msra.mxu0 0.0
        %1736 = vmatprep.mubr.f32.mxu0 0.0
        %1737 = vmatmul.mubr.f32.gmra.mrb[0].mxu0 %v1670
        %v1738 = vpop.f32.mrb[0].mxu0
        %v1739 = vadd.f32 0.0, %v1738
        %v1740 = vpop.f32.mrb[0].mxu0
        %1741 = vdwg.mxu0
        %v1742 = vadd.f32 %v1655, %v1739
        %s1743 = scalar_lea.vmem [#allocation3], 25
        %v1744 = vld [vmem:[%s1743] ss:$32 sm:$0x1]
        %s1745 = scalar_lea.vmem [#allocation3], 29
        %v1746 = vld [vmem:[%s1745] ss:$32 sm:$0x1]
        %v1747 = vmax.f32 %v1744, %v1746
        %v1748 = vmax.f32 %v1747, 0.0
        %s1749 = scalar_lea.vmem %s311, 13 [#allocation6]
        %1750 = vst.msk [vmem:[%s1749] sm:$0x1] %vm619, %v1748
        %s1751 = scalar_lea.vmem %s3, 416
        %v1752 = vld [vmem:[%s1751] sm:$0xff]
        %v1753 = vld [vmem:[%s1751 + $0x8] sm:$0xff]
        %v1754 = vld [vmem:[%s1751 + $0x10] sm:$0xff]
        %v1755 = vld [vmem:[%s1751 + $0x18] sm:$0xff]
        %v1757 = vsel %vm580, %v1748, 0
        %1759 = vmatprep.subr.mxu0 0.0
        %1760 = vmatpush1.msra.mxu0 %v1752
        %1761 = vmatprep.subr.mxu0 0.0
        %1762 = vmatpush1.msra.mxu0 %v1753
        %1763 = vmatprep.subr.mxu0 0.0
        %1764 = vmatpush1.msra.mxu0 %v1754
        %1765 = vmatprep.subr.mxu0 0.0
        %1766 = vmatpush1.msra.mxu0 %v1755
        %1767 = vmatprep.subr.mxu0 0.0
        %1768 = vmatpush1.msra.mxu0 0.0
        %1769 = vmatprep.subr.mxu0 0.0
        %1770 = vmatpush1.msra.mxu0 0.0
        %1771 = vmatprep.subr.mxu0 0.0
        %1772 = vmatpush1.msra.mxu0 0.0
        %1773 = vmatprep.subr.mxu0 0.0
        %1774 = vmatpush1.msra.mxu0 0.0
        %1775 = vmatprep.subr.mxu0 0.0
        %1776 = vmatpush1.msra.mxu0 0.0
        %1777 = vmatprep.subr.mxu0 0.0
        %1778 = vmatpush1.msra.mxu0 0.0
        %1779 = vmatprep.subr.mxu0 0.0
        %1780 = vmatpush1.msra.mxu0 0.0
        %1781 = vmatprep.subr.mxu0 0.0
        %1782 = vmatpush1.msra.mxu0 0.0
        %1783 = vmatprep.subr.mxu0 0.0
        %1784 = vmatpush1.msra.mxu0 0.0
        %1785 = vmatprep.subr.mxu0 0.0
        %1786 = vmatpush1.msra.mxu0 0.0
        %1787 = vmatprep.subr.mxu0 0.0
        %1788 = vmatpush1.msra.mxu0 0.0
        %1789 = vmatprep.subr.mxu0 0.0
        %1790 = vmatpush1.msra.mxu0 0.0
        %1791 = vmatprep.subr.mxu0 0.0
        %1792 = vmatpush1.msra.mxu0 0.0
        %1793 = vmatprep.subr.mxu0 0.0
        %1794 = vmatpush1.msra.mxu0 0.0
        %1795 = vmatprep.subr.mxu0 0.0
        %1796 = vmatpush1.msra.mxu0 0.0
        %1797 = vmatprep.subr.mxu0 0.0
        %1798 = vmatpush1.msra.mxu0 0.0
        %1799 = vmatprep.subr.mxu0 0.0
        %1800 = vmatpush1.msra.mxu0 0.0
        %1801 = vmatprep.subr.mxu0 0.0
        %1802 = vmatpush1.msra.mxu0 0.0
        %1803 = vmatprep.subr.mxu0 0.0
        %1804 = vmatpush1.msra.mxu0 0.0
        %1805 = vmatprep.subr.mxu0 0.0
        %1806 = vmatpush1.msra.mxu0 0.0
        %1807 = vmatprep.subr.mxu0 0.0
        %1808 = vmatpush1.msra.mxu0 0.0
        %1809 = vmatprep.subr.mxu0 0.0
        %1810 = vmatpush1.msra.mxu0 0.0
        %1811 = vmatprep.subr.mxu0 0.0
        %1812 = vmatpush1.msra.mxu0 0.0
        %1813 = vmatprep.subr.mxu0 0.0
        %1814 = vmatpush1.msra.mxu0 0.0
        %1815 = vmatprep.subr.mxu0 0.0
        %1816 = vmatpush1.msra.mxu0 0.0
        %1817 = vmatprep.subr.mxu0 0.0
        %1818 = vmatpush1.msra.mxu0 0.0
        %1819 = vmatprep.subr.mxu0 0.0
        %1820 = vmatpush1.msra.mxu0 0.0
        %1821 = vmatprep.subr.mxu0 0.0
        %1822 = vmatpush1.msra.mxu0 0.0
        %1823 = vmatprep.mubr.f32.mxu0 0.0
        %1824 = vmatmul.mubr.f32.gmra.mrb[0].mxu0 %v1757
        %v1825 = vpop.f32.mrb[0].mxu0
        %v1826 = vadd.f32 0.0, %v1825
        %v1827 = vpop.f32.mrb[0].mxu0
        %1828 = vdwg.mxu0
        %v1829 = vadd.f32 %v1742, %v1826
        %s1830 = scalar_lea.vmem [#allocation3], 26
        %v1831 = vld [vmem:[%s1830] ss:$32 sm:$0x1]
        %s1832 = scalar_lea.vmem [#allocation3], 30
        %v1833 = vld [vmem:[%s1832] ss:$32 sm:$0x1]
        %v1834 = vmax.f32 %v1831, %v1833
        %v1835 = vmax.f32 %v1834, 0.0
        %s1836 = scalar_lea.vmem %s311, 14 [#allocation6]
        %1837 = vst.msk [vmem:[%s1836] sm:$0x1] %vm619, %v1835
        %s1838 = scalar_lea.vmem %s3, 448
        %v1839 = vld [vmem:[%s1838] sm:$0xff]
        %v1840 = vld [vmem:[%s1838 + $0x8] sm:$0xff]
        %v1841 = vld [vmem:[%s1838 + $0x10] sm:$0xff]
        %v1842 = vld [vmem:[%s1838 + $0x18] sm:$0xff]
        %v1844 = vsel %vm580, %v1835, 0
        %1846 = vmatprep.subr.mxu0 0.0
        %1847 = vmatpush1.msra.mxu0 %v1839
        %1848 = vmatprep.subr.mxu0 0.0
        %1849 = vmatpush1.msra.mxu0 %v1840
        %1850 = vmatprep.subr.mxu0 0.0
        %1851 = vmatpush1.msra.mxu0 %v1841
        %1852 = vmatprep.subr.mxu0 0.0
        %1853 = vmatpush1.msra.mxu0 %v1842
        %1854 = vmatprep.subr.mxu0 0.0
        %1855 = vmatpush1.msra.mxu0 0.0
        %1856 = vmatprep.subr.mxu0 0.0
        %1857 = vmatpush1.msra.mxu0 0.0
        %1858 = vmatprep.subr.mxu0 0.0
        %1859 = vmatpush1.msra.mxu0 0.0
        %1860 = vmatprep.subr.mxu0 0.0
        %1861 = vmatpush1.msra.mxu0 0.0
        %1862 = vmatprep.subr.mxu0 0.0
        %1863 = vmatpush1.msra.mxu0 0.0
        %1864 = vmatprep.subr.mxu0 0.0
        %1865 = vmatpush1.msra.mxu0 0.0
        %1866 = vmatprep.subr.mxu0 0.0
        %1867 = vmatpush1.msra.mxu0 0.0
        %1868 = vmatprep.subr.mxu0 0.0
        %1869 = vmatpush1.msra.mxu0 0.0
        %1870 = vmatprep.subr.mxu0 0.0
        %1871 = vmatpush1.msra.mxu0 0.0
        %1872 = vmatprep.subr.mxu0 0.0
        %1873 = vmatpush1.msra.mxu0 0.0
        %1874 = vmatprep.subr.mxu0 0.0
        %1875 = vmatpush1.msra.mxu0 0.0
        %1876 = vmatprep.subr.mxu0 0.0
        %1877 = vmatpush1.msra.mxu0 0.0
        %1878 = vmatprep.subr.mxu0 0.0
        %1879 = vmatpush1.msra.mxu0 0.0
        %1880 = vmatprep.subr.mxu0 0.0
        %1881 = vmatpush1.msra.mxu0 0.0
        %1882 = vmatprep.subr.mxu0 0.0
        %1883 = vmatpush1.msra.mxu0 0.0
        %1884 = vmatprep.subr.mxu0 0.0
        %1885 = vmatpush1.msra.mxu0 0.0
        %1886 = vmatprep.subr.mxu0 0.0
        %1887 = vmatpush1.msra.mxu0 0.0
        %1888 = vmatprep.subr.mxu0 0.0
        %1889 = vmatpush1.msra.mxu0 0.0
        %1890 = vmatprep.subr.mxu0 0.0
        %1891 = vmatpush1.msra.mxu0 0.0
        %1892 = vmatprep.subr.mxu0 0.0
        %1893 = vmatpush1.msra.mxu0 0.0
        %1894 = vmatprep.subr.mxu0 0.0
        %1895 = vmatpush1.msra.mxu0 0.0
        %1896 = vmatprep.subr.mxu0 0.0
        %1897 = vmatpush1.msra.mxu0 0.0
        %1898 = vmatprep.subr.mxu0 0.0
        %1899 = vmatpush1.msra.mxu0 0.0
        %1900 = vmatprep.subr.mxu0 0.0
        %1901 = vmatpush1.msra.mxu0 0.0
        %1902 = vmatprep.subr.mxu0 0.0
        %1903 = vmatpush1.msra.mxu0 0.0
        %1904 = vmatprep.subr.mxu0 0.0
        %1905 = vmatpush1.msra.mxu0 0.0
        %1906 = vmatprep.subr.mxu0 0.0
        %1907 = vmatpush1.msra.mxu0 0.0
        %1908 = vmatprep.subr.mxu0 0.0
        %1909 = vmatpush1.msra.mxu0 0.0
        %1910 = vmatprep.mubr.f32.mxu0 0.0
        %1911 = vmatmul.mubr.f32.gmra.mrb[0].mxu0 %v1844
        %v1912 = vpop.f32.mrb[0].mxu0
        %v1913 = vadd.f32 0.0, %v1912
        %v1914 = vpop.f32.mrb[0].mxu0
        %1915 = vdwg.mxu0
        %v1916 = vadd.f32 %v1829, %v1913
        %s1917 = scalar_lea.vmem [#allocation3], 27
        %v1918 = vld [vmem:[%s1917] ss:$32 sm:$0x1]
        %s1919 = scalar_lea.vmem [#allocation3], 31
        %v1920 = vld [vmem:[%s1919] ss:$32 sm:$0x1]
        %v1921 = vmax.f32 %v1918, %v1920
        %v1922 = vmax.f32 %v1921, 0.0
        %s1923 = scalar_lea.vmem %s311, 15 [#allocation6]
        %1924 = vst.msk [vmem:[%s1923] sm:$0x1] %vm619, %v1922
        %s1925 = scalar_lea.vmem %s3, 480
        %v1926 = vld [vmem:[%s1925] sm:$0xff]
        %v1927 = vld [vmem:[%s1925 + $0x8] sm:$0xff]
        %v1928 = vld [vmem:[%s1925 + $0x10] sm:$0xff]
        %v1929 = vld [vmem:[%s1925 + $0x18] sm:$0xff]
        %v1931 = vsel %vm580, %v1922, 0
        %1933 = vmatprep.subr.mxu0 0.0
        %1934 = vmatpush1.msra.mxu0 %v1926
        %1935 = vmatprep.subr.mxu0 0.0
        %1936 = vmatpush1.msra.mxu0 %v1927
        %1937 = vmatprep.subr.mxu0 0.0
        %1938 = vmatpush1.msra.mxu0 %v1928
        %1939 = vmatprep.subr.mxu0 0.0
        %1940 = vmatpush1.msra.mxu0 %v1929
        %1941 = vmatprep.subr.mxu0 0.0
        %1942 = vmatpush1.msra.mxu0 0.0
        %1943 = vmatprep.subr.mxu0 0.0
        %1944 = vmatpush1.msra.mxu0 0.0
        %1945 = vmatprep.subr.mxu0 0.0
        %1946 = vmatpush1.msra.mxu0 0.0
        %1947 = vmatprep.subr.mxu0 0.0
        %1948 = vmatpush1.msra.mxu0 0.0
        %1949 = vmatprep.subr.mxu0 0.0
        %1950 = vmatpush1.msra.mxu0 0.0
        %1951 = vmatprep.subr.mxu0 0.0
        %1952 = vmatpush1.msra.mxu0 0.0
        %1953 = vmatprep.subr.mxu0 0.0
        %1954 = vmatpush1.msra.mxu0 0.0
        %1955 = vmatprep.subr.mxu0 0.0
        %1956 = vmatpush1.msra.mxu0 0.0
        %1957 = vmatprep.subr.mxu0 0.0
        %1958 = vmatpush1.msra.mxu0 0.0
        %1959 = vmatprep.subr.mxu0 0.0
        %1960 = vmatpush1.msra.mxu0 0.0
        %1961 = vmatprep.subr.mxu0 0.0
        %1962 = vmatpush1.msra.mxu0 0.0
        %1963 = vmatprep.subr.mxu0 0.0
        %1964 = vmatpush1.msra.mxu0 0.0
        %1965 = vmatprep.subr.mxu0 0.0
        %1966 = vmatpush1.msra.mxu0 0.0
        %1967 = vmatprep.subr.mxu0 0.0
        %1968 = vmatpush1.msra.mxu0 0.0
        %1969 = vmatprep.subr.mxu0 0.0
        %1970 = vmatpush1.msra.mxu0 0.0
        %1971 = vmatprep.subr.mxu0 0.0
        %1972 = vmatpush1.msra.mxu0 0.0
        %1973 = vmatprep.subr.mxu0 0.0
        %1974 = vmatpush1.msra.mxu0 0.0
        %1975 = vmatprep.subr.mxu0 0.0
        %1976 = vmatpush1.msra.mxu0 0.0
        %1977 = vmatprep.subr.mxu0 0.0
        %1978 = vmatpush1.msra.mxu0 0.0
        %1979 = vmatprep.subr.mxu0 0.0
        %1980 = vmatpush1.msra.mxu0 0.0
        %1981 = vmatprep.subr.mxu0 0.0
        %1982 = vmatpush1.msra.mxu0 0.0
        %1983 = vmatprep.subr.mxu0 0.0
        %1984 = vmatpush1.msra.mxu0 0.0
        %1985 = vmatprep.subr.mxu0 0.0
        %1986 = vmatpush1.msra.mxu0 0.0
        %1987 = vmatprep.subr.mxu0 0.0
        %1988 = vmatpush1.msra.mxu0 0.0
        %1989 = vmatprep.subr.mxu0 0.0
        %1990 = vmatpush1.msra.mxu0 0.0
        %1991 = vmatprep.subr.mxu0 0.0
        %1992 = vmatpush1.msra.mxu0 0.0
        %1993 = vmatprep.subr.mxu0 0.0
        %1994 = vmatpush1.msra.mxu0 0.0
        %1995 = vmatprep.subr.mxu0 0.0
        %1996 = vmatpush1.msra.mxu0 0.0
        %1997 = vmatprep.mubr.f32.mxu0 0.0
        %1998 = vmatmul.mubr.f32.gmra.mrb[0].mxu0 %v1931
        %v1999 = vpop.f32.mrb[0].mxu0
        %v2000 = vadd.f32 0.0, %v1999
        %v2001 = vpop.f32.mrb[0].mxu0
        %2002 = vdwg.mxu0
        %v2003 = vadd.f32 %v1916, %v2000
        %v2004 = vmax.f32 %v2003, 0.0
        %v2005 = vld [vmem:[%s5] sm:$0xff]
        %v2006 = vld [vmem:[%s5 + $0x8] sm:$0xff]
        %v2007 = vld [vmem:[%s5 + $0x10] sm:$0xff]
        %v2008 = vld [vmem:[%s5 + $0x18] sm:$0xff]
        %v2009 = vld [vmem:[%s5 + $0x20] sm:$0xff]
        %v2010 = vld [vmem:[%s5 + $0x28] sm:$0xff]
        %v2011 = vld [vmem:[%s5 + $0x30] sm:$0xff]
        %v2012 = vld [vmem:[%s5 + $0x38] sm:$0xff]
        %v2013 = vld [vmem:[%s6] sm:$0x1]
        %vm2014 = vcmask 523264
        %v2016 = vsel %vm2014, %v2004, 0
        %2018 = vmatprep.subr.mxu0 0.0
        %2019 = vmatpush1.msra.mxu0 %v2005
        %2020 = vmatprep.subr.mxu0 0.0
        %2021 = vmatpush1.msra.mxu0 %v2006
        %2022 = vmatprep.subr.mxu0 0.0
        %2023 = vmatpush1.msra.mxu0 %v2007
        %2024 = vmatprep.subr.mxu0 0.0
        %2025 = vmatpush1.msra.mxu0 %v2008
        %2026 = vmatprep.subr.mxu0 0.0
        %2027 = vmatpush1.msra.mxu0 %v2009
        %2028 = vmatprep.subr.mxu0 0.0
        %2029 = vmatpush1.msra.mxu0 %v2010
        %2030 = vmatprep.subr.mxu0 0.0
        %2031 = vmatpush1.msra.mxu0 %v2011
        %2032 = vmatprep.subr.mxu0 0.0
        %2033 = vmatpush1.msra.mxu0 %v2012
        %2034 = vmatprep.subr.mxu0 0.0
        %2035 = vmatpush1.msra.mxu0 0.0
        %2036 = vmatprep.subr.mxu0 0.0
        %2037 = vmatpush1.msra.mxu0 0.0
        %2038 = vmatprep.subr.mxu0 0.0
        %2039 = vmatpush1.msra.mxu0 0.0
        %2040 = vmatprep.subr.mxu0 0.0
        %2041 = vmatpush1.msra.mxu0 0.0
        %2042 = vmatprep.subr.mxu0 0.0
        %2043 = vmatpush1.msra.mxu0 0.0
        %2044 = vmatprep.subr.mxu0 0.0
        %2045 = vmatpush1.msra.mxu0 0.0
        %2046 = vmatprep.subr.mxu0 0.0
        %2047 = vmatpush1.msra.mxu0 0.0
        %2048 = vmatprep.subr.mxu0 0.0
        %2049 = vmatpush1.msra.mxu0 0.0
        %2050 = vmatprep.subr.mxu0 0.0
        %2051 = vmatpush1.msra.mxu0 0.0
        %2052 = vmatprep.subr.mxu0 0.0
        %2053 = vmatpush1.msra.mxu0 0.0
        %2054 = vmatprep.subr.mxu0 0.0
        %2055 = vmatpush1.msra.mxu0 0.0
        %2056 = vmatprep.subr.mxu0 0.0
        %2057 = vmatpush1.msra.mxu0 0.0
        %2058 = vmatprep.subr.mxu0 0.0
        %2059 = vmatpush1.msra.mxu0 0.0
        %2060 = vmatprep.subr.mxu0 0.0
        %2061 = vmatpush1.msra.mxu0 0.0
        %2062 = vmatprep.subr.mxu0 0.0
        %2063 = vmatpush1.msra.mxu0 0.0
        %2064 = vmatprep.subr.mxu0 0.0
        %2065 = vmatpush1.msra.mxu0 0.0
        %2066 = vmatprep.subr.mxu0 0.0
        %2067 = vmatpush1.msra.mxu0 0.0
        %2068 = vmatprep.subr.mxu0 0.0
        %2069 = vmatpush1.msra.mxu0 0.0
        %2070 = vmatprep.subr.mxu0 0.0
        %2071 = vmatpush1.msra.mxu0 0.0
        %2072 = vmatprep.subr.mxu0 0.0
        %2073 = vmatpush1.msra.mxu0 0.0
        %2074 = vmatprep.subr.mxu0 0.0
        %2075 = vmatpush1.msra.mxu0 0.0
        %2076 = vmatprep.subr.mxu0 0.0
        %2077 = vmatpush1.msra.mxu0 0.0
        %2078 = vmatprep.subr.mxu0 0.0
        %2079 = vmatpush1.msra.mxu0 0.0
        %2080 = vmatprep.subr.mxu0 0.0
        %2081 = vmatpush1.msra.mxu0 0.0
        %2082 = vmatprep.mubr.f32.mxu0 0.0
        %2083 = vmatmul.mubr.f32.gmra.mrb[0].mxu0 %v2016
        %v2084 = vpop.f32.mrb[0].mxu0
        %v2085 = vadd.f32 %v2013, %v2084
        %v2086 = vpop.f32.mrb[0].mxu0
        %2087 = vdwg.mxu0
        %vm2088 = vcmask 73728
        %v2089 = vsel %vm2088, %v2085, -inf
        %2090 = vmax.xlane.f32.xlu0 %v2089
        %v2091 = vpop.xlane.xlu0 %2090
        %v2092 = vsub.f32 %v2085, %v2091
        %v2093 = vmul.f32 %v2092, 1.442695
        %v2094 = vpow.pop %v2093
        %v2095 = vsel %vm2088, %v2094, 0.0
        %2096 = vadd.xlane.f32.xlu0 %v2095
        %v2097 = vpop.xlane.xlu0 %2096
        %v2098 = vrcp.pop %v2097
        %v2099 = vmul.f32 %v2094, %v2098
        %2100 = vst.msk [vmem:[%s304] sm:$0x1] %vm2088, %v2099
        %s2101 = sand.u32 %s186, 1
        %s2102 = scalar_lea.sflag [#allocation5], %s2101
        %s2103 = sand.u32 %s186, 1
        %s2104 = scalar_lea.vmem [#allocation4], %s2103
        %s2105 = sand.u32 %s212, 1
        %s2106 = scalar_lea.sflag [#allocation7], %s2105
        %s2107 = sand.u32 %s212, 1
        %s2108 = smul.addr %s2107, 16
        %s2109 = scalar_lea.vmem [#allocation6], %s2108
        // Predicated region
        $region49: #{cnn_mnist_forward.3} parent=47 // pred_check
          %p2110 = pneg %p196
        $region50: #{cnn_mnist_forward.3} parent=47 // pred_check_branch
          %2112 = sbr.rel (%p2110) target = $region52
        $region51: #{cnn_mnist_forward.3} parent=47 // pred_region
          %s2114 = ssub.s32 16, 16
          %2115 = vsyncadd %s2102, %s2114
          %s2116 = smul.addr %s26, 16
          %s2117 = scalar_lea.hbm %s7, %s2116
          %s2119 = sshll.u32 %s2104, 4
          %s2120 = int_to_ptr.vmem [resolvable:$true] %s2119
          %2122 = dma.vmem_to_hbm [thread:$0]  %s2120, 16, %s2117, %s2102
        $region52: #{cnn_mnist_forward.3} parent=47 // pred_fallthru
          _
        // Predicated region
        $region53: #{cnn_mnist_forward.3} parent=47 // pred_check
          %p2123 = pneg %p222
        $region54: #{cnn_mnist_forward.3} parent=47 // pred_check_branch
          %2125 = sbr.rel (%p2123) target = $region56
        $region55: #{cnn_mnist_forward.3} parent=47 // pred_region
          %s2127 = ssub.s32 256, 256
          %2128 = vsyncadd %s2106, %s2127
          %s2129 = smul.addr %s26, 16
          %s2130 = smul.addr %s2129, 16
          %s2131 = scalar_lea.hbm %s8, %s2130
          %s2132 = sshll.u32 %s2109, 4
          %s2133 = int_to_ptr.vmem [resolvable:$true] %s2132
          %2138 = dma.vmem_to_hbm [thread:$0]  %s2133, 256, %s2131, %s2106, 16, 16, 1
        $region56: #{cnn_mnist_forward.3} parent=47 // pred_fallthru
          _
      $region48: #{cnn_mnist_forward.3} parent=5 // pred_fallthru
        _
      %p2139 = scmp.le.s32.totalorder 2, %s21
      // Predicated region
      $region57: #{cnn_mnist_forward.3} parent=5 // pred_check
        %p2140 = pneg %p2139
      $region58: #{cnn_mnist_forward.3} parent=5 // pred_check_branch
        %2142 = sbr.rel (%p2140) target = $region60
      $region59: #{cnn_mnist_forward.3} parent=5 // pred_region
        %s2143 = ssub.s32 %s21, 2
        // Predicated region
        $region61: #{cnn_mnist_forward.3} parent=59 // pred_check
          %p2144 = pneg %p202
        $region62: #{cnn_mnist_forward.3} parent=59 // pred_check_branch
          %2146 = sbr.rel (%p2144) target = $region64
        $region63: #{cnn_mnist_forward.3} parent=59 // pred_region
          %s2147 = sand.u32 %s187, 1
          %s2148 = scalar_lea.sflag [#allocation5], %s2147
          %s2149 = sand.u32 %s187, 1
          %s2150 = scalar_lea.vmem [#allocation4], %s2149
          %2151 = dma.done %s2148, 16
        $region64: #{cnn_mnist_forward.3} parent=59 // pred_fallthru
          _
        // Predicated region
        $region65: #{cnn_mnist_forward.3} parent=59 // pred_check
          %p2152 = pneg %p228
        $region66: #{cnn_mnist_forward.3} parent=59 // pred_check_branch
          %2154 = sbr.rel (%p2152) target = $region68
        $region67: #{cnn_mnist_forward.3} parent=59 // pred_region
          %s2155 = sand.u32 %s213, 1
          %s2156 = scalar_lea.sflag [#allocation7], %s2155
          %s2157 = sand.u32 %s213, 1
          %s2158 = smul.addr %s2157, 16
          %s2159 = scalar_lea.vmem [#allocation6], %s2158
          %2160 = dma.done %s2156, 256
        $region68: #{cnn_mnist_forward.3} parent=59 // pred_fallthru
          _
      $region60: #{cnn_mnist_forward.3} parent=5 // pred_fallthru
        _
    $region6: #{cnn_mnist_forward.3} parent=1 // loop_footer
      %s25 = sadd.s32 1, %s21
    $region7: #{cnn_mnist_forward.3} parent=1 // loop_footer_branch
      %20 = sbr.rel target = $region3
    $region8: #{cnn_mnist_forward.3} parent=1 // loop_exit
      _
    %2161 = vsyncpa [#allocation5], 1
    %s2162 = scalar_lea.sflag [#allocation5], 1
    %2163 = vsyncpa %s2162, 1
    %2164 = vsyncpa [#allocation7], 1
    %s2165 = scalar_lea.sflag [#allocation7], 1
    %2166 = vsyncpa %s2165, 1

</llo_original>
